<compile_context>
chip_gen: v6e
topology: v6e:2x2x1
jax: 0.10.0
libtpu: 0.0.40
codegen_flags: <defaults>
</compile_context>

<pallas_src>
import jax
import jax.numpy as jnp
import numpy as np
from jax.experimental import pallas as pl
from jax.experimental.pallas import tpu as pltpu

EPS = 1e-5  # torch.nn.LayerNorm default eps


def _layer_norm(v, w, b):
    mu = jnp.mean(v, axis=-1, keepdims=True)
    var = jnp.mean((v - mu) ** 2, axis=-1, keepdims=True)  # biased var (PyTorch LN)
    return (v - mu) * jax.lax.rsqrt(var + EPS) * w[None, :] + b[None, :]


def _pick_bt(B, S, target_rows=512):
    """Largest divisor of B with Bt*S <= target_rows, preferring nb=B//Bt >= 2
    so the 'parallel' batch axis can shard across v7x's two TensorCores."""
    divisors = [d for d in range(1, B + 1) if B % d == 0 and d * S <= target_rows]
    if not divisors:
        return 1
    multi = [d for d in divisors if B // d >= 2]
    return max(multi) if multi else max(divisors)


def _make_kernel(num_layers, num_heads, d_k, d_model, Bt, S):
    M = Bt * S
    bf16 = jnp.bfloat16

    def kernel(x_ref, t_ref,
               win_ref, bin_ref, wtr_ref, btr_ref, wpe_ref, bpe_ref,
               wqkv_ref, bqkv_ref, wo_ref, bo_ref, ln1w_ref, ln1b_ref,
               w1_ref, b1_ref, w2_ref, b2_ref, ln2w_ref, ln2b_ref,
               wout_ref, bout_ref, out_ref):
        # Flatten the batch block into the matmul M dimension.
        x = x_ref[...].reshape(M, -1).astype(bf16)   # (M, input_dim)
        t = t_ref[...].reshape(M, 1)                  # (M, 1) f32

        # input_linear (bf16 operands, f32 accumulation)
        h = jnp.dot(x, win_ref[...], preferred_element_type=jnp.float32) + bin_ref[...]

        # TimeEmbedding: relu(linear_trend(t)) + sin(linear_period(t))  (f32 VPU/EUP)
        trend = jnp.maximum(t * wtr_ref[...] + btr_ref[...], 0.0)
        period = jnp.sin(t * wpe_ref[...] + bpe_ref[...])
        h = h + trend + period                        # (M, d_model) f32
        # TODO(synk): nn.Dropout is stochastic; modeled as identity (eval mode).

        # Small fixed L/H: Python loops are fine here; convert to lax.fori_loop
        # with dynamic ref indexing (wqkv_ref[l]) once L/H grow.
        for l in range(num_layers):
            # ---- Multi-head attention (fused QKV, single W_o matmul) ----
            qkv = jnp.dot(h.astype(bf16), wqkv_ref[l],
                          preferred_element_type=jnp.float32) + bqkv_ref[l][None, :]
            ctx_heads = []
            for hd in range(num_heads):
                q = qkv[:, hd * d_k:(hd + 1) * d_k]                       # already scaled
                k = qkv[:, d_model + hd * d_k:d_model + (hd + 1) * d_k]
                v = qkv[:, 2 * d_model + hd * d_k:2 * d_model + (hd + 1) * d_k]
                q3 = q.reshape(Bt, S, d_k).astype(bf16)
                k3 = k.reshape(Bt, S, d_k).astype(bf16)
                v3 = v.reshape(Bt, S, d_k).astype(bf16)

                s = jnp.einsum("bqd,bkd->bqk", q3, k3,
                               preferred_element_type=jnp.float32)
                s = s - jnp.max(s, axis=-1, keepdims=True)
                p = jnp.exp(s)
                denom = jnp.sum(p, axis=-1, keepdims=True)
                p = p * pl.reciprocal(denom, approx=True)   # EUP, off the VALU path
                ctx = jnp.einsum("bqk,bkd->bqd", p.astype(bf16), v3,
                                 preferred_element_type=jnp.float32)
                ctx_heads.append(ctx.reshape(M, d_k))
            ctx_all = jnp.concatenate(ctx_heads, axis=-1).astype(bf16)    # (M, d_model)
            attn = jnp.dot(ctx_all, wo_ref[l],
                           preferred_element_type=jnp.float32) + bo_ref[l][None, :]
            h = _layer_norm(attn, ln1w_ref[l], ln1b_ref[l])

            # ---- FeedForward ----
            ff = jnp.maximum(
                jnp.dot(h.astype(bf16), w1_ref[l], preferred_element_type=jnp.float32)
                + b1_ref[l][None, :], 0.0)
            ff = jnp.dot(ff.astype(bf16), w2_ref[l], preferred_element_type=jnp.float32) \
                + b2_ref[l][None, :]
            h = _layer_norm(ff, ln2w_ref[l], ln2b_ref[l])

        # output_linear (lane-padded to a multiple of 128 -> unmasked stores)
        out = jnp.dot(h.astype(bf16), wout_ref[...],
                      preferred_element_type=jnp.float32) + bout_ref[...]
        out_ref[...] = out.reshape(Bt, S, -1)

    return kernel


def pc_transformer_forward(x, t, params, *, num_layers, num_heads):
    B, S, input_dim = x.shape
    d_model = params["W_in"].shape[1]
    output_dim = params["W_out"].shape[1]
    assert d_model % num_heads == 0
    d_k = d_model // num_heads
    d_ff = params["W1"].shape[2]
    out_pad = ((output_dim + 127) // 128) * 128
    bf16 = jnp.bfloat16
    scale = float(1.0 / np.sqrt(np.float32(d_k)))

    # ---- host-side weight prep (one-time, free) ----
    # Fused QKV weight with the 1/sqrt(d_k) scale folded into the Q columns.
    Wqkv = jnp.concatenate(
        [params["Wq"] * scale, params["Wk"], params["Wv"]], axis=-1).astype(bf16)
    bqkv = jnp.concatenate(
        [params["bq"] * scale, params["bk"], params["bv"]], axis=-1)   # f32 bias

    # Lane-dense (padded) output projection.
    W_out_p = jnp.zeros((d_model, out_pad), jnp.float32).at[:, :output_dim].set(
        params["W_out"]).astype(bf16)
    b_out_p = jnp.zeros((1, out_pad), jnp.float32).at[:, :output_dim].set(
        params["b_out"])

    Bt = _pick_bt(B, S)
    nb = B // Bt

    args = [
        x, t,
        params["W_in"].astype(bf16), params["b_in"],
        params["W_tr"], params["b_tr"],
        params["W_pe"], params["b_pe"],
        Wqkv, bqkv,
        params["Wo"].astype(bf16), params["bo"],
        params["ln1w"], params["ln1b"],
        params["W1"].astype(bf16), params["b1"],
        params["W2"].astype(bf16), params["b2"],
        params["ln2w"], params["ln2b"],
        W_out_p, b_out_p,
    ]

    def batch_spec(shape):
        nd = len(shape)
        return pl.BlockSpec((Bt,) + tuple(shape[1:]),
                            lambda b, _nd=nd: (b,) + (0,) * (_nd - 1))

    def full_spec(shape):
        nd = len(shape)
        return pl.BlockSpec(tuple(shape), lambda b, _nd=nd: (0,) * _nd)

    in_specs = [batch_spec(x.shape), batch_spec(t.shape)] + \
               [full_spec(a.shape) for a in args[2:]]
    out_specs = pl.BlockSpec((Bt, S, out_pad), lambda b: (b, 0, 0))

    # ---- scoped VMEM: per-block footprint, clamped to physical capacity ----
    weight_bytes = sum(int(np.prod(a.shape)) * jnp.dtype(a.dtype).itemsize
                       for a in args[2:])
    block_io_bytes = 2 * (Bt * S * input_dim * 4 + Bt * S * 1 * 4
                          + Bt * S * out_pad * 4)          # double-buffered x/t/out
    act_bytes = Bt * S * (3 * d_model + d_ff + 8 * d_model + num_heads * S) * 4
    needed = 2 * weight_bytes + block_io_bytes + act_bytes  # weights double-buffered
    try:
        vmem_cap = int(pltpu.get_tpu_info().vmem_capacity_bytes)
    except Exception:
        vmem_cap = 64 * 2**20                                # conservative (v7x)
    vmem_limit = int(min(vmem_cap - 4 * 2**20, max(2 * needed, 32 * 2**20)))

    kernel = _make_kernel(num_layers, num_heads, d_k, d_model, Bt, S)
    out_full = pl.pallas_call(
        kernel,
        out_shape=jax.ShapeDtypeStruct((B, S, out_pad), jnp.float32),
        grid_spec=pltpu.PrefetchScalarGridSpec(
            num_scalar_prefetch=0,
            grid=(nb,),
            in_specs=in_specs,
            out_specs=out_specs,
        ),
        compiler_params=pltpu.CompilerParams(
            dimension_semantics=("parallel",),   # batch blocks are independent
            vmem_limit_bytes=vmem_limit),
    )(*args)
    return out_full[..., :output_dim]


# ----------------------- pure-JAX reference (for verification) -----------------------
def reference_forward(x, t, params, *, num_layers, num_heads):
    d_model = params["W_in"].shape[1]
    d_k = d_model // num_heads
    scale = float(1.0 / np.sqrt(np.float32(d_k)))

    def ln(v, w, b):
        mu = jnp.mean(v, axis=-1, keepdims=True)
        var = jnp.mean((v - mu) ** 2, axis=-1, keepdims=True)
        return (v - mu) * jax.lax.rsqrt(var + EPS) * w + b

    h = jnp.einsum("bsi,io->bso", x, params["W_in"]) + params["b_in"]
    trend = jax.nn.relu(t * params["W_tr"] + params["b_tr"])
    period = jnp.sin(t * params["W_pe"] + params["b_pe"])
    h = h + trend + period
    B, S, _ = h.shape
    for l in range(num_layers):
        q = jnp.einsum("bsd,de->bse", h, params["Wq"][l]) + params["bq"][l]
        k = jnp.einsum("bsd,de->bse", h, params["Wk"][l]) + params["bk"][l]
        v = jnp.einsum("bsd,de->bse", h, params["Wv"][l]) + params["bv"][l]
        q = q.reshape(B, S, num_heads, d_k).transpose(0, 2, 1, 3)
        k = k.reshape(B, S, num_heads, d_k).transpose(0, 2, 1, 3)
        v = v.reshape(B, S, num_heads, d_k).transpose(0, 2, 1, 3)
        s = jnp.einsum("bhqd,bhkd->bhqk", q, k) * scale
        p = jax.nn.softmax(s, axis=-1)
        ctx = jnp.einsum("bhqk,bhkd->bhqd", p, v).transpose(0, 2, 1, 3).reshape(B, S, d_model)
        attn_out = jnp.einsum("bsd,de->bse", ctx, params["Wo"][l]) + params["bo"][l]
        h = ln(attn_out, params["ln1w"][l], params["ln1b"][l])
        ff = jax.nn.relu(jnp.einsum("bsd,df->bsf", h, params["W1"][l]) + params["b1"][l])
        ff = jnp.einsum("bsf,fd->bsd", ff, params["W2"][l]) + params["b2"][l]
        h = ln(ff, params["ln2w"][l], params["ln2b"][l])
    return jnp.einsum("bsd,do->bso", h, params["W_out"]) + params["b_out"]


# ----------------------- deterministic parameter init -----------------------
def _linear_init(key, fan_in, fan_out):
    kw, kb = jax.random.split(key)
    bound = 1.0 / np.sqrt(fan_in)
    W = jax.random.uniform(kw, (fan_in, fan_out), jnp.float32, -bound, bound)
    b = jax.random.uniform(kb, (1, fan_out), jnp.float32, -bound, bound)
    return W, b


def init_params(key, input_dim, d_model, num_heads, d_ff, num_layers, output_dim):
    keys = jax.random.split(key, 4 + num_layers)
    W_in, b_in = _linear_init(keys[0], input_dim, d_model)
    W_tr, b_tr = _linear_init(keys[1], 1, d_model)
    W_pe, b_pe = _linear_init(keys[2], 1, d_model)
    W_out, b_out = _linear_init(keys[3], d_model, output_dim)

    Wq, bq, Wk, bk, Wv, bv, Wo, bo = [], [], [], [], [], [], [], []
    W1, b1, W2, b2 = [], [], [], []
    ln1w, ln1b, ln2w, ln2b = [], [], [], []
    for l in range(num_layers):
        lk = jax.random.split(keys[4 + l], 6)
        for W_list, b_list, kidx in ((Wq, bq, 0), (Wk, bk, 1), (Wv, bv, 2), (Wo, bo, 3)):
            W, b = _linear_init(lk[kidx], d_model, d_model)
            W_list.append(W); b_list.append(b[0])
        W, b = _linear_init(lk[4], d_model, d_ff)
        W1.append(W); b1.append(b[0])
        W, b = _linear_init(lk[5], d_ff, d_model)
        W2.append(W); b2.append(b[0])
        ln1w.append(jnp.ones((d_model,), jnp.float32)); ln1b.append(jnp.zeros((d_model,), jnp.float32))
        ln2w.append(jnp.ones((d_model,), jnp.float32)); ln2b.append(jnp.zeros((d_model,), jnp.float32))

    stack = lambda lst: jnp.stack(lst, axis=0)
    return dict(
        W_in=W_in, b_in=b_in, W_tr=W_tr, b_tr=b_tr, W_pe=W_pe, b_pe=b_pe,
        Wq=stack(Wq), bq=stack(bq), Wk=stack(Wk), bk=stack(bk),
        Wv=stack(Wv), bv=stack(bv), Wo=stack(Wo), bo=stack(bo),
        ln1w=stack(ln1w), ln1b=stack(ln1b), ln2w=stack(ln2w), ln2b=stack(ln2b),
        W1=stack(W1), b1=stack(b1), W2=stack(W2), b2=stack(b2),
        W_out=W_out, b_out=b_out,
    )


if __name__ == "__main__":
    # Small shapes consistent with PCTransformer(input_dim, d_model, heads, d_ff, layers, out)
    B, S = 2, 8
    input_dim, d_model, num_heads, d_ff, num_layers, output_dim = 4, 32, 4, 64, 2, 1

    key = jax.random.PRNGKey(0)
    kx, kt, kp = jax.random.split(key, 3)
    x = jax.random.normal(kx, (B, S, input_dim), jnp.float32)
    t = jax.random.normal(kt, (B, S, 1), jnp.float32)
    params = init_params(kp, input_dim, d_model, num_heads, d_ff, num_layers, output_dim)

    out = pc_transformer_forward(x, t, params, num_layers=num_layers, num_heads=num_heads)
    out = jax.block_until_ready(out)

    ref = jax.block_until_ready(
        reference_forward(x, t, params, num_layers=num_layers, num_heads=num_heads))
    # Tolerance accounts for bf16 matmul operands (f32 accumulation) and the
    # approx softmax reciprocal; f32 reference is the PyTorch-equivalent path.
    np.testing.assert_allclose(np.asarray(out), np.asarray(ref), rtol=5e-2, atol=5e-2)

    print("KERNEL_OK")
</pallas_src>

<mosaic_0001>
module attributes {stable_mosaic.version = 11 : i64} {
  func.func @kernel(%arg0: i32, %arg1: memref<1x8x4xf32, #tpu.memory_space<vmem>>, %arg2: memref<1x8x1xf32, #tpu.memory_space<vmem>>, %arg3: memref<4x32xbf16, #tpu.memory_space<vmem>>, %arg4: memref<1x32xf32, #tpu.memory_space<vmem>>, %arg5: memref<1x32xf32, #tpu.memory_space<vmem>>, %arg6: memref<1x32xf32, #tpu.memory_space<vmem>>, %arg7: memref<1x32xf32, #tpu.memory_space<vmem>>, %arg8: memref<1x32xf32, #tpu.memory_space<vmem>>, %arg9: memref<2x32x96xbf16, #tpu.memory_space<vmem>>, %arg10: memref<2x96xf32, #tpu.memory_space<vmem>>, %arg11: memref<2x32x32xbf16, #tpu.memory_space<vmem>>, %arg12: memref<2x32xf32, #tpu.memory_space<vmem>>, %arg13: memref<2x32xf32, #tpu.memory_space<vmem>>, %arg14: memref<2x32xf32, #tpu.memory_space<vmem>>, %arg15: memref<2x32x64xbf16, #tpu.memory_space<vmem>>, %arg16: memref<2x64xf32, #tpu.memory_space<vmem>>, %arg17: memref<2x64x32xbf16, #tpu.memory_space<vmem>>, %arg18: memref<2x32xf32, #tpu.memory_space<vmem>>, %arg19: memref<2x32xf32, #tpu.memory_space<vmem>>, %arg20: memref<2x32xf32, #tpu.memory_space<vmem>>, %arg21: memref<32x128xbf16, #tpu.memory_space<vmem>>, %arg22: memref<1x128xf32, #tpu.memory_space<vmem>>, %arg23: memref<1x8x128xf32, #tpu.memory_space<vmem>>) attributes {dimension_semantics = [#tpu.dimension_semantics<parallel>], iteration_bounds = array<i64: 2>, scalar_prefetch = 0 : i64, scratch_operands = 0 : i64, tpu.core_type = #tpu.core_type<tc>, window_params = [{transform_indices = @transform_0, window_bounds = array<i64: 1, 8, 4>}, {transform_indices = @transform_1, window_bounds = array<i64: 1, 8, 1>}, {pipeline_mode = #tpu.pipeline_mode<synchronous>, transform_indices = @transform_2, window_bounds = array<i64: 4, 32>}, {pipeline_mode = #tpu.pipeline_mode<synchronous>, transform_indices = @transform_3, window_bounds = array<i64: 1, 32>}, {pipeline_mode = #tpu.pipeline_mode<synchronous>, transform_indices = @transform_4, window_bounds = array<i64: 1, 32>}, {pipeline_mode = #tpu.pipeline_mode<synchronous>, transform_indices = @transform_5, window_bounds = array<i64: 1, 32>}, {pipeline_mode = #tpu.pipeline_mode<synchronous>, transform_indices = @transform_6, window_bounds = array<i64: 1, 32>}, {pipeline_mode = #tpu.pipeline_mode<synchronous>, transform_indices = @transform_7, window_bounds = array<i64: 1, 32>}, {pipeline_mode = #tpu.pipeline_mode<synchronous>, transform_indices = @transform_8, window_bounds = array<i64: 2, 32, 96>}, {pipeline_mode = #tpu.pipeline_mode<synchronous>, transform_indices = @transform_9, window_bounds = array<i64: 2, 96>}, {pipeline_mode = #tpu.pipeline_mode<synchronous>, transform_indices = @transform_10, window_bounds = array<i64: 2, 32, 32>}, {pipeline_mode = #tpu.pipeline_mode<synchronous>, transform_indices = @transform_11, window_bounds = array<i64: 2, 32>}, {pipeline_mode = #tpu.pipeline_mode<synchronous>, transform_indices = @transform_12, window_bounds = array<i64: 2, 32>}, {pipeline_mode = #tpu.pipeline_mode<synchronous>, transform_indices = @transform_13, window_bounds = array<i64: 2, 32>}, {pipeline_mode = #tpu.pipeline_mode<synchronous>, transform_indices = @transform_14, window_bounds = array<i64: 2, 32, 64>}, {pipeline_mode = #tpu.pipeline_mode<synchronous>, transform_indices = @transform_15, window_bounds = array<i64: 2, 64>}, {pipeline_mode = #tpu.pipeline_mode<synchronous>, transform_indices = @transform_16, window_bounds = array<i64: 2, 64, 32>}, {pipeline_mode = #tpu.pipeline_mode<synchronous>, transform_indices = @transform_17, window_bounds = array<i64: 2, 32>}, {pipeline_mode = #tpu.pipeline_mode<synchronous>, transform_indices = @transform_18, window_bounds = array<i64: 2, 32>}, {pipeline_mode = #tpu.pipeline_mode<synchronous>, transform_indices = @transform_19, window_bounds = array<i64: 2, 32>}, {pipeline_mode = #tpu.pipeline_mode<synchronous>, transform_indices = @transform_20, window_bounds = array<i64: 32, 128>}, {pipeline_mode = #tpu.pipeline_mode<synchronous>, transform_indices = @transform_21, window_bounds = array<i64: 1, 128>}, {transform_indices = @transform_22, window_bounds = array<i64: 1, 8, 128>}]} {
    %c0 = arith.constant 0 : index
    %c0_0 = arith.constant 0 : index
    %c0_1 = arith.constant 0 : index
    %0 = vector.load %arg1[%c0, %c0_0, %c0_1] : memref<1x8x4xf32, #tpu.memory_space<vmem>>, vector<1x8x4xf32>
    %1 = vector.shape_cast %0 : vector<1x8x4xf32> to vector<8x4xf32>
    %2 = arith.truncf %1 : vector<8x4xf32> to vector<8x4xbf16>
    %c0_2 = arith.constant 0 : index
    %c0_3 = arith.constant 0 : index
    %c0_4 = arith.constant 0 : index
    %3 = vector.load %arg2[%c0_2, %c0_3, %c0_4] : memref<1x8x1xf32, #tpu.memory_space<vmem>>, vector<1x8x1xf32>
    %4 = vector.shape_cast %3 : vector<1x8x1xf32> to vector<8x1xf32>
    %c0_5 = arith.constant 0 : index
    %c0_6 = arith.constant 0 : index
    %5 = vector.load %arg3[%c0_5, %c0_6] : memref<4x32xbf16, #tpu.memory_space<vmem>>, vector<4x32xbf16>
    %cst = arith.constant dense<0.000000e+00> : vector<8x32xf32>
    %6 = tpu.matmul %2, %5, %cst {dimension_numbers = #tpu.dot_dimension_numbers<[1], [0], [0], [1], [0, 0, 1, 1], [], []>} : vector<8x4xbf16>, vector<4x32xbf16>, vector<8x32xf32> -> vector<8x32xf32>
    %c0_7 = arith.constant 0 : index
    %c0_8 = arith.constant 0 : index
    %7 = vector.load %arg4[%c0_7, %c0_8] : memref<1x32xf32, #tpu.memory_space<vmem>>, vector<1x32xf32>
    %8 = vector.broadcast %7 : vector<1x32xf32> to vector<8x32xf32>
    %9 = arith.addf %6, %8 : vector<8x32xf32>
    %c0_9 = arith.constant 0 : index
    %c0_10 = arith.constant 0 : index
    %10 = vector.load %arg5[%c0_9, %c0_10] : memref<1x32xf32, #tpu.memory_space<vmem>>, vector<1x32xf32>
    %11 = vector.broadcast %4 : vector<8x1xf32> to vector<8x32xf32>
    %12 = vector.broadcast %10 : vector<1x32xf32> to vector<8x32xf32>
    %13 = arith.mulf %11, %12 : vector<8x32xf32>
    %c0_11 = arith.constant 0 : index
    %c0_12 = arith.constant 0 : index
    %14 = vector.load %arg6[%c0_11, %c0_12] : memref<1x32xf32, #tpu.memory_space<vmem>>, vector<1x32xf32>
    %15 = vector.broadcast %14 : vector<1x32xf32> to vector<8x32xf32>
    %16 = arith.addf %13, %15 : vector<8x32xf32>
    %cst_13 = arith.constant 0.000000e+00 : f32
    %17 = vector.broadcast %cst_13 : f32 to vector<8x32xf32>
    %18 = arith.maximumf %16, %17 : vector<8x32xf32>
    %c0_14 = arith.constant 0 : index
    %c0_15 = arith.constant 0 : index
    %19 = vector.load %arg7[%c0_14, %c0_15] : memref<1x32xf32, #tpu.memory_space<vmem>>, vector<1x32xf32>
    %20 = vector.broadcast %4 : vector<8x1xf32> to vector<8x32xf32>
    %21 = vector.broadcast %19 : vector<1x32xf32> to vector<8x32xf32>
    %22 = arith.mulf %20, %21 : vector<8x32xf32>
    %c0_16 = arith.constant 0 : index
    %c0_17 = arith.constant 0 : index
    %23 = vector.load %arg8[%c0_16, %c0_17] : memref<1x32xf32, #tpu.memory_space<vmem>>, vector<1x32xf32>
    %24 = vector.broadcast %23 : vector<1x32xf32> to vector<8x32xf32>
    %25 = arith.addf %22, %24 : vector<8x32xf32>
    %26 = math.sin %25 : vector<8x32xf32>
    %27 = arith.addf %9, %18 : vector<8x32xf32>
    %28 = arith.addf %27, %26 : vector<8x32xf32>
    %29 = arith.truncf %28 : vector<8x32xf32> to vector<8x32xbf16>
    %c0_18 = arith.constant 0 : index
    %c0_19 = arith.constant 0 : index
    %c0_20 = arith.constant 0 : index
    %30 = vector.load %arg9[%c0_18, %c0_19, %c0_20] : memref<2x32x96xbf16, #tpu.memory_space<vmem>>, vector<1x32x96xbf16>
    %31 = vector.shape_cast %30 : vector<1x32x96xbf16> to vector<32x96xbf16>
    %cst_21 = arith.constant dense<0.000000e+00> : vector<8x96xf32>
    %32 = tpu.matmul %29, %31, %cst_21 {dimension_numbers = #tpu.dot_dimension_numbers<[1], [0], [0], [1], [0, 0, 1, 1], [], []>} : vector<8x32xbf16>, vector<32x96xbf16>, vector<8x96xf32> -> vector<8x96xf32>
    %c0_22 = arith.constant 0 : index
    %c0_23 = arith.constant 0 : index
    %33 = vector.load %arg10[%c0_22, %c0_23] : memref<2x96xf32, #tpu.memory_space<vmem>>, vector<1x96xf32>
    %34 = vector.shape_cast %33 : vector<1x96xf32> to vector<96xf32>
    %35 = vector.shape_cast %34 : vector<96xf32> to vector<1x96xf32>
    %36 = vector.broadcast %35 : vector<1x96xf32> to vector<8x96xf32>
    %37 = arith.addf %32, %36 : vector<8x96xf32>
    %38 = vector.extract_strided_slice %37 {offsets = [0, 0], sizes = [8, 8], strides = [1, 1]} : vector<8x96xf32> to vector<8x8xf32>
    %39 = vector.extract_strided_slice %37 {offsets = [0, 32], sizes = [8, 8], strides = [1, 1]} : vector<8x96xf32> to vector<8x8xf32>
    %40 = vector.extract_strided_slice %37 {offsets = [0, 64], sizes = [8, 8], strides = [1, 1]} : vector<8x96xf32> to vector<8x8xf32>
    %41 = vector.shape_cast %38 : vector<8x8xf32> to vector<1x8x8xf32>
    %42 = arith.truncf %41 : vector<1x8x8xf32> to vector<1x8x8xbf16>
    %43 = vector.shape_cast %39 : vector<8x8xf32> to vector<1x8x8xf32>
    %44 = arith.truncf %43 : vector<1x8x8xf32> to vector<1x8x8xbf16>
    %45 = vector.shape_cast %40 : vector<8x8xf32> to vector<1x8x8xf32>
    %46 = arith.truncf %45 : vector<1x8x8xf32> to vector<1x8x8xbf16>
    "tpu.trace_start"() <{level = 10 : i32, message = "bqd,bkd->bqk"}> : () -> ()
    %cst_24 = arith.constant dense<0.000000e+00> : vector<1x8x8xf32>
    %47 = tpu.matmul %42, %44, %cst_24 {dimension_numbers = #tpu.dot_dimension_numbers<[2], [2], [1], [1], [0, 0, 0, 1, 1, 1], [0], [0]>} : vector<1x8x8xbf16>, vector<1x8x8xbf16>, vector<1x8x8xf32> -> vector<1x8x8xf32>
    "tpu.trace_stop"() : () -> ()
    %cst_25 = arith.constant dense<0xFF800000> : vector<1x8xf32>
    %48 = vector.multi_reduction <maximumf>, %47, %cst_25 [2] : vector<1x8x8xf32> to vector<1x8xf32>
    %49 = vector.shape_cast %48 : vector<1x8xf32> to vector<1x8x1xf32>
    %50 = vector.broadcast %49 : vector<1x8x1xf32> to vector<1x8x8xf32>
    %51 = arith.subf %47, %50 : vector<1x8x8xf32>
    %52 = math.exp %51 : vector<1x8x8xf32>
    %cst_26 = arith.constant dense<0.000000e+00> : vector<1x8xf32>
    %53 = vector.multi_reduction <add>, %52, %cst_26 [2] : vector<1x8x8xf32> to vector<1x8xf32>
    %54 = vector.shape_cast %53 : vector<1x8xf32> to vector<1x8x1xf32>
    %55 = tpu.reciprocal %54 {approx = true} : vector<1x8x1xf32> -> vector<1x8x1xf32>
    %56 = vector.broadcast %55 : vector<1x8x1xf32> to vector<1x8x8xf32>
    %57 = arith.mulf %52, %56 : vector<1x8x8xf32>
    %58 = arith.truncf %57 : vector<1x8x8xf32> to vector<1x8x8xbf16>
    "tpu.trace_start"() <{level = 10 : i32, message = "bqk,bkd->bqd"}> : () -> ()
    %cst_27 = arith.constant dense<0.000000e+00> : vector<1x8x8xf32>
    %59 = tpu.matmul %58, %46, %cst_27 {dimension_numbers = #tpu.dot_dimension_numbers<[2], [1], [1], [2], [0, 0, 0, 1, 1, 2], [0], [0]>} : vector<1x8x8xbf16>, vector<1x8x8xbf16>, vector<1x8x8xf32> -> vector<1x8x8xf32>
    "tpu.trace_stop"() : () -> ()
    %60 = vector.shape_cast %59 : vector<1x8x8xf32> to vector<8x8xf32>
    %61 = vector.extract_strided_slice %37 {offsets = [0, 8], sizes = [8, 8], strides = [1, 1]} : vector<8x96xf32> to vector<8x8xf32>
    %62 = vector.extract_strided_slice %37 {offsets = [0, 40], sizes = [8, 8], strides = [1, 1]} : vector<8x96xf32> to vector<8x8xf32>
    %63 = vector.extract_strided_slice %37 {offsets = [0, 72], sizes = [8, 8], strides = [1, 1]} : vector<8x96xf32> to vector<8x8xf32>
    %64 = vector.shape_cast %61 : vector<8x8xf32> to vector<1x8x8xf32>
    %65 = arith.truncf %64 : vector<1x8x8xf32> to vector<1x8x8xbf16>
    %66 = vector.shape_cast %62 : vector<8x8xf32> to vector<1x8x8xf32>
    %67 = arith.truncf %66 : vector<1x8x8xf32> to vector<1x8x8xbf16>
    %68 = vector.shape_cast %63 : vector<8x8xf32> to vector<1x8x8xf32>
    %69 = arith.truncf %68 : vector<1x8x8xf32> to vector<1x8x8xbf16>
    "tpu.trace_start"() <{level = 10 : i32, message = "bqd,bkd->bqk"}> : () -> ()
    %cst_28 = arith.constant dense<0.000000e+00> : vector<1x8x8xf32>
    %70 = tpu.matmul %65, %67, %cst_28 {dimension_numbers = #tpu.dot_dimension_numbers<[2], [2], [1], [1], [0, 0, 0, 1, 1, 1], [0], [0]>} : vector<1x8x8xbf16>, vector<1x8x8xbf16>, vector<1x8x8xf32> -> vector<1x8x8xf32>
    "tpu.trace_stop"() : () -> ()
    %cst_29 = arith.constant dense<0xFF800000> : vector<1x8xf32>
    %71 = vector.multi_reduction <maximumf>, %70, %cst_29 [2] : vector<1x8x8xf32> to vector<1x8xf32>
    %72 = vector.shape_cast %71 : vector<1x8xf32> to vector<1x8x1xf32>
    %73 = vector.broadcast %72 : vector<1x8x1xf32> to vector<1x8x8xf32>
    %74 = arith.subf %70, %73 : vector<1x8x8xf32>
    %75 = math.exp %74 : vector<1x8x8xf32>
    %cst_30 = arith.constant dense<0.000000e+00> : vector<1x8xf32>
    %76 = vector.multi_reduction <add>, %75, %cst_30 [2] : vector<1x8x8xf32> to vector<1x8xf32>
    %77 = vector.shape_cast %76 : vector<1x8xf32> to vector<1x8x1xf32>
    %78 = tpu.reciprocal %77 {approx = true} : vector<1x8x1xf32> -> vector<1x8x1xf32>
    %79 = vector.broadcast %78 : vector<1x8x1xf32> to vector<1x8x8xf32>
    %80 = arith.mulf %75, %79 : vector<1x8x8xf32>
    %81 = arith.truncf %80 : vector<1x8x8xf32> to vector<1x8x8xbf16>
    "tpu.trace_start"() <{level = 10 : i32, message = "bqk,bkd->bqd"}> : () -> ()
    %cst_31 = arith.constant dense<0.000000e+00> : vector<1x8x8xf32>
    %82 = tpu.matmul %81, %69, %cst_31 {dimension_numbers = #tpu.dot_dimension_numbers<[2], [1], [1], [2], [0, 0, 0, 1, 1, 2], [0], [0]>} : vector<1x8x8xbf16>, vector<1x8x8xbf16>, vector<1x8x8xf32> -> vector<1x8x8xf32>
    "tpu.trace_stop"() : () -> ()
    %83 = vector.shape_cast %82 : vector<1x8x8xf32> to vector<8x8xf32>
    %84 = vector.extract_strided_slice %37 {offsets = [0, 16], sizes = [8, 8], strides = [1, 1]} : vector<8x96xf32> to vector<8x8xf32>
    %85 = vector.extract_strided_slice %37 {offsets = [0, 48], sizes = [8, 8], strides = [1, 1]} : vector<8x96xf32> to vector<8x8xf32>
    %86 = vector.extract_strided_slice %37 {offsets = [0, 80], sizes = [8, 8], strides = [1, 1]} : vector<8x96xf32> to vector<8x8xf32>
    %87 = vector.shape_cast %84 : vector<8x8xf32> to vector<1x8x8xf32>
    %88 = arith.truncf %87 : vector<1x8x8xf32> to vector<1x8x8xbf16>
    %89 = vector.shape_cast %85 : vector<8x8xf32> to vector<1x8x8xf32>
    %90 = arith.truncf %89 : vector<1x8x8xf32> to vector<1x8x8xbf16>
    %91 = vector.shape_cast %86 : vector<8x8xf32> to vector<1x8x8xf32>
    %92 = arith.truncf %91 : vector<1x8x8xf32> to vector<1x8x8xbf16>
    "tpu.trace_start"() <{level = 10 : i32, message = "bqd,bkd->bqk"}> : () -> ()
    %cst_32 = arith.constant dense<0.000000e+00> : vector<1x8x8xf32>
    %93 = tpu.matmul %88, %90, %cst_32 {dimension_numbers = #tpu.dot_dimension_numbers<[2], [2], [1], [1], [0, 0, 0, 1, 1, 1], [0], [0]>} : vector<1x8x8xbf16>, vector<1x8x8xbf16>, vector<1x8x8xf32> -> vector<1x8x8xf32>
    "tpu.trace_stop"() : () -> ()
    %cst_33 = arith.constant dense<0xFF800000> : vector<1x8xf32>
    %94 = vector.multi_reduction <maximumf>, %93, %cst_33 [2] : vector<1x8x8xf32> to vector<1x8xf32>
    %95 = vector.shape_cast %94 : vector<1x8xf32> to vector<1x8x1xf32>
    %96 = vector.broadcast %95 : vector<1x8x1xf32> to vector<1x8x8xf32>
    %97 = arith.subf %93, %96 : vector<1x8x8xf32>
    %98 = math.exp %97 : vector<1x8x8xf32>
    %cst_34 = arith.constant dense<0.000000e+00> : vector<1x8xf32>
    %99 = vector.multi_reduction <add>, %98, %cst_34 [2] : vector<1x8x8xf32> to vector<1x8xf32>
    %100 = vector.shape_cast %99 : vector<1x8xf32> to vector<1x8x1xf32>
    %101 = tpu.reciprocal %100 {approx = true} : vector<1x8x1xf32> -> vector<1x8x1xf32>
    %102 = vector.broadcast %101 : vector<1x8x1xf32> to vector<1x8x8xf32>
    %103 = arith.mulf %98, %102 : vector<1x8x8xf32>
    %104 = arith.truncf %103 : vector<1x8x8xf32> to vector<1x8x8xbf16>
    "tpu.trace_start"() <{level = 10 : i32, message = "bqk,bkd->bqd"}> : () -> ()
    %cst_35 = arith.constant dense<0.000000e+00> : vector<1x8x8xf32>
    %105 = tpu.matmul %104, %92, %cst_35 {dimension_numbers = #tpu.dot_dimension_numbers<[2], [1], [1], [2], [0, 0, 0, 1, 1, 2], [0], [0]>} : vector<1x8x8xbf16>, vector<1x8x8xbf16>, vector<1x8x8xf32> -> vector<1x8x8xf32>
    "tpu.trace_stop"() : () -> ()
    %106 = vector.shape_cast %105 : vector<1x8x8xf32> to vector<8x8xf32>
    %107 = vector.extract_strided_slice %37 {offsets = [0, 24], sizes = [8, 8], strides = [1, 1]} : vector<8x96xf32> to vector<8x8xf32>
    %108 = vector.extract_strided_slice %37 {offsets = [0, 56], sizes = [8, 8], strides = [1, 1]} : vector<8x96xf32> to vector<8x8xf32>
    %109 = vector.extract_strided_slice %37 {offsets = [0, 88], sizes = [8, 8], strides = [1, 1]} : vector<8x96xf32> to vector<8x8xf32>
    %110 = vector.shape_cast %107 : vector<8x8xf32> to vector<1x8x8xf32>
    %111 = arith.truncf %110 : vector<1x8x8xf32> to vector<1x8x8xbf16>
    %112 = vector.shape_cast %108 : vector<8x8xf32> to vector<1x8x8xf32>
    %113 = arith.truncf %112 : vector<1x8x8xf32> to vector<1x8x8xbf16>
    %114 = vector.shape_cast %109 : vector<8x8xf32> to vector<1x8x8xf32>
    %115 = arith.truncf %114 : vector<1x8x8xf32> to vector<1x8x8xbf16>
    "tpu.trace_start"() <{level = 10 : i32, message = "bqd,bkd->bqk"}> : () -> ()
    %cst_36 = arith.constant dense<0.000000e+00> : vector<1x8x8xf32>
    %116 = tpu.matmul %111, %113, %cst_36 {dimension_numbers = #tpu.dot_dimension_numbers<[2], [2], [1], [1], [0, 0, 0, 1, 1, 1], [0], [0]>} : vector<1x8x8xbf16>, vector<1x8x8xbf16>, vector<1x8x8xf32> -> vector<1x8x8xf32>
    "tpu.trace_stop"() : () -> ()
    %cst_37 = arith.constant dense<0xFF800000> : vector<1x8xf32>
    %117 = vector.multi_reduction <maximumf>, %116, %cst_37 [2] : vector<1x8x8xf32> to vector<1x8xf32>
    %118 = vector.shape_cast %117 : vector<1x8xf32> to vector<1x8x1xf32>
    %119 = vector.broadcast %118 : vector<1x8x1xf32> to vector<1x8x8xf32>
    %120 = arith.subf %116, %119 : vector<1x8x8xf32>
    %121 = math.exp %120 : vector<1x8x8xf32>
    %cst_38 = arith.constant dense<0.000000e+00> : vector<1x8xf32>
    %122 = vector.multi_reduction <add>, %121, %cst_38 [2] : vector<1x8x8xf32> to vector<1x8xf32>
    %123 = vector.shape_cast %122 : vector<1x8xf32> to vector<1x8x1xf32>
    %124 = tpu.reciprocal %123 {approx = true} : vector<1x8x1xf32> -> vector<1x8x1xf32>
    %125 = vector.broadcast %124 : vector<1x8x1xf32> to vector<1x8x8xf32>
    %126 = arith.mulf %121, %125 : vector<1x8x8xf32>
    %127 = arith.truncf %126 : vector<1x8x8xf32> to vector<1x8x8xbf16>
    "tpu.trace_start"() <{level = 10 : i32, message = "bqk,bkd->bqd"}> : () -> ()
    %cst_39 = arith.constant dense<0.000000e+00> : vector<1x8x8xf32>
    %128 = tpu.matmul %127, %115, %cst_39 {dimension_numbers = #tpu.dot_dimension_numbers<[2], [1], [1], [2], [0, 0, 0, 1, 1, 2], [0], [0]>} : vector<1x8x8xbf16>, vector<1x8x8xbf16>, vector<1x8x8xf32> -> vector<1x8x8xf32>
    "tpu.trace_stop"() : () -> ()
    %129 = vector.shape_cast %128 : vector<1x8x8xf32> to vector<8x8xf32>
    %130 = tpu.concatenate %60, %83, %106, %129 in 1 : vector<8x8xf32>, vector<8x8xf32>, vector<8x8xf32>, vector<8x8xf32> -> vector<8x32xf32>
    %131 = arith.truncf %130 : vector<8x32xf32> to vector<8x32xbf16>
    %c0_40 = arith.constant 0 : index
    %c0_41 = arith.constant 0 : index
    %c0_42 = arith.constant 0 : index
    %132 = vector.load %arg11[%c0_40, %c0_41, %c0_42] : memref<2x32x32xbf16, #tpu.memory_space<vmem>>, vector<1x32x32xbf16>
    %133 = vector.shape_cast %132 : vector<1x32x32xbf16> to vector<32x32xbf16>
    %cst_43 = arith.constant dense<0.000000e+00> : vector<8x32xf32>
    %134 = tpu.matmul %131, %133, %cst_43 {dimension_numbers = #tpu.dot_dimension_numbers<[1], [0], [0], [1], [0, 0, 1, 1], [], []>} : vector<8x32xbf16>, vector<32x32xbf16>, vector<8x32xf32> -> vector<8x32xf32>
    %c0_44 = arith.constant 0 : index
    %c0_45 = arith.constant 0 : index
    %135 = vector.load %arg12[%c0_44, %c0_45] : memref<2x32xf32, #tpu.memory_space<vmem>>, vector<1x32xf32>
    %136 = vector.shape_cast %135 : vector<1x32xf32> to vector<32xf32>
    %137 = vector.shape_cast %136 : vector<32xf32> to vector<1x32xf32>
    %138 = vector.broadcast %137 : vector<1x32xf32> to vector<8x32xf32>
    %139 = arith.addf %134, %138 : vector<8x32xf32>
    %c0_46 = arith.constant 0 : index
    %c0_47 = arith.constant 0 : index
    %140 = vector.load %arg13[%c0_46, %c0_47] : memref<2x32xf32, #tpu.memory_space<vmem>>, vector<1x32xf32>
    %141 = vector.shape_cast %140 : vector<1x32xf32> to vector<32xf32>
    %c0_48 = arith.constant 0 : index
    %c0_49 = arith.constant 0 : index
    %142 = vector.load %arg14[%c0_48, %c0_49] : memref<2x32xf32, #tpu.memory_space<vmem>>, vector<1x32xf32>
    %143 = vector.shape_cast %142 : vector<1x32xf32> to vector<32xf32>
    %cst_50 = arith.constant dense<0.000000e+00> : vector<8xf32>
    %144 = vector.multi_reduction <add>, %139, %cst_50 [1] : vector<8x32xf32> to vector<8xf32>
    %145 = vector.shape_cast %144 : vector<8xf32> to vector<8x1xf32>
    %cst_51 = arith.constant 3.200000e+01 : f32
    %146 = vector.broadcast %cst_51 : f32 to vector<8x1xf32>
    %147 = arith.divf %145, %146 : vector<8x1xf32>
    %148 = vector.broadcast %147 : vector<8x1xf32> to vector<8x32xf32>
    %149 = arith.subf %139, %148 : vector<8x32xf32>
    %150 = arith.mulf %149, %149 : vector<8x32xf32>
    %cst_52 = arith.constant dense<0.000000e+00> : vector<8xf32>
    %151 = vector.multi_reduction <add>, %150, %cst_52 [1] : vector<8x32xf32> to vector<8xf32>
    %152 = vector.shape_cast %151 : vector<8xf32> to vector<8x1xf32>
    %cst_53 = arith.constant 3.200000e+01 : f32
    %153 = vector.broadcast %cst_53 : f32 to vector<8x1xf32>
    %154 = arith.divf %152, %153 : vector<8x1xf32>
    %155 = vector.broadcast %147 : vector<8x1xf32> to vector<8x32xf32>
    %156 = arith.subf %139, %155 : vector<8x32xf32>
    %cst_54 = arith.constant 9.99999974E-6 : f32
    %157 = vector.broadcast %cst_54 : f32 to vector<8x1xf32>
    %158 = arith.addf %154, %157 : vector<8x1xf32>
    %159 = math.rsqrt %158 : vector<8x1xf32>
    %160 = vector.broadcast %159 : vector<8x1xf32> to vector<8x32xf32>
    %161 = arith.mulf %156, %160 : vector<8x32xf32>
    %162 = vector.shape_cast %141 : vector<32xf32> to vector<1x32xf32>
    %163 = vector.broadcast %162 : vector<1x32xf32> to vector<8x32xf32>
    %164 = arith.mulf %161, %163 : vector<8x32xf32>
    %165 = vector.shape_cast %143 : vector<32xf32> to vector<1x32xf32>
    %166 = vector.broadcast %165 : vector<1x32xf32> to vector<8x32xf32>
    %167 = arith.addf %164, %166 : vector<8x32xf32>
    %168 = arith.truncf %167 : vector<8x32xf32> to vector<8x32xbf16>
    %c0_55 = arith.constant 0 : index
    %c0_56 = arith.constant 0 : index
    %c0_57 = arith.constant 0 : index
    %169 = vector.load %arg15[%c0_55, %c0_56, %c0_57] : memref<2x32x64xbf16, #tpu.memory_space<vmem>>, vector<1x32x64xbf16>
    %170 = vector.shape_cast %169 : vector<1x32x64xbf16> to vector<32x64xbf16>
    %cst_58 = arith.constant dense<0.000000e+00> : vector<8x64xf32>
    %171 = tpu.matmul %168, %170, %cst_58 {dimension_numbers = #tpu.dot_dimension_numbers<[1], [0], [0], [1], [0, 0, 1, 1], [], []>} : vector<8x32xbf16>, vector<32x64xbf16>, vector<8x64xf32> -> vector<8x64xf32>
    %c0_59 = arith.constant 0 : index
    %c0_60 = arith.constant 0 : index
    %172 = vector.load %arg16[%c0_59, %c0_60] : memref<2x64xf32, #tpu.memory_space<vmem>>, vector<1x64xf32>
    %173 = vector.shape_cast %172 : vector<1x64xf32> to vector<64xf32>
    %174 = vector.shape_cast %173 : vector<64xf32> to vector<1x64xf32>
    %175 = vector.broadcast %174 : vector<1x64xf32> to vector<8x64xf32>
    %176 = arith.addf %171, %175 : vector<8x64xf32>
    %cst_61 = arith.constant 0.000000e+00 : f32
    %177 = vector.broadcast %cst_61 : f32 to vector<8x64xf32>
    %178 = arith.maximumf %176, %177 : vector<8x64xf32>
    %179 = arith.truncf %178 : vector<8x64xf32> to vector<8x64xbf16>
    %c0_62 = arith.constant 0 : index
    %c0_63 = arith.constant 0 : index
    %c0_64 = arith.constant 0 : index
    %180 = vector.load %arg17[%c0_62, %c0_63, %c0_64] : memref<2x64x32xbf16, #tpu.memory_space<vmem>>, vector<1x64x32xbf16>
    %181 = vector.shape_cast %180 : vector<1x64x32xbf16> to vector<64x32xbf16>
    %cst_65 = arith.constant dense<0.000000e+00> : vector<8x32xf32>
    %182 = tpu.matmul %179, %181, %cst_65 {dimension_numbers = #tpu.dot_dimension_numbers<[1], [0], [0], [1], [0, 0, 1, 1], [], []>} : vector<8x64xbf16>, vector<64x32xbf16>, vector<8x32xf32> -> vector<8x32xf32>
    %c0_66 = arith.constant 0 : index
    %c0_67 = arith.constant 0 : index
    %183 = vector.load %arg18[%c0_66, %c0_67] : memref<2x32xf32, #tpu.memory_space<vmem>>, vector<1x32xf32>
    %184 = vector.shape_cast %183 : vector<1x32xf32> to vector<32xf32>
    %185 = vector.shape_cast %184 : vector<32xf32> to vector<1x32xf32>
    %186 = vector.broadcast %185 : vector<1x32xf32> to vector<8x32xf32>
    %187 = arith.addf %182, %186 : vector<8x32xf32>
    %c0_68 = arith.constant 0 : index
    %c0_69 = arith.constant 0 : index
    %188 = vector.load %arg19[%c0_68, %c0_69] : memref<2x32xf32, #tpu.memory_space<vmem>>, vector<1x32xf32>
    %189 = vector.shape_cast %188 : vector<1x32xf32> to vector<32xf32>
    %c0_70 = arith.constant 0 : index
    %c0_71 = arith.constant 0 : index
    %190 = vector.load %arg20[%c0_70, %c0_71] : memref<2x32xf32, #tpu.memory_space<vmem>>, vector<1x32xf32>
    %191 = vector.shape_cast %190 : vector<1x32xf32> to vector<32xf32>
    %cst_72 = arith.constant dense<0.000000e+00> : vector<8xf32>
    %192 = vector.multi_reduction <add>, %187, %cst_72 [1] : vector<8x32xf32> to vector<8xf32>
    %193 = vector.shape_cast %192 : vector<8xf32> to vector<8x1xf32>
    %cst_73 = arith.constant 3.200000e+01 : f32
    %194 = vector.broadcast %cst_73 : f32 to vector<8x1xf32>
    %195 = arith.divf %193, %194 : vector<8x1xf32>
    %196 = vector.broadcast %195 : vector<8x1xf32> to vector<8x32xf32>
    %197 = arith.subf %187, %196 : vector<8x32xf32>
    %198 = arith.mulf %197, %197 : vector<8x32xf32>
    %cst_74 = arith.constant dense<0.000000e+00> : vector<8xf32>
    %199 = vector.multi_reduction <add>, %198, %cst_74 [1] : vector<8x32xf32> to vector<8xf32>
    %200 = vector.shape_cast %199 : vector<8xf32> to vector<8x1xf32>
    %cst_75 = arith.constant 3.200000e+01 : f32
    %201 = vector.broadcast %cst_75 : f32 to vector<8x1xf32>
    %202 = arith.divf %200, %201 : vector<8x1xf32>
    %203 = vector.broadcast %195 : vector<8x1xf32> to vector<8x32xf32>
    %204 = arith.subf %187, %203 : vector<8x32xf32>
    %cst_76 = arith.constant 9.99999974E-6 : f32
    %205 = vector.broadcast %cst_76 : f32 to vector<8x1xf32>
    %206 = arith.addf %202, %205 : vector<8x1xf32>
    %207 = math.rsqrt %206 : vector<8x1xf32>
    %208 = vector.broadcast %207 : vector<8x1xf32> to vector<8x32xf32>
    %209 = arith.mulf %204, %208 : vector<8x32xf32>
    %210 = vector.shape_cast %189 : vector<32xf32> to vector<1x32xf32>
    %211 = vector.broadcast %210 : vector<1x32xf32> to vector<8x32xf32>
    %212 = arith.mulf %209, %211 : vector<8x32xf32>
    %213 = vector.shape_cast %191 : vector<32xf32> to vector<1x32xf32>
    %214 = vector.broadcast %213 : vector<1x32xf32> to vector<8x32xf32>
    %215 = arith.addf %212, %214 : vector<8x32xf32>
    %216 = arith.truncf %215 : vector<8x32xf32> to vector<8x32xbf16>
    %c1 = arith.constant 1 : index
    %c0_77 = arith.constant 0 : index
    %c0_78 = arith.constant 0 : index
    %217 = vector.load %arg9[%c1, %c0_77, %c0_78] : memref<2x32x96xbf16, #tpu.memory_space<vmem>>, vector<1x32x96xbf16>
    %218 = vector.shape_cast %217 : vector<1x32x96xbf16> to vector<32x96xbf16>
    %cst_79 = arith.constant dense<0.000000e+00> : vector<8x96xf32>
    %219 = tpu.matmul %216, %218, %cst_79 {dimension_numbers = #tpu.dot_dimension_numbers<[1], [0], [0], [1], [0, 0, 1, 1], [], []>} : vector<8x32xbf16>, vector<32x96xbf16>, vector<8x96xf32> -> vector<8x96xf32>
    %c1_80 = arith.constant 1 : index
    %c0_81 = arith.constant 0 : index
    %220 = vector.load %arg10[%c1_80, %c0_81] : memref<2x96xf32, #tpu.memory_space<vmem>>, vector<1x96xf32>
    %221 = vector.shape_cast %220 : vector<1x96xf32> to vector<96xf32>
    %222 = vector.shape_cast %221 : vector<96xf32> to vector<1x96xf32>
    %223 = vector.broadcast %222 : vector<1x96xf32> to vector<8x96xf32>
    %224 = arith.addf %219, %223 : vector<8x96xf32>
    %225 = vector.extract_strided_slice %224 {offsets = [0, 0], sizes = [8, 8], strides = [1, 1]} : vector<8x96xf32> to vector<8x8xf32>
    %226 = vector.extract_strided_slice %224 {offsets = [0, 32], sizes = [8, 8], strides = [1, 1]} : vector<8x96xf32> to vector<8x8xf32>
    %227 = vector.extract_strided_slice %224 {offsets = [0, 64], sizes = [8, 8], strides = [1, 1]} : vector<8x96xf32> to vector<8x8xf32>
    %228 = vector.shape_cast %225 : vector<8x8xf32> to vector<1x8x8xf32>
    %229 = arith.truncf %228 : vector<1x8x8xf32> to vector<1x8x8xbf16>
    %230 = vector.shape_cast %226 : vector<8x8xf32> to vector<1x8x8xf32>
    %231 = arith.truncf %230 : vector<1x8x8xf32> to vector<1x8x8xbf16>
    %232 = vector.shape_cast %227 : vector<8x8xf32> to vector<1x8x8xf32>
    %233 = arith.truncf %232 : vector<1x8x8xf32> to vector<1x8x8xbf16>
    "tpu.trace_start"() <{level = 10 : i32, message = "bqd,bkd->bqk"}> : () -> ()
    %cst_82 = arith.constant dense<0.000000e+00> : vector<1x8x8xf32>
    %234 = tpu.matmul %229, %231, %cst_82 {dimension_numbers = #tpu.dot_dimension_numbers<[2], [2], [1], [1], [0, 0, 0, 1, 1, 1], [0], [0]>} : vector<1x8x8xbf16>, vector<1x8x8xbf16>, vector<1x8x8xf32> -> vector<1x8x8xf32>
    "tpu.trace_stop"() : () -> ()
    %cst_83 = arith.constant dense<0xFF800000> : vector<1x8xf32>
    %235 = vector.multi_reduction <maximumf>, %234, %cst_83 [2] : vector<1x8x8xf32> to vector<1x8xf32>
    %236 = vector.shape_cast %235 : vector<1x8xf32> to vector<1x8x1xf32>
    %237 = vector.broadcast %236 : vector<1x8x1xf32> to vector<1x8x8xf32>
    %238 = arith.subf %234, %237 : vector<1x8x8xf32>
    %239 = math.exp %238 : vector<1x8x8xf32>
    %cst_84 = arith.constant dense<0.000000e+00> : vector<1x8xf32>
    %240 = vector.multi_reduction <add>, %239, %cst_84 [2] : vector<1x8x8xf32> to vector<1x8xf32>
    %241 = vector.shape_cast %240 : vector<1x8xf32> to vector<1x8x1xf32>
    %242 = tpu.reciprocal %241 {approx = true} : vector<1x8x1xf32> -> vector<1x8x1xf32>
    %243 = vector.broadcast %242 : vector<1x8x1xf32> to vector<1x8x8xf32>
    %244 = arith.mulf %239, %243 : vector<1x8x8xf32>
    %245 = arith.truncf %244 : vector<1x8x8xf32> to vector<1x8x8xbf16>
    "tpu.trace_start"() <{level = 10 : i32, message = "bqk,bkd->bqd"}> : () -> ()
    %cst_85 = arith.constant dense<0.000000e+00> : vector<1x8x8xf32>
    %246 = tpu.matmul %245, %233, %cst_85 {dimension_numbers = #tpu.dot_dimension_numbers<[2], [1], [1], [2], [0, 0, 0, 1, 1, 2], [0], [0]>} : vector<1x8x8xbf16>, vector<1x8x8xbf16>, vector<1x8x8xf32> -> vector<1x8x8xf32>
    "tpu.trace_stop"() : () -> ()
    %247 = vector.shape_cast %246 : vector<1x8x8xf32> to vector<8x8xf32>
    %248 = vector.extract_strided_slice %224 {offsets = [0, 8], sizes = [8, 8], strides = [1, 1]} : vector<8x96xf32> to vector<8x8xf32>
    %249 = vector.extract_strided_slice %224 {offsets = [0, 40], sizes = [8, 8], strides = [1, 1]} : vector<8x96xf32> to vector<8x8xf32>
    %250 = vector.extract_strided_slice %224 {offsets = [0, 72], sizes = [8, 8], strides = [1, 1]} : vector<8x96xf32> to vector<8x8xf32>
    %251 = vector.shape_cast %248 : vector<8x8xf32> to vector<1x8x8xf32>
    %252 = arith.truncf %251 : vector<1x8x8xf32> to vector<1x8x8xbf16>
    %253 = vector.shape_cast %249 : vector<8x8xf32> to vector<1x8x8xf32>
    %254 = arith.truncf %253 : vector<1x8x8xf32> to vector<1x8x8xbf16>
    %255 = vector.shape_cast %250 : vector<8x8xf32> to vector<1x8x8xf32>
    %256 = arith.truncf %255 : vector<1x8x8xf32> to vector<1x8x8xbf16>
    "tpu.trace_start"() <{level = 10 : i32, message = "bqd,bkd->bqk"}> : () -> ()
    %cst_86 = arith.constant dense<0.000000e+00> : vector<1x8x8xf32>
    %257 = tpu.matmul %252, %254, %cst_86 {dimension_numbers = #tpu.dot_dimension_numbers<[2], [2], [1], [1], [0, 0, 0, 1, 1, 1], [0], [0]>} : vector<1x8x8xbf16>, vector<1x8x8xbf16>, vector<1x8x8xf32> -> vector<1x8x8xf32>
    "tpu.trace_stop"() : () -> ()
    %cst_87 = arith.constant dense<0xFF800000> : vector<1x8xf32>
    %258 = vector.multi_reduction <maximumf>, %257, %cst_87 [2] : vector<1x8x8xf32> to vector<1x8xf32>
    %259 = vector.shape_cast %258 : vector<1x8xf32> to vector<1x8x1xf32>
    %260 = vector.broadcast %259 : vector<1x8x1xf32> to vector<1x8x8xf32>
    %261 = arith.subf %257, %260 : vector<1x8x8xf32>
    %262 = math.exp %261 : vector<1x8x8xf32>
    %cst_88 = arith.constant dense<0.000000e+00> : vector<1x8xf32>
    %263 = vector.multi_reduction <add>, %262, %cst_88 [2] : vector<1x8x8xf32> to vector<1x8xf32>
    %264 = vector.shape_cast %263 : vector<1x8xf32> to vector<1x8x1xf32>
    %265 = tpu.reciprocal %264 {approx = true} : vector<1x8x1xf32> -> vector<1x8x1xf32>
    %266 = vector.broadcast %265 : vector<1x8x1xf32> to vector<1x8x8xf32>
    %267 = arith.mulf %262, %266 : vector<1x8x8xf32>
    %268 = arith.truncf %267 : vector<1x8x8xf32> to vector<1x8x8xbf16>
    "tpu.trace_start"() <{level = 10 : i32, message = "bqk,bkd->bqd"}> : () -> ()
    %cst_89 = arith.constant dense<0.000000e+00> : vector<1x8x8xf32>
    %269 = tpu.matmul %268, %256, %cst_89 {dimension_numbers = #tpu.dot_dimension_numbers<[2], [1], [1], [2], [0, 0, 0, 1, 1, 2], [0], [0]>} : vector<1x8x8xbf16>, vector<1x8x8xbf16>, vector<1x8x8xf32> -> vector<1x8x8xf32>
    "tpu.trace_stop"() : () -> ()
    %270 = vector.shape_cast %269 : vector<1x8x8xf32> to vector<8x8xf32>
    %271 = vector.extract_strided_slice %224 {offsets = [0, 16], sizes = [8, 8], strides = [1, 1]} : vector<8x96xf32> to vector<8x8xf32>
    %272 = vector.extract_strided_slice %224 {offsets = [0, 48], sizes = [8, 8], strides = [1, 1]} : vector<8x96xf32> to vector<8x8xf32>
    %273 = vector.extract_strided_slice %224 {offsets = [0, 80], sizes = [8, 8], strides = [1, 1]} : vector<8x96xf32> to vector<8x8xf32>
    %274 = vector.shape_cast %271 : vector<8x8xf32> to vector<1x8x8xf32>
    %275 = arith.truncf %274 : vector<1x8x8xf32> to vector<1x8x8xbf16>
    %276 = vector.shape_cast %272 : vector<8x8xf32> to vector<1x8x8xf32>
    %277 = arith.truncf %276 : vector<1x8x8xf32> to vector<1x8x8xbf16>
    %278 = vector.shape_cast %273 : vector<8x8xf32> to vector<1x8x8xf32>
    %279 = arith.truncf %278 : vector<1x8x8xf32> to vector<1x8x8xbf16>
    "tpu.trace_start"() <{level = 10 : i32, message = "bqd,bkd->bqk"}> : () -> ()
    %cst_90 = arith.constant dense<0.000000e+00> : vector<1x8x8xf32>
    %280 = tpu.matmul %275, %277, %cst_90 {dimension_numbers = #tpu.dot_dimension_numbers<[2], [2], [1], [1], [0, 0, 0, 1, 1, 1], [0], [0]>} : vector<1x8x8xbf16>, vector<1x8x8xbf16>, vector<1x8x8xf32> -> vector<1x8x8xf32>
    "tpu.trace_stop"() : () -> ()
    %cst_91 = arith.constant dense<0xFF800000> : vector<1x8xf32>
    %281 = vector.multi_reduction <maximumf>, %280, %cst_91 [2] : vector<1x8x8xf32> to vector<1x8xf32>
    %282 = vector.shape_cast %281 : vector<1x8xf32> to vector<1x8x1xf32>
    %283 = vector.broadcast %282 : vector<1x8x1xf32> to vector<1x8x8xf32>
    %284 = arith.subf %280, %283 : vector<1x8x8xf32>
    %285 = math.exp %284 : vector<1x8x8xf32>
    %cst_92 = arith.constant dense<0.000000e+00> : vector<1x8xf32>
    %286 = vector.multi_reduction <add>, %285, %cst_92 [2] : vector<1x8x8xf32> to vector<1x8xf32>
    %287 = vector.shape_cast %286 : vector<1x8xf32> to vector<1x8x1xf32>
    %288 = tpu.reciprocal %287 {approx = true} : vector<1x8x1xf32> -> vector<1x8x1xf32>
    %289 = vector.broadcast %288 : vector<1x8x1xf32> to vector<1x8x8xf32>
    %290 = arith.mulf %285, %289 : vector<1x8x8xf32>
    %291 = arith.truncf %290 : vector<1x8x8xf32> to vector<1x8x8xbf16>
    "tpu.trace_start"() <{level = 10 : i32, message = "bqk,bkd->bqd"}> : () -> ()
    %cst_93 = arith.constant dense<0.000000e+00> : vector<1x8x8xf32>
    %292 = tpu.matmul %291, %279, %cst_93 {dimension_numbers = #tpu.dot_dimension_numbers<[2], [1], [1], [2], [0, 0, 0, 1, 1, 2], [0], [0]>} : vector<1x8x8xbf16>, vector<1x8x8xbf16>, vector<1x8x8xf32> -> vector<1x8x8xf32>
    "tpu.trace_stop"() : () -> ()
    %293 = vector.shape_cast %292 : vector<1x8x8xf32> to vector<8x8xf32>
    %294 = vector.extract_strided_slice %224 {offsets = [0, 24], sizes = [8, 8], strides = [1, 1]} : vector<8x96xf32> to vector<8x8xf32>
    %295 = vector.extract_strided_slice %224 {offsets = [0, 56], sizes = [8, 8], strides = [1, 1]} : vector<8x96xf32> to vector<8x8xf32>
    %296 = vector.extract_strided_slice %224 {offsets = [0, 88], sizes = [8, 8], strides = [1, 1]} : vector<8x96xf32> to vector<8x8xf32>
    %297 = vector.shape_cast %294 : vector<8x8xf32> to vector<1x8x8xf32>
    %298 = arith.truncf %297 : vector<1x8x8xf32> to vector<1x8x8xbf16>
    %299 = vector.shape_cast %295 : vector<8x8xf32> to vector<1x8x8xf32>
    %300 = arith.truncf %299 : vector<1x8x8xf32> to vector<1x8x8xbf16>
    %301 = vector.shape_cast %296 : vector<8x8xf32> to vector<1x8x8xf32>
    %302 = arith.truncf %301 : vector<1x8x8xf32> to vector<1x8x8xbf16>
    "tpu.trace_start"() <{level = 10 : i32, message = "bqd,bkd->bqk"}> : () -> ()
    %cst_94 = arith.constant dense<0.000000e+00> : vector<1x8x8xf32>
    %303 = tpu.matmul %298, %300, %cst_94 {dimension_numbers = #tpu.dot_dimension_numbers<[2], [2], [1], [1], [0, 0, 0, 1, 1, 1], [0], [0]>} : vector<1x8x8xbf16>, vector<1x8x8xbf16>, vector<1x8x8xf32> -> vector<1x8x8xf32>
    "tpu.trace_stop"() : () -> ()
    %cst_95 = arith.constant dense<0xFF800000> : vector<1x8xf32>
    %304 = vector.multi_reduction <maximumf>, %303, %cst_95 [2] : vector<1x8x8xf32> to vector<1x8xf32>
    %305 = vector.shape_cast %304 : vector<1x8xf32> to vector<1x8x1xf32>
    %306 = vector.broadcast %305 : vector<1x8x1xf32> to vector<1x8x8xf32>
    %307 = arith.subf %303, %306 : vector<1x8x8xf32>
    %308 = math.exp %307 : vector<1x8x8xf32>
    %cst_96 = arith.constant dense<0.000000e+00> : vector<1x8xf32>
    %309 = vector.multi_reduction <add>, %308, %cst_96 [2] : vector<1x8x8xf32> to vector<1x8xf32>
    %310 = vector.shape_cast %309 : vector<1x8xf32> to vector<1x8x1xf32>
    %311 = tpu.reciprocal %310 {approx = true} : vector<1x8x1xf32> -> vector<1x8x1xf32>
    %312 = vector.broadcast %311 : vector<1x8x1xf32> to vector<1x8x8xf32>
    %313 = arith.mulf %308, %312 : vector<1x8x8xf32>
    %314 = arith.truncf %313 : vector<1x8x8xf32> to vector<1x8x8xbf16>
    "tpu.trace_start"() <{level = 10 : i32, message = "bqk,bkd->bqd"}> : () -> ()
    %cst_97 = arith.constant dense<0.000000e+00> : vector<1x8x8xf32>
    %315 = tpu.matmul %314, %302, %cst_97 {dimension_numbers = #tpu.dot_dimension_numbers<[2], [1], [1], [2], [0, 0, 0, 1, 1, 2], [0], [0]>} : vector<1x8x8xbf16>, vector<1x8x8xbf16>, vector<1x8x8xf32> -> vector<1x8x8xf32>
    "tpu.trace_stop"() : () -> ()
    %316 = vector.shape_cast %315 : vector<1x8x8xf32> to vector<8x8xf32>
    %317 = tpu.concatenate %247, %270, %293, %316 in 1 : vector<8x8xf32>, vector<8x8xf32>, vector<8x8xf32>, vector<8x8xf32> -> vector<8x32xf32>
    %318 = arith.truncf %317 : vector<8x32xf32> to vector<8x32xbf16>
    %c1_98 = arith.constant 1 : index
    %c0_99 = arith.constant 0 : index
    %c0_100 = arith.constant 0 : index
    %319 = vector.load %arg11[%c1_98, %c0_99, %c0_100] : memref<2x32x32xbf16, #tpu.memory_space<vmem>>, vector<1x32x32xbf16>
    %320 = vector.shape_cast %319 : vector<1x32x32xbf16> to vector<32x32xbf16>
    %cst_101 = arith.constant dense<0.000000e+00> : vector<8x32xf32>
    %321 = tpu.matmul %318, %320, %cst_101 {dimension_numbers = #tpu.dot_dimension_numbers<[1], [0], [0], [1], [0, 0, 1, 1], [], []>} : vector<8x32xbf16>, vector<32x32xbf16>, vector<8x32xf32> -> vector<8x32xf32>
    %c1_102 = arith.constant 1 : index
    %c0_103 = arith.constant 0 : index
    %322 = vector.load %arg12[%c1_102, %c0_103] : memref<2x32xf32, #tpu.memory_space<vmem>>, vector<1x32xf32>
    %323 = vector.shape_cast %322 : vector<1x32xf32> to vector<32xf32>
    %324 = vector.shape_cast %323 : vector<32xf32> to vector<1x32xf32>
    %325 = vector.broadcast %324 : vector<1x32xf32> to vector<8x32xf32>
    %326 = arith.addf %321, %325 : vector<8x32xf32>
    %c1_104 = arith.constant 1 : index
    %c0_105 = arith.constant 0 : index
    %327 = vector.load %arg13[%c1_104, %c0_105] : memref<2x32xf32, #tpu.memory_space<vmem>>, vector<1x32xf32>
    %328 = vector.shape_cast %327 : vector<1x32xf32> to vector<32xf32>
    %c1_106 = arith.constant 1 : index
    %c0_107 = arith.constant 0 : index
    %329 = vector.load %arg14[%c1_106, %c0_107] : memref<2x32xf32, #tpu.memory_space<vmem>>, vector<1x32xf32>
    %330 = vector.shape_cast %329 : vector<1x32xf32> to vector<32xf32>
    %cst_108 = arith.constant dense<0.000000e+00> : vector<8xf32>
    %331 = vector.multi_reduction <add>, %326, %cst_108 [1] : vector<8x32xf32> to vector<8xf32>
    %332 = vector.shape_cast %331 : vector<8xf32> to vector<8x1xf32>
    %cst_109 = arith.constant 3.200000e+01 : f32
    %333 = vector.broadcast %cst_109 : f32 to vector<8x1xf32>
    %334 = arith.divf %332, %333 : vector<8x1xf32>
    %335 = vector.broadcast %334 : vector<8x1xf32> to vector<8x32xf32>
    %336 = arith.subf %326, %335 : vector<8x32xf32>
    %337 = arith.mulf %336, %336 : vector<8x32xf32>
    %cst_110 = arith.constant dense<0.000000e+00> : vector<8xf32>
    %338 = vector.multi_reduction <add>, %337, %cst_110 [1] : vector<8x32xf32> to vector<8xf32>
    %339 = vector.shape_cast %338 : vector<8xf32> to vector<8x1xf32>
    %cst_111 = arith.constant 3.200000e+01 : f32
    %340 = vector.broadcast %cst_111 : f32 to vector<8x1xf32>
    %341 = arith.divf %339, %340 : vector<8x1xf32>
    %342 = vector.broadcast %334 : vector<8x1xf32> to vector<8x32xf32>
    %343 = arith.subf %326, %342 : vector<8x32xf32>
    %cst_112 = arith.constant 9.99999974E-6 : f32
    %344 = vector.broadcast %cst_112 : f32 to vector<8x1xf32>
    %345 = arith.addf %341, %344 : vector<8x1xf32>
    %346 = math.rsqrt %345 : vector<8x1xf32>
    %347 = vector.broadcast %346 : vector<8x1xf32> to vector<8x32xf32>
    %348 = arith.mulf %343, %347 : vector<8x32xf32>
    %349 = vector.shape_cast %328 : vector<32xf32> to vector<1x32xf32>
    %350 = vector.broadcast %349 : vector<1x32xf32> to vector<8x32xf32>
    %351 = arith.mulf %348, %350 : vector<8x32xf32>
    %352 = vector.shape_cast %330 : vector<32xf32> to vector<1x32xf32>
    %353 = vector.broadcast %352 : vector<1x32xf32> to vector<8x32xf32>
    %354 = arith.addf %351, %353 : vector<8x32xf32>
    %355 = arith.truncf %354 : vector<8x32xf32> to vector<8x32xbf16>
    %c1_113 = arith.constant 1 : index
    %c0_114 = arith.constant 0 : index
    %c0_115 = arith.constant 0 : index
    %356 = vector.load %arg15[%c1_113, %c0_114, %c0_115] : memref<2x32x64xbf16, #tpu.memory_space<vmem>>, vector<1x32x64xbf16>
    %357 = vector.shape_cast %356 : vector<1x32x64xbf16> to vector<32x64xbf16>
    %cst_116 = arith.constant dense<0.000000e+00> : vector<8x64xf32>
    %358 = tpu.matmul %355, %357, %cst_116 {dimension_numbers = #tpu.dot_dimension_numbers<[1], [0], [0], [1], [0, 0, 1, 1], [], []>} : vector<8x32xbf16>, vector<32x64xbf16>, vector<8x64xf32> -> vector<8x64xf32>
    %c1_117 = arith.constant 1 : index
    %c0_118 = arith.constant 0 : index
    %359 = vector.load %arg16[%c1_117, %c0_118] : memref<2x64xf32, #tpu.memory_space<vmem>>, vector<1x64xf32>
    %360 = vector.shape_cast %359 : vector<1x64xf32> to vector<64xf32>
    %361 = vector.shape_cast %360 : vector<64xf32> to vector<1x64xf32>
    %362 = vector.broadcast %361 : vector<1x64xf32> to vector<8x64xf32>
    %363 = arith.addf %358, %362 : vector<8x64xf32>
    %cst_119 = arith.constant 0.000000e+00 : f32
    %364 = vector.broadcast %cst_119 : f32 to vector<8x64xf32>
    %365 = arith.maximumf %363, %364 : vector<8x64xf32>
    %366 = arith.truncf %365 : vector<8x64xf32> to vector<8x64xbf16>
    %c1_120 = arith.constant 1 : index
    %c0_121 = arith.constant 0 : index
    %c0_122 = arith.constant 0 : index
    %367 = vector.load %arg17[%c1_120, %c0_121, %c0_122] : memref<2x64x32xbf16, #tpu.memory_space<vmem>>, vector<1x64x32xbf16>
    %368 = vector.shape_cast %367 : vector<1x64x32xbf16> to vector<64x32xbf16>
    %cst_123 = arith.constant dense<0.000000e+00> : vector<8x32xf32>
    %369 = tpu.matmul %366, %368, %cst_123 {dimension_numbers = #tpu.dot_dimension_numbers<[1], [0], [0], [1], [0, 0, 1, 1], [], []>} : vector<8x64xbf16>, vector<64x32xbf16>, vector<8x32xf32> -> vector<8x32xf32>
    %c1_124 = arith.constant 1 : index
    %c0_125 = arith.constant 0 : index
    %370 = vector.load %arg18[%c1_124, %c0_125] : memref<2x32xf32, #tpu.memory_space<vmem>>, vector<1x32xf32>
    %371 = vector.shape_cast %370 : vector<1x32xf32> to vector<32xf32>
    %372 = vector.shape_cast %371 : vector<32xf32> to vector<1x32xf32>
    %373 = vector.broadcast %372 : vector<1x32xf32> to vector<8x32xf32>
    %374 = arith.addf %369, %373 : vector<8x32xf32>
    %c1_126 = arith.constant 1 : index
    %c0_127 = arith.constant 0 : index
    %375 = vector.load %arg19[%c1_126, %c0_127] : memref<2x32xf32, #tpu.memory_space<vmem>>, vector<1x32xf32>
    %376 = vector.shape_cast %375 : vector<1x32xf32> to vector<32xf32>
    %c1_128 = arith.constant 1 : index
    %c0_129 = arith.constant 0 : index
    %377 = vector.load %arg20[%c1_128, %c0_129] : memref<2x32xf32, #tpu.memory_space<vmem>>, vector<1x32xf32>
    %378 = vector.shape_cast %377 : vector<1x32xf32> to vector<32xf32>
    %cst_130 = arith.constant dense<0.000000e+00> : vector<8xf32>
    %379 = vector.multi_reduction <add>, %374, %cst_130 [1] : vector<8x32xf32> to vector<8xf32>
    %380 = vector.shape_cast %379 : vector<8xf32> to vector<8x1xf32>
    %cst_131 = arith.constant 3.200000e+01 : f32
    %381 = vector.broadcast %cst_131 : f32 to vector<8x1xf32>
    %382 = arith.divf %380, %381 : vector<8x1xf32>
    %383 = vector.broadcast %382 : vector<8x1xf32> to vector<8x32xf32>
    %384 = arith.subf %374, %383 : vector<8x32xf32>
    %385 = arith.mulf %384, %384 : vector<8x32xf32>
    %cst_132 = arith.constant dense<0.000000e+00> : vector<8xf32>
    %386 = vector.multi_reduction <add>, %385, %cst_132 [1] : vector<8x32xf32> to vector<8xf32>
    %387 = vector.shape_cast %386 : vector<8xf32> to vector<8x1xf32>
    %cst_133 = arith.constant 3.200000e+01 : f32
    %388 = vector.broadcast %cst_133 : f32 to vector<8x1xf32>
    %389 = arith.divf %387, %388 : vector<8x1xf32>
    %390 = vector.broadcast %382 : vector<8x1xf32> to vector<8x32xf32>
    %391 = arith.subf %374, %390 : vector<8x32xf32>
    %cst_134 = arith.constant 9.99999974E-6 : f32
    %392 = vector.broadcast %cst_134 : f32 to vector<8x1xf32>
    %393 = arith.addf %389, %392 : vector<8x1xf32>
    %394 = math.rsqrt %393 : vector<8x1xf32>
    %395 = vector.broadcast %394 : vector<8x1xf32> to vector<8x32xf32>
    %396 = arith.mulf %391, %395 : vector<8x32xf32>
    %397 = vector.shape_cast %376 : vector<32xf32> to vector<1x32xf32>
    %398 = vector.broadcast %397 : vector<1x32xf32> to vector<8x32xf32>
    %399 = arith.mulf %396, %398 : vector<8x32xf32>
    %400 = vector.shape_cast %378 : vector<32xf32> to vector<1x32xf32>
    %401 = vector.broadcast %400 : vector<1x32xf32> to vector<8x32xf32>
    %402 = arith.addf %399, %401 : vector<8x32xf32>
    %403 = arith.truncf %402 : vector<8x32xf32> to vector<8x32xbf16>
    %c0_135 = arith.constant 0 : index
    %c0_136 = arith.constant 0 : index
    %404 = vector.load %arg21[%c0_135, %c0_136] : memref<32x128xbf16, #tpu.memory_space<vmem>>, vector<32x128xbf16>
    %cst_137 = arith.constant dense<0.000000e+00> : vector<8x128xf32>
    %405 = tpu.matmul %403, %404, %cst_137 {dimension_numbers = #tpu.dot_dimension_numbers<[1], [0], [0], [1], [0, 0, 1, 1], [], []>} : vector<8x32xbf16>, vector<32x128xbf16>, vector<8x128xf32> -> vector<8x128xf32>
    %c0_138 = arith.constant 0 : index
    %c0_139 = arith.constant 0 : index
    %406 = vector.load %arg22[%c0_138, %c0_139] : memref<1x128xf32, #tpu.memory_space<vmem>>, vector<1x128xf32>
    %407 = vector.broadcast %406 : vector<1x128xf32> to vector<8x128xf32>
    %408 = arith.addf %405, %407 : vector<8x128xf32>
    %409 = vector.shape_cast %408 : vector<8x128xf32> to vector<1x8x128xf32>
    %c0_140 = arith.constant 0 : index
    %c0_141 = arith.constant 0 : index
    %c0_142 = arith.constant 0 : index
    %410 = vector.load %arg23[%c0_140, %c0_141, %c0_142] : memref<1x8x128xf32, #tpu.memory_space<vmem>>, vector<1x8x128xf32>
    tpu.vector_store %arg23[%c0_140, %c0_141, %c0_142], %409 {strides = array<i32>} : memref<1x8x128xf32, #tpu.memory_space<vmem>>, vector<1x8x128xf32>,
    return
  }
  func.func @transform_0(%arg0: i32) -> (i32, i32, i32) {
    %c0_i32 = arith.constant 0 : i32
    %c0_i32_0 = arith.constant 0 : i32
    %c0_i32_1 = arith.constant 0 : i32
    return %arg0, %c0_i32, %c0_i32_0 : i32, i32, i32
  }
  func.func @transform_1(%arg0: i32) -> (i32, i32, i32) {
    %c0_i32 = arith.constant 0 : i32
    %c0_i32_0 = arith.constant 0 : i32
    %c0_i32_1 = arith.constant 0 : i32
    return %arg0, %c0_i32, %c0_i32_0 : i32, i32, i32
  }
  func.func @transform_2(%arg0: i32) -> (i32, i32) {
    %c0_i32 = arith.constant 0 : i32
    %c0_i32_0 = arith.constant 0 : i32
    %c0_i32_1 = arith.constant 0 : i32
    return %c0_i32, %c0_i32_0 : i32, i32
  }
  func.func @transform_3(%arg0: i32) -> (i32, i32) {
    %c0_i32 = arith.constant 0 : i32
    %c0_i32_0 = arith.constant 0 : i32
    %c0_i32_1 = arith.constant 0 : i32
    return %c0_i32, %c0_i32_0 : i32, i32
  }
  func.func @transform_4(%arg0: i32) -> (i32, i32) {
    %c0_i32 = arith.constant 0 : i32
    %c0_i32_0 = arith.constant 0 : i32
    %c0_i32_1 = arith.constant 0 : i32
    return %c0_i32, %c0_i32_0 : i32, i32
  }
  func.func @transform_5(%arg0: i32) -> (i32, i32) {
    %c0_i32 = arith.constant 0 : i32
    %c0_i32_0 = arith.constant 0 : i32
    %c0_i32_1 = arith.constant 0 : i32
    return %c0_i32, %c0_i32_0 : i32, i32
  }
  func.func @transform_6(%arg0: i32) -> (i32, i32) {
    %c0_i32 = arith.constant 0 : i32
    %c0_i32_0 = arith.constant 0 : i32
    %c0_i32_1 = arith.constant 0 : i32
    return %c0_i32, %c0_i32_0 : i32, i32
  }
  func.func @transform_7(%arg0: i32) -> (i32, i32) {
    %c0_i32 = arith.constant 0 : i32
    %c0_i32_0 = arith.constant 0 : i32
    %c0_i32_1 = arith.constant 0 : i32
    return %c0_i32, %c0_i32_0 : i32, i32
  }
  func.func @transform_8(%arg0: i32) -> (i32, i32, i32) {
    %c0_i32 = arith.constant 0 : i32
    %c0_i32_0 = arith.constant 0 : i32
    %c0_i32_1 = arith.constant 0 : i32
    %c0_i32_2 = arith.constant 0 : i32
    return %c0_i32, %c0_i32_0, %c0_i32_1 : i32, i32, i32
  }
  func.func @transform_9(%arg0: i32) -> (i32, i32) {
    %c0_i32 = arith.constant 0 : i32
    %c0_i32_0 = arith.constant 0 : i32
    %c0_i32_1 = arith.constant 0 : i32
    return %c0_i32, %c0_i32_0 : i32, i32
  }
  func.func @transform_10(%arg0: i32) -> (i32, i32, i32) {
    %c0_i32 = arith.constant 0 : i32
    %c0_i32_0 = arith.constant 0 : i32
    %c0_i32_1 = arith.constant 0 : i32
    %c0_i32_2 = arith.constant 0 : i32
    return %c0_i32, %c0_i32_0, %c0_i32_1 : i32, i32, i32
  }
  func.func @transform_11(%arg0: i32) -> (i32, i32) {
    %c0_i32 = arith.constant 0 : i32
    %c0_i32_0 = arith.constant 0 : i32
    %c0_i32_1 = arith.constant 0 : i32
    return %c0_i32, %c0_i32_0 : i32, i32
  }
  func.func @transform_12(%arg0: i32) -> (i32, i32) {
    %c0_i32 = arith.constant 0 : i32
    %c0_i32_0 = arith.constant 0 : i32
    %c0_i32_1 = arith.constant 0 : i32
    return %c0_i32, %c0_i32_0 : i32, i32
  }
  func.func @transform_13(%arg0: i32) -> (i32, i32) {
    %c0_i32 = arith.constant 0 : i32
    %c0_i32_0 = arith.constant 0 : i32
    %c0_i32_1 = arith.constant 0 : i32
    return %c0_i32, %c0_i32_0 : i32, i32
  }
  func.func @transform_14(%arg0: i32) -> (i32, i32, i32) {
    %c0_i32 = arith.constant 0 : i32
    %c0_i32_0 = arith.constant 0 : i32
    %c0_i32_1 = arith.constant 0 : i32
    %c0_i32_2 = arith.constant 0 : i32
    return %c0_i32, %c0_i32_0, %c0_i32_1 : i32, i32, i32
  }
  func.func @transform_15(%arg0: i32) -> (i32, i32) {
    %c0_i32 = arith.constant 0 : i32
    %c0_i32_0 = arith.constant 0 : i32
    %c0_i32_1 = arith.constant 0 : i32
    return %c0_i32, %c0_i32_0 : i32, i32
  }
  func.func @transform_16(%arg0: i32) -> (i32, i32, i32) {
    %c0_i32 = arith.constant 0 : i32
    %c0_i32_0 = arith.constant 0 : i32
    %c0_i32_1 = arith.constant 0 : i32
    %c0_i32_2 = arith.constant 0 : i32
    return %c0_i32, %c0_i32_0, %c0_i32_1 : i32, i32, i32
  }
  func.func @transform_17(%arg0: i32) -> (i32, i32) {
    %c0_i32 = arith.constant 0 : i32
    %c0_i32_0 = arith.constant 0 : i32
    %c0_i32_1 = arith.constant 0 : i32
    return %c0_i32, %c0_i32_0 : i32, i32
  }
  func.func @transform_18(%arg0: i32) -> (i32, i32) {
    %c0_i32 = arith.constant 0 : i32
    %c0_i32_0 = arith.constant 0 : i32
    %c0_i32_1 = arith.constant 0 : i32
    return %c0_i32, %c0_i32_0 : i32, i32
  }
  func.func @transform_19(%arg0: i32) -> (i32, i32) {
    %c0_i32 = arith.constant 0 : i32
    %c0_i32_0 = arith.constant 0 : i32
    %c0_i32_1 = arith.constant 0 : i32
    return %c0_i32, %c0_i32_0 : i32, i32
  }
  func.func @transform_20(%arg0: i32) -> (i32, i32) {
    %c0_i32 = arith.constant 0 : i32
    %c0_i32_0 = arith.constant 0 : i32
    %c0_i32_1 = arith.constant 0 : i32
    return %c0_i32, %c0_i32_0 : i32, i32
  }
  func.func @transform_21(%arg0: i32) -> (i32, i32) {
    %c0_i32 = arith.constant 0 : i32
    %c0_i32_0 = arith.constant 0 : i32
    %c0_i32_1 = arith.constant 0 : i32
    return %c0_i32, %c0_i32_0 : i32, i32
  }
  func.func @transform_22(%arg0: i32) -> (i32, i32, i32) {
    %c0_i32 = arith.constant 0 : i32
    %c0_i32_0 = arith.constant 0 : i32
    %c0_i32_1 = arith.constant 0 : i32
    return %arg0, %c0_i32, %c0_i32_0 : i32, i32, i32
  }
}

</mosaic_0001>

<llo_original>
// kernel: tpu_custom_call.1
$region0: #{tpu_custom_call.1}
  #allocation0 [shape = 'u32[]', space=smem, size = 0x4, offset = 0x4, fixed_abs, tag = 'smem constant byte address 0x4 - core index']
  #allocation1 [shape = 'u32[144,128]{1,0:T(1,128)}', space=vmem, size = 0x12000, scoped, tag = 'internal scratch']
  %s0 = inlined_call_operand.vmem [shape: f32[2,8,4], index: 0, kind: input, shape index: {}]
  %s1 = inlined_call_operand.vmem [shape: f32[2,8,1], index: 1, kind: input, shape index: {}]
  %s2 = inlined_call_operand.vmem [shape: bf16[4,32], index: 2, kind: input, shape index: {}]
  %s3 = inlined_call_operand.vmem [shape: f32[1,32], index: 3, kind: input, shape index: {}]
  %s4 = inlined_call_operand.hbm [shape: f32[1,32], index: 4, kind: input, shape index: {}]
  %s5 = inlined_call_operand.hbm [shape: f32[1,32], index: 5, kind: input, shape index: {}]
  %s6 = inlined_call_operand.hbm [shape: f32[1,32], index: 6, kind: input, shape index: {}]
  %s7 = inlined_call_operand.hbm [shape: f32[1,32], index: 7, kind: input, shape index: {}]
  %s8 = inlined_call_operand.vmem [shape: bf16[2,32,96], index: 8, kind: input, shape index: {}]
  %s9 = inlined_call_operand.vmem [shape: f32[2,96], index: 9, kind: input, shape index: {}]
  %s10 = inlined_call_operand.vmem [shape: bf16[2,32,32], index: 10, kind: input, shape index: {}]
  %s11 = inlined_call_operand.vmem [shape: f32[2,32], index: 11, kind: input, shape index: {}]
  %s12 = inlined_call_operand.vmem [shape: f32[2,32], index: 12, kind: input, shape index: {}]
  %s13 = inlined_call_operand.vmem [shape: f32[2,32], index: 13, kind: input, shape index: {}]
  %s14 = inlined_call_operand.vmem [shape: bf16[2,32,64], index: 14, kind: input, shape index: {}]
  %s15 = inlined_call_operand.vmem [shape: f32[2,64], index: 15, kind: input, shape index: {}]
  %s16 = inlined_call_operand.vmem [shape: bf16[2,64,32], index: 16, kind: input, shape index: {}]
  %s17 = inlined_call_operand.vmem [shape: f32[2,32], index: 17, kind: input, shape index: {}]
  %s18 = inlined_call_operand.vmem [shape: f32[2,32], index: 18, kind: input, shape index: {}]
  %s19 = inlined_call_operand.vmem [shape: f32[2,32], index: 19, kind: input, shape index: {}]
  %s20 = inlined_call_operand.vmem [shape: bf16[32,128], index: 20, kind: input, shape index: {}]
  %s21 = inlined_call_operand.vmem [shape: f32[1,128], index: 21, kind: input, shape index: {}]
  %s22 = inlined_call_operand.hbm [shape: f32[2,8,128], index: 22, kind: output, shape index: {}]
  %s23 = sld [smem:[#allocation0]]
  $region137: #{tpu_custom_call.1} parent=0
    _
  %s25 = ssub.s32 1, %s23
  %s26 = scalar_select 0, %s25, %s23
  $region1: #{tpu_custom_call.1} parent=0
    #allocation2 [shape = 'u8[512]{0}', space=vmem, size = 0x400, scoped, tag = 'input window, operand 4, single buffered']
    #allocation3 [shape = 's32[2]{0}', space=sflag, size = 0x8, scoped, tag = 'scoped memory for tpu_custom_call.1']
    #allocation4 [shape = 's32[2]{0}', space=sflag, size = 0x8, scoped, tag = 'scoped memory for tpu_custom_call.1']
    #allocation5 [shape = 'u8[512]{0}', space=vmem, size = 0x400, scoped, tag = 'input window, operand 5, single buffered']
    #allocation6 [shape = 's32[1]{0}', space=sflag, size = 0x4, scoped, tag = 'scoped memory for tpu_custom_call.1']
    #allocation7 [shape = 'u8[512]{0}', space=vmem, size = 0x400, scoped, tag = 'input window, operand 6, single buffered']
    #allocation8 [shape = 'u8[512]{0}', space=vmem, size = 0x400, scoped, tag = 'input window, operand 7, single buffered']
    #allocation9 [shape = 's32[1]{0}', space=sflag, size = 0x4, scoped, tag = 'scoped memory for tpu_custom_call.1']
    #allocation10 [shape = 'u8[8192]{0}', space=vmem, size = 0x2000, scoped, tag = 'output window, operand 0']
    %27 = vsyncpa [#allocation3], 0
    %28 = vsyncpa [#allocation6], 0
    %29 = vsyncpa [#allocation9], 0
    %30 = vsyncpa [#allocation4], 0
    %s31 = scalar_lea.sflag [#allocation4], 1
    %32 = vsyncpa %s31, 0
    loop: start=0, step=1, limit=4
    $region2: #{tpu_custom_call.1} parent=1 // loop_pre_header
      _
    $region3: #{tpu_custom_call.1} parent=1 // loop_header
      %s34 = sphi 0, %s38
      %p35 = scmp.ge.s32.totalorder %s34, 4
      %s44 = sphi 0, %s46
      %s47 = sphi 0, %s44
      %s48 = sphi 0, %s47
      %s64 = sphi 0, %s48
      %s70 = sphi 0, %s72
      %s73 = sphi 0, %s70
      %s74 = sphi 0, %s73
      %s90 = sphi 0, %s74
      %s94 = sphi 0, %s94
      %s96 = sphi 0, %s94
      %s97 = sphi 0, %s96
      %s111 = sphi 0, %s97
      %s115 = sphi 0, %s115
      %s117 = sphi 0, %s115
      %s118 = sphi 0, %s117
      %s132 = sphi 0, %s118
      %s136 = sphi 0, %s136
      %s138 = sphi 0, %s136
      %s139 = sphi 0, %s138
      %s153 = sphi 0, %s139
      %s157 = sphi 0, %s157
      %s159 = sphi 0, %s157
      %s160 = sphi 0, %s159
      %s174 = sphi 0, %s160
      %s178 = sphi 0, %s178
      %s180 = sphi 0, %s178
      %s181 = sphi 0, %s180
      %s195 = sphi 0, %s181
      %s199 = sphi 0, %s199
      %s201 = sphi 0, %s199
      %s202 = sphi 0, %s201
      %s216 = sphi 0, %s202
      %s220 = sphi 0, %s220
      %s222 = sphi 0, %s220
      %s223 = sphi 0, %s222
      %s237 = sphi 0, %s223
      %s241 = sphi 0, %s241
      %s243 = sphi 0, %s241
      %s244 = sphi 0, %s243
      %s258 = sphi 0, %s244
      %s262 = sphi 0, %s262
      %s264 = sphi 0, %s262
      %s265 = sphi 0, %s264
      %s279 = sphi 0, %s265
      %s283 = sphi 0, %s283
      %s285 = sphi 0, %s283
      %s286 = sphi 0, %s285
      %s300 = sphi 0, %s286
      %s304 = sphi 0, %s304
      %s306 = sphi 0, %s304
      %s307 = sphi 0, %s306
      %s321 = sphi 0, %s307
      %s325 = sphi 0, %s325
      %s327 = sphi 0, %s325
      %s328 = sphi 0, %s327
      %s342 = sphi 0, %s328
      %s346 = sphi 0, %s346
      %s348 = sphi 0, %s346
      %s349 = sphi 0, %s348
      %s363 = sphi 0, %s349
      %s367 = sphi 0, %s367
      %s369 = sphi 0, %s367
      %s370 = sphi 0, %s369
      %s384 = sphi 0, %s370
      %s388 = sphi 0, %s388
      %s390 = sphi 0, %s388
      %s391 = sphi 0, %s390
      %s405 = sphi 0, %s391
      %s409 = sphi 0, %s409
      %s411 = sphi 0, %s409
      %s412 = sphi 0, %s411
      %s426 = sphi 0, %s412
      %s430 = sphi 0, %s430
      %s432 = sphi 0, %s430
      %s433 = sphi 0, %s432
      %s447 = sphi 0, %s433
      %s451 = sphi 0, %s451
      %s453 = sphi 0, %s451
      %s454 = sphi 0, %s453
      %s468 = sphi 0, %s454
      %s472 = sphi 0, %s472
      %s474 = sphi 0, %s472
      %s475 = sphi 0, %s474
      %s489 = sphi 0, %s475
      %s493 = sphi 0, %s493
      %s495 = sphi 0, %s493
      %s496 = sphi 0, %s495
      %s510 = sphi 0, %s496
      %s516 = sphi 0, %s518
      %s519 = sphi 0, %s516
      %s520 = sphi 0, %s519
      %s536 = sphi 0, %s520
    $region4: #{tpu_custom_call.1} parent=1 // loop_header_branch
      %37 = sbr.rel (%p35) target = $region8
    $region5: #{tpu_custom_call.1} parent=1 // loop_body
      %s39 = ssub.s32 %s34, 1
      %s40 = ssub.s32 %s34, 2
      %s41 = sadd.s32 %s34, 1
      %s42 = ssub.s32 %s34, %s41
      %p43 = scmp.eq.s32.totalorder %s42, 0
      %s45 = sadd.s32 %s44, 1
      %s46 = scalar_select %p43, %s44, %s45
      %p49 = pneg %p43
      %p50 = scmp.eq.s32.totalorder %s34, 1
      %p51 = por %p49, %p50
      %p52 = scmp.ne.s32.totalorder %s44, %s47
      %p53 = scmp.eq.s32.totalorder %s34, 0
      %p54 = por %p52, %p53
      %p55 = scmp.ne.s32.totalorder %s44, %s47
      %p56 = scmp.eq.s32.totalorder %s39, 1
      %p57 = por %p55, %p56
      %p58 = scmp.ne.s32.totalorder %s47, %s48
      %p59 = scmp.eq.s32.totalorder %s39, 0
      %p60 = por %p58, %p59
      %p61 = scmp.ne.s32.totalorder %s47, %s48
      %p62 = scmp.eq.s32.totalorder %s40, 1
      %p63 = por %p61, %p62
      %p65 = scmp.ne.s32.totalorder %s48, %s64
      %p66 = scmp.eq.s32.totalorder %s40, 0
      %p67 = por %p65, %p66
      %s68 = ssub.s32 %s34, %s41
      %p69 = scmp.eq.s32.totalorder %s68, 0
      %s71 = sadd.s32 %s70, 1
      %s72 = scalar_select %p69, %s70, %s71
      %p75 = pneg %p69
      %p76 = scmp.eq.s32.totalorder %s34, 1
      %p77 = por %p75, %p76
      %p78 = scmp.ne.s32.totalorder %s70, %s73
      %p79 = scmp.eq.s32.totalorder %s34, 0
      %p80 = por %p78, %p79
      %p81 = scmp.ne.s32.totalorder %s70, %s73
      %p82 = scmp.eq.s32.totalorder %s39, 1
      %p83 = por %p81, %p82
      %p84 = scmp.ne.s32.totalorder %s73, %s74
      %p85 = scmp.eq.s32.totalorder %s39, 0
      %p86 = por %p84, %p85
      %p87 = scmp.ne.s32.totalorder %s73, %s74
      %p88 = scmp.eq.s32.totalorder %s40, 1
      %p89 = por %p87, %p88
      %p91 = scmp.ne.s32.totalorder %s74, %s90
      %p92 = scmp.eq.s32.totalorder %s40, 0
      %p93 = por %p91, %p92
      %s95 = sadd.s32 %s94, 1
      %p98 = scmp.eq.s32.totalorder %s34, 1
      %p99 = scmp.ne.s32.totalorder %s94, %s96
      %p100 = scmp.eq.s32.totalorder %s34, 0
      %p101 = por %p99, %p100
      %p102 = scmp.ne.s32.totalorder %s94, %s96
      %p103 = scmp.eq.s32.totalorder %s39, 1
      %p104 = por %p102, %p103
      %p105 = scmp.ne.s32.totalorder %s96, %s97
      %p106 = scmp.eq.s32.totalorder %s39, 0
      %p107 = por %p105, %p106
      %p108 = scmp.ne.s32.totalorder %s96, %s97
      %p109 = scmp.eq.s32.totalorder %s40, 1
      %p110 = por %p108, %p109
      %p112 = scmp.ne.s32.totalorder %s97, %s111
      %p113 = scmp.eq.s32.totalorder %s40, 0
      %p114 = por %p112, %p113
      %s116 = sadd.s32 %s115, 1
      %p119 = scmp.eq.s32.totalorder %s34, 1
      %p120 = scmp.ne.s32.totalorder %s115, %s117
      %p121 = scmp.eq.s32.totalorder %s34, 0
      %p122 = por %p120, %p121
      %p123 = scmp.ne.s32.totalorder %s115, %s117
      %p124 = scmp.eq.s32.totalorder %s39, 1
      %p125 = por %p123, %p124
      %p126 = scmp.ne.s32.totalorder %s117, %s118
      %p127 = scmp.eq.s32.totalorder %s39, 0
      %p128 = por %p126, %p127
      %p129 = scmp.ne.s32.totalorder %s117, %s118
      %p130 = scmp.eq.s32.totalorder %s40, 1
      %p131 = por %p129, %p130
      %p133 = scmp.ne.s32.totalorder %s118, %s132
      %p134 = scmp.eq.s32.totalorder %s40, 0
      %p135 = por %p133, %p134
      %s137 = sadd.s32 %s136, 1
      %p140 = scmp.eq.s32.totalorder %s34, 1
      %p141 = scmp.ne.s32.totalorder %s136, %s138
      %p142 = scmp.eq.s32.totalorder %s34, 0
      %p143 = por %p141, %p142
      %p144 = scmp.ne.s32.totalorder %s136, %s138
      %p145 = scmp.eq.s32.totalorder %s39, 1
      %p146 = por %p144, %p145
      %p147 = scmp.ne.s32.totalorder %s138, %s139
      %p148 = scmp.eq.s32.totalorder %s39, 0
      %p149 = por %p147, %p148
      %p150 = scmp.ne.s32.totalorder %s138, %s139
      %p151 = scmp.eq.s32.totalorder %s40, 1
      %p152 = por %p150, %p151
      %p154 = scmp.ne.s32.totalorder %s139, %s153
      %p155 = scmp.eq.s32.totalorder %s40, 0
      %p156 = por %p154, %p155
      %s158 = sadd.s32 %s157, 1
      %p161 = scmp.eq.s32.totalorder %s34, 1
      %p162 = scmp.ne.s32.totalorder %s157, %s159
      %p163 = scmp.eq.s32.totalorder %s34, 0
      %p164 = por %p162, %p163
      %p165 = scmp.ne.s32.totalorder %s157, %s159
      %p166 = scmp.eq.s32.totalorder %s39, 1
      %p167 = por %p165, %p166
      %p168 = scmp.ne.s32.totalorder %s159, %s160
      %p169 = scmp.eq.s32.totalorder %s39, 0
      %p170 = por %p168, %p169
      %p171 = scmp.ne.s32.totalorder %s159, %s160
      %p172 = scmp.eq.s32.totalorder %s40, 1
      %p173 = por %p171, %p172
      %p175 = scmp.ne.s32.totalorder %s160, %s174
      %p176 = scmp.eq.s32.totalorder %s40, 0
      %p177 = por %p175, %p176
      %s179 = sadd.s32 %s178, 1
      %p182 = scmp.eq.s32.totalorder %s34, 1
      %p183 = scmp.ne.s32.totalorder %s178, %s180
      %p184 = scmp.eq.s32.totalorder %s34, 0
      %p185 = por %p183, %p184
      %p186 = scmp.ne.s32.totalorder %s178, %s180
      %p187 = scmp.eq.s32.totalorder %s39, 1
      %p188 = por %p186, %p187
      %p189 = scmp.ne.s32.totalorder %s180, %s181
      %p190 = scmp.eq.s32.totalorder %s39, 0
      %p191 = por %p189, %p190
      %p192 = scmp.ne.s32.totalorder %s180, %s181
      %p193 = scmp.eq.s32.totalorder %s40, 1
      %p194 = por %p192, %p193
      %p196 = scmp.ne.s32.totalorder %s181, %s195
      %p197 = scmp.eq.s32.totalorder %s40, 0
      %p198 = por %p196, %p197
      %s200 = sadd.s32 %s199, 1
      %p203 = scmp.eq.s32.totalorder %s34, 1
      %p204 = scmp.ne.s32.totalorder %s199, %s201
      %p205 = scmp.eq.s32.totalorder %s34, 0
      %p206 = por %p204, %p205
      %p207 = scmp.ne.s32.totalorder %s199, %s201
      %p208 = scmp.eq.s32.totalorder %s39, 1
      %p209 = por %p207, %p208
      %p210 = scmp.ne.s32.totalorder %s201, %s202
      %p211 = scmp.eq.s32.totalorder %s39, 0
      %p212 = por %p210, %p211
      %p213 = scmp.ne.s32.totalorder %s201, %s202
      %p214 = scmp.eq.s32.totalorder %s40, 1
      %p215 = por %p213, %p214
      %p217 = scmp.ne.s32.totalorder %s202, %s216
      %p218 = scmp.eq.s32.totalorder %s40, 0
      %p219 = por %p217, %p218
      %s221 = sadd.s32 %s220, 1
      %p224 = scmp.eq.s32.totalorder %s34, 1
      %p225 = scmp.ne.s32.totalorder %s220, %s222
      %p226 = scmp.eq.s32.totalorder %s34, 0
      %p227 = por %p225, %p226
      %p228 = scmp.ne.s32.totalorder %s220, %s222
      %p229 = scmp.eq.s32.totalorder %s39, 1
      %p230 = por %p228, %p229
      %p231 = scmp.ne.s32.totalorder %s222, %s223
      %p232 = scmp.eq.s32.totalorder %s39, 0
      %p233 = por %p231, %p232
      %p234 = scmp.ne.s32.totalorder %s222, %s223
      %p235 = scmp.eq.s32.totalorder %s40, 1
      %p236 = por %p234, %p235
      %p238 = scmp.ne.s32.totalorder %s223, %s237
      %p239 = scmp.eq.s32.totalorder %s40, 0
      %p240 = por %p238, %p239
      %s242 = sadd.s32 %s241, 1
      %p245 = scmp.eq.s32.totalorder %s34, 1
      %p246 = scmp.ne.s32.totalorder %s241, %s243
      %p247 = scmp.eq.s32.totalorder %s34, 0
      %p248 = por %p246, %p247
      %p249 = scmp.ne.s32.totalorder %s241, %s243
      %p250 = scmp.eq.s32.totalorder %s39, 1
      %p251 = por %p249, %p250
      %p252 = scmp.ne.s32.totalorder %s243, %s244
      %p253 = scmp.eq.s32.totalorder %s39, 0
      %p254 = por %p252, %p253
      %p255 = scmp.ne.s32.totalorder %s243, %s244
      %p256 = scmp.eq.s32.totalorder %s40, 1
      %p257 = por %p255, %p256
      %p259 = scmp.ne.s32.totalorder %s244, %s258
      %p260 = scmp.eq.s32.totalorder %s40, 0
      %p261 = por %p259, %p260
      %s263 = sadd.s32 %s262, 1
      %p266 = scmp.eq.s32.totalorder %s34, 1
      %p267 = scmp.ne.s32.totalorder %s262, %s264
      %p268 = scmp.eq.s32.totalorder %s34, 0
      %p269 = por %p267, %p268
      %p270 = scmp.ne.s32.totalorder %s262, %s264
      %p271 = scmp.eq.s32.totalorder %s39, 1
      %p272 = por %p270, %p271
      %p273 = scmp.ne.s32.totalorder %s264, %s265
      %p274 = scmp.eq.s32.totalorder %s39, 0
      %p275 = por %p273, %p274
      %p276 = scmp.ne.s32.totalorder %s264, %s265
      %p277 = scmp.eq.s32.totalorder %s40, 1
      %p278 = por %p276, %p277
      %p280 = scmp.ne.s32.totalorder %s265, %s279
      %p281 = scmp.eq.s32.totalorder %s40, 0
      %p282 = por %p280, %p281
      %s284 = sadd.s32 %s283, 1
      %p287 = scmp.eq.s32.totalorder %s34, 1
      %p288 = scmp.ne.s32.totalorder %s283, %s285
      %p289 = scmp.eq.s32.totalorder %s34, 0
      %p290 = por %p288, %p289
      %p291 = scmp.ne.s32.totalorder %s283, %s285
      %p292 = scmp.eq.s32.totalorder %s39, 1
      %p293 = por %p291, %p292
      %p294 = scmp.ne.s32.totalorder %s285, %s286
      %p295 = scmp.eq.s32.totalorder %s39, 0
      %p296 = por %p294, %p295
      %p297 = scmp.ne.s32.totalorder %s285, %s286
      %p298 = scmp.eq.s32.totalorder %s40, 1
      %p299 = por %p297, %p298
      %p301 = scmp.ne.s32.totalorder %s286, %s300
      %p302 = scmp.eq.s32.totalorder %s40, 0
      %p303 = por %p301, %p302
      %s305 = sadd.s32 %s304, 1
      %p308 = scmp.eq.s32.totalorder %s34, 1
      %p309 = scmp.ne.s32.totalorder %s304, %s306
      %p310 = scmp.eq.s32.totalorder %s34, 0
      %p311 = por %p309, %p310
      %p312 = scmp.ne.s32.totalorder %s304, %s306
      %p313 = scmp.eq.s32.totalorder %s39, 1
      %p314 = por %p312, %p313
      %p315 = scmp.ne.s32.totalorder %s306, %s307
      %p316 = scmp.eq.s32.totalorder %s39, 0
      %p317 = por %p315, %p316
      %p318 = scmp.ne.s32.totalorder %s306, %s307
      %p319 = scmp.eq.s32.totalorder %s40, 1
      %p320 = por %p318, %p319
      %p322 = scmp.ne.s32.totalorder %s307, %s321
      %p323 = scmp.eq.s32.totalorder %s40, 0
      %p324 = por %p322, %p323
      %s326 = sadd.s32 %s325, 1
      %p329 = scmp.eq.s32.totalorder %s34, 1
      %p330 = scmp.ne.s32.totalorder %s325, %s327
      %p331 = scmp.eq.s32.totalorder %s34, 0
      %p332 = por %p330, %p331
      %p333 = scmp.ne.s32.totalorder %s325, %s327
      %p334 = scmp.eq.s32.totalorder %s39, 1
      %p335 = por %p333, %p334
      %p336 = scmp.ne.s32.totalorder %s327, %s328
      %p337 = scmp.eq.s32.totalorder %s39, 0
      %p338 = por %p336, %p337
      %p339 = scmp.ne.s32.totalorder %s327, %s328
      %p340 = scmp.eq.s32.totalorder %s40, 1
      %p341 = por %p339, %p340
      %p343 = scmp.ne.s32.totalorder %s328, %s342
      %p344 = scmp.eq.s32.totalorder %s40, 0
      %p345 = por %p343, %p344
      %s347 = sadd.s32 %s346, 1
      %p350 = scmp.eq.s32.totalorder %s34, 1
      %p351 = scmp.ne.s32.totalorder %s346, %s348
      %p352 = scmp.eq.s32.totalorder %s34, 0
      %p353 = por %p351, %p352
      %p354 = scmp.ne.s32.totalorder %s346, %s348
      %p355 = scmp.eq.s32.totalorder %s39, 1
      %p356 = por %p354, %p355
      %p357 = scmp.ne.s32.totalorder %s348, %s349
      %p358 = scmp.eq.s32.totalorder %s39, 0
      %p359 = por %p357, %p358
      %p360 = scmp.ne.s32.totalorder %s348, %s349
      %p361 = scmp.eq.s32.totalorder %s40, 1
      %p362 = por %p360, %p361
      %p364 = scmp.ne.s32.totalorder %s349, %s363
      %p365 = scmp.eq.s32.totalorder %s40, 0
      %p366 = por %p364, %p365
      %s368 = sadd.s32 %s367, 1
      %p371 = scmp.eq.s32.totalorder %s34, 1
      %p372 = scmp.ne.s32.totalorder %s367, %s369
      %p373 = scmp.eq.s32.totalorder %s34, 0
      %p374 = por %p372, %p373
      %p375 = scmp.ne.s32.totalorder %s367, %s369
      %p376 = scmp.eq.s32.totalorder %s39, 1
      %p377 = por %p375, %p376
      %p378 = scmp.ne.s32.totalorder %s369, %s370
      %p379 = scmp.eq.s32.totalorder %s39, 0
      %p380 = por %p378, %p379
      %p381 = scmp.ne.s32.totalorder %s369, %s370
      %p382 = scmp.eq.s32.totalorder %s40, 1
      %p383 = por %p381, %p382
      %p385 = scmp.ne.s32.totalorder %s370, %s384
      %p386 = scmp.eq.s32.totalorder %s40, 0
      %p387 = por %p385, %p386
      %s389 = sadd.s32 %s388, 1
      %p392 = scmp.eq.s32.totalorder %s34, 1
      %p393 = scmp.ne.s32.totalorder %s388, %s390
      %p394 = scmp.eq.s32.totalorder %s34, 0
      %p395 = por %p393, %p394
      %p396 = scmp.ne.s32.totalorder %s388, %s390
      %p397 = scmp.eq.s32.totalorder %s39, 1
      %p398 = por %p396, %p397
      %p399 = scmp.ne.s32.totalorder %s390, %s391
      %p400 = scmp.eq.s32.totalorder %s39, 0
      %p401 = por %p399, %p400
      %p402 = scmp.ne.s32.totalorder %s390, %s391
      %p403 = scmp.eq.s32.totalorder %s40, 1
      %p404 = por %p402, %p403
      %p406 = scmp.ne.s32.totalorder %s391, %s405
      %p407 = scmp.eq.s32.totalorder %s40, 0
      %p408 = por %p406, %p407
      %s410 = sadd.s32 %s409, 1
      %p413 = scmp.eq.s32.totalorder %s34, 1
      %p414 = scmp.ne.s32.totalorder %s409, %s411
      %p415 = scmp.eq.s32.totalorder %s34, 0
      %p416 = por %p414, %p415
      %p417 = scmp.ne.s32.totalorder %s409, %s411
      %p418 = scmp.eq.s32.totalorder %s39, 1
      %p419 = por %p417, %p418
      %p420 = scmp.ne.s32.totalorder %s411, %s412
      %p421 = scmp.eq.s32.totalorder %s39, 0
      %p422 = por %p420, %p421
      %p423 = scmp.ne.s32.totalorder %s411, %s412
      %p424 = scmp.eq.s32.totalorder %s40, 1
      %p425 = por %p423, %p424
      %p427 = scmp.ne.s32.totalorder %s412, %s426
      %p428 = scmp.eq.s32.totalorder %s40, 0
      %p429 = por %p427, %p428
      %s431 = sadd.s32 %s430, 1
      %p434 = scmp.eq.s32.totalorder %s34, 1
      %p435 = scmp.ne.s32.totalorder %s430, %s432
      %p436 = scmp.eq.s32.totalorder %s34, 0
      %p437 = por %p435, %p436
      %p438 = scmp.ne.s32.totalorder %s430, %s432
      %p439 = scmp.eq.s32.totalorder %s39, 1
      %p440 = por %p438, %p439
      %p441 = scmp.ne.s32.totalorder %s432, %s433
      %p442 = scmp.eq.s32.totalorder %s39, 0
      %p443 = por %p441, %p442
      %p444 = scmp.ne.s32.totalorder %s432, %s433
      %p445 = scmp.eq.s32.totalorder %s40, 1
      %p446 = por %p444, %p445
      %p448 = scmp.ne.s32.totalorder %s433, %s447
      %p449 = scmp.eq.s32.totalorder %s40, 0
      %p450 = por %p448, %p449
      %s452 = sadd.s32 %s451, 1
      %p455 = scmp.eq.s32.totalorder %s34, 1
      %p456 = scmp.ne.s32.totalorder %s451, %s453
      %p457 = scmp.eq.s32.totalorder %s34, 0
      %p458 = por %p456, %p457
      %p459 = scmp.ne.s32.totalorder %s451, %s453
      %p460 = scmp.eq.s32.totalorder %s39, 1
      %p461 = por %p459, %p460
      %p462 = scmp.ne.s32.totalorder %s453, %s454
      %p463 = scmp.eq.s32.totalorder %s39, 0
      %p464 = por %p462, %p463
      %p465 = scmp.ne.s32.totalorder %s453, %s454
      %p466 = scmp.eq.s32.totalorder %s40, 1
      %p467 = por %p465, %p466
      %p469 = scmp.ne.s32.totalorder %s454, %s468
      %p470 = scmp.eq.s32.totalorder %s40, 0
      %p471 = por %p469, %p470
      %s473 = sadd.s32 %s472, 1
      %p476 = scmp.eq.s32.totalorder %s34, 1
      %p477 = scmp.ne.s32.totalorder %s472, %s474
      %p478 = scmp.eq.s32.totalorder %s34, 0
      %p479 = por %p477, %p478
      %p480 = scmp.ne.s32.totalorder %s472, %s474
      %p481 = scmp.eq.s32.totalorder %s39, 1
      %p482 = por %p480, %p481
      %p483 = scmp.ne.s32.totalorder %s474, %s475
      %p484 = scmp.eq.s32.totalorder %s39, 0
      %p485 = por %p483, %p484
      %p486 = scmp.ne.s32.totalorder %s474, %s475
      %p487 = scmp.eq.s32.totalorder %s40, 1
      %p488 = por %p486, %p487
      %p490 = scmp.ne.s32.totalorder %s475, %s489
      %p491 = scmp.eq.s32.totalorder %s40, 0
      %p492 = por %p490, %p491
      %s494 = sadd.s32 %s493, 1
      %p497 = scmp.eq.s32.totalorder %s34, 1
      %p498 = scmp.ne.s32.totalorder %s493, %s495
      %p499 = scmp.eq.s32.totalorder %s34, 0
      %p500 = por %p498, %p499
      %p501 = scmp.ne.s32.totalorder %s493, %s495
      %p502 = scmp.eq.s32.totalorder %s39, 1
      %p503 = por %p501, %p502
      %p504 = scmp.ne.s32.totalorder %s495, %s496
      %p505 = scmp.eq.s32.totalorder %s39, 0
      %p506 = por %p504, %p505
      %p507 = scmp.ne.s32.totalorder %s495, %s496
      %p508 = scmp.eq.s32.totalorder %s40, 1
      %p509 = por %p507, %p508
      %p511 = scmp.ne.s32.totalorder %s496, %s510
      %p512 = scmp.eq.s32.totalorder %s40, 0
      %p513 = por %p511, %p512
      %s514 = ssub.s32 %s34, %s41
      %p515 = scmp.eq.s32.totalorder %s514, 0
      %s517 = sadd.s32 %s516, 1
      %s518 = scalar_select %p515, %s516, %s517
      %p521 = pneg %p515
      %p522 = scmp.eq.s32.totalorder %s34, 1
      %p523 = por %p521, %p522
      %p524 = scmp.ne.s32.totalorder %s516, %s519
      %p525 = scmp.eq.s32.totalorder %s34, 0
      %p526 = por %p524, %p525
      %p527 = scmp.ne.s32.totalorder %s516, %s519
      %p528 = scmp.eq.s32.totalorder %s39, 1
      %p529 = por %p527, %p528
      %p530 = scmp.ne.s32.totalorder %s519, %s520
      %p531 = scmp.eq.s32.totalorder %s39, 0
      %p532 = por %p530, %p531
      %p533 = scmp.ne.s32.totalorder %s519, %s520
      %p534 = scmp.eq.s32.totalorder %s40, 1
      %p535 = por %p533, %p534
      %p537 = scmp.ne.s32.totalorder %s520, %s536
      %p538 = scmp.eq.s32.totalorder %s40, 0
      %p539 = por %p537, %p538
      %p540 = scmp.le.s32.totalorder 1, %s34
      %p541 = scmp.lt.s32.totalorder %s34, 3
      %p542 = pnand %p540, %p541
      %p543 = pneg %p542
      // Predicated region
      $region9: #{tpu_custom_call.1} parent=5 // pred_check
        _
      $region10: #{tpu_custom_call.1} parent=5 // pred_check_branch
        %545 = sbr.rel (%p542) target = $region12
      $region11: #{tpu_custom_call.1} parent=5 // pred_region
        %s546 = ssub.s32 %s34, 1
        // Predicated region
        $region13: #{tpu_custom_call.1} parent=11 // pred_check
          %p547 = pneg %p107
        $region14: #{tpu_custom_call.1} parent=11 // pred_check_branch
          %549 = sbr.rel (%p547) target = $region16
        $region15: #{tpu_custom_call.1} parent=11 // pred_region
          _
        $region16: #{tpu_custom_call.1} parent=11 // pred_fallthru
          _
        // Predicated region
        $region17: #{tpu_custom_call.1} parent=11 // pred_check
          %p550 = pneg %p128
        $region18: #{tpu_custom_call.1} parent=11 // pred_check_branch
          %552 = sbr.rel (%p550) target = $region20
        $region19: #{tpu_custom_call.1} parent=11 // pred_region
          _
        $region20: #{tpu_custom_call.1} parent=11 // pred_fallthru
          _
        // Predicated region
        $region21: #{tpu_custom_call.1} parent=11 // pred_check
          %p553 = pneg %p149
        $region22: #{tpu_custom_call.1} parent=11 // pred_check_branch
          %555 = sbr.rel (%p553) target = $region24
        $region23: #{tpu_custom_call.1} parent=11 // pred_region
          %s557 = ssub.s32 16, 16
          %558 = vsyncadd [#allocation3], %s557
          %s560 = sshll.u32 [#allocation2], 4
          %s561 = int_to_ptr.vmem [resolvable:$true] %s560
          %563 = dma.hbm_to_vmem [thread:$0]  %s4, 16, %s561, [#allocation3]
        $region24: #{tpu_custom_call.1} parent=11 // pred_fallthru
          _
        // Predicated region
        $region25: #{tpu_custom_call.1} parent=11 // pred_check
          %p564 = pneg %p170
        $region26: #{tpu_custom_call.1} parent=11 // pred_check_branch
          %566 = sbr.rel (%p564) target = $region28
        $region27: #{tpu_custom_call.1} parent=11 // pred_region
          %s568 = ssub.s32 16, 16
          %569 = vsyncadd [#allocation6], %s568
          %s571 = sshll.u32 [#allocation5], 4
          %s572 = int_to_ptr.vmem [resolvable:$true] %s571
          %574 = dma.hbm_to_vmem [thread:$0]  %s5, 16, %s572, [#allocation6]
        $region28: #{tpu_custom_call.1} parent=11 // pred_fallthru
          _
        // Predicated region
        $region29: #{tpu_custom_call.1} parent=11 // pred_check
          %p575 = pneg %p191
        $region30: #{tpu_custom_call.1} parent=11 // pred_check_branch
          %577 = sbr.rel (%p575) target = $region32
        $region31: #{tpu_custom_call.1} parent=11 // pred_region
          %s579 = ssub.s32 16, 16
          %580 = vsyncadd [#allocation6], %s579
          %s582 = sshll.u32 [#allocation7], 4
          %s583 = int_to_ptr.vmem [resolvable:$true] %s582
          %585 = dma.hbm_to_vmem [thread:$0]  %s6, 16, %s583, [#allocation6]
        $region32: #{tpu_custom_call.1} parent=11 // pred_fallthru
          _
        // Predicated region
        $region33: #{tpu_custom_call.1} parent=11 // pred_check
          %p586 = pneg %p212
        $region34: #{tpu_custom_call.1} parent=11 // pred_check_branch
          %588 = sbr.rel (%p586) target = $region36
        $region35: #{tpu_custom_call.1} parent=11 // pred_region
          %s590 = ssub.s32 16, 16
          %591 = vsyncadd [#allocation9], %s590
          %s593 = sshll.u32 [#allocation8], 4
          %s594 = int_to_ptr.vmem [resolvable:$true] %s593
          %596 = dma.hbm_to_vmem [thread:$0]  %s7, 16, %s594, [#allocation9]
        $region36: #{tpu_custom_call.1} parent=11 // pred_fallthru
          _
        // Predicated region
        $region37: #{tpu_custom_call.1} parent=11 // pred_check
          %p597 = pneg %p233
        $region38: #{tpu_custom_call.1} parent=11 // pred_check_branch
          %599 = sbr.rel (%p597) target = $region40
        $region39: #{tpu_custom_call.1} parent=11 // pred_region
          _
        $region40: #{tpu_custom_call.1} parent=11 // pred_fallthru
          _
        // Predicated region
        $region41: #{tpu_custom_call.1} parent=11 // pred_check
          %p600 = pneg %p254
        $region42: #{tpu_custom_call.1} parent=11 // pred_check_branch
          %602 = sbr.rel (%p600) target = $region44
        $region43: #{tpu_custom_call.1} parent=11 // pred_region
          _
        $region44: #{tpu_custom_call.1} parent=11 // pred_fallthru
          _
        // Predicated region
        $region45: #{tpu_custom_call.1} parent=11 // pred_check
          %p603 = pneg %p275
        $region46: #{tpu_custom_call.1} parent=11 // pred_check_branch
          %605 = sbr.rel (%p603) target = $region48
        $region47: #{tpu_custom_call.1} parent=11 // pred_region
          _
        $region48: #{tpu_custom_call.1} parent=11 // pred_fallthru
          _
        // Predicated region
        $region49: #{tpu_custom_call.1} parent=11 // pred_check
          %p606 = pneg %p296
        $region50: #{tpu_custom_call.1} parent=11 // pred_check_branch
          %608 = sbr.rel (%p606) target = $region52
        $region51: #{tpu_custom_call.1} parent=11 // pred_region
          _
        $region52: #{tpu_custom_call.1} parent=11 // pred_fallthru
          _
        // Predicated region
        $region53: #{tpu_custom_call.1} parent=11 // pred_check
          %p609 = pneg %p317
        $region54: #{tpu_custom_call.1} parent=11 // pred_check_branch
          %611 = sbr.rel (%p609) target = $region56
        $region55: #{tpu_custom_call.1} parent=11 // pred_region
          _
        $region56: #{tpu_custom_call.1} parent=11 // pred_fallthru
          _
        // Predicated region
        $region57: #{tpu_custom_call.1} parent=11 // pred_check
          %p612 = pneg %p338
        $region58: #{tpu_custom_call.1} parent=11 // pred_check_branch
          %614 = sbr.rel (%p612) target = $region60
        $region59: #{tpu_custom_call.1} parent=11 // pred_region
          _
        $region60: #{tpu_custom_call.1} parent=11 // pred_fallthru
          _
        // Predicated region
        $region61: #{tpu_custom_call.1} parent=11 // pred_check
          %p615 = pneg %p359
        $region62: #{tpu_custom_call.1} parent=11 // pred_check_branch
          %617 = sbr.rel (%p615) target = $region64
        $region63: #{tpu_custom_call.1} parent=11 // pred_region
          _
        $region64: #{tpu_custom_call.1} parent=11 // pred_fallthru
          _
        // Predicated region
        $region65: #{tpu_custom_call.1} parent=11 // pred_check
          %p618 = pneg %p380
        $region66: #{tpu_custom_call.1} parent=11 // pred_check_branch
          %620 = sbr.rel (%p618) target = $region68
        $region67: #{tpu_custom_call.1} parent=11 // pred_region
          _
        $region68: #{tpu_custom_call.1} parent=11 // pred_fallthru
          _
        // Predicated region
        $region69: #{tpu_custom_call.1} parent=11 // pred_check
          %p621 = pneg %p401
        $region70: #{tpu_custom_call.1} parent=11 // pred_check_branch
          %623 = sbr.rel (%p621) target = $region72
        $region71: #{tpu_custom_call.1} parent=11 // pred_region
          _
        $region72: #{tpu_custom_call.1} parent=11 // pred_fallthru
          _
        // Predicated region
        $region73: #{tpu_custom_call.1} parent=11 // pred_check
          %p624 = pneg %p422
        $region74: #{tpu_custom_call.1} parent=11 // pred_check_branch
          %626 = sbr.rel (%p624) target = $region76
        $region75: #{tpu_custom_call.1} parent=11 // pred_region
          _
        $region76: #{tpu_custom_call.1} parent=11 // pred_fallthru
          _
        // Predicated region
        $region77: #{tpu_custom_call.1} parent=11 // pred_check
          %p627 = pneg %p443
        $region78: #{tpu_custom_call.1} parent=11 // pred_check_branch
          %629 = sbr.rel (%p627) target = $region80
        $region79: #{tpu_custom_call.1} parent=11 // pred_region
          _
        $region80: #{tpu_custom_call.1} parent=11 // pred_fallthru
          _
        // Predicated region
        $region81: #{tpu_custom_call.1} parent=11 // pred_check
          %p630 = pneg %p464
        $region82: #{tpu_custom_call.1} parent=11 // pred_check_branch
          %632 = sbr.rel (%p630) target = $region84
        $region83: #{tpu_custom_call.1} parent=11 // pred_region
          _
        $region84: #{tpu_custom_call.1} parent=11 // pred_fallthru
          _
        // Predicated region
        $region85: #{tpu_custom_call.1} parent=11 // pred_check
          %p633 = pneg %p485
        $region86: #{tpu_custom_call.1} parent=11 // pred_check_branch
          %635 = sbr.rel (%p633) target = $region88
        $region87: #{tpu_custom_call.1} parent=11 // pred_region
          _
        $region88: #{tpu_custom_call.1} parent=11 // pred_fallthru
          _
        // Predicated region
        $region89: #{tpu_custom_call.1} parent=11 // pred_check
          %p636 = pneg %p506
        $region90: #{tpu_custom_call.1} parent=11 // pred_check_branch
          %638 = sbr.rel (%p636) target = $region92
        $region91: #{tpu_custom_call.1} parent=11 // pred_region
          _
        $region92: #{tpu_custom_call.1} parent=11 // pred_fallthru
          _
      $region12: #{tpu_custom_call.1} parent=5 // pred_fallthru
        _
      %p639 = scmp.lt.s32.totalorder %s34, 2
      // Predicated region
      $region93: #{tpu_custom_call.1} parent=5 // pred_check
        %p640 = pneg %p639
      $region94: #{tpu_custom_call.1} parent=5 // pred_check_branch
        %642 = sbr.rel (%p640) target = $region96
      $region95: #{tpu_custom_call.1} parent=5 // pred_region
        // Predicated region
        $region97: #{tpu_custom_call.1} parent=95 // pred_check
          %p643 = pneg %p54
        $region98: #{tpu_custom_call.1} parent=95 // pred_check_branch
          %645 = sbr.rel (%p643) target = $region100
        $region99: #{tpu_custom_call.1} parent=95 // pred_region
          %p646 = scmp.lt.s32.totalorder %s34, 1
          %s647 = scalar_select %p646, %s34, 1
          %s648 = smul.addr %s647, 8
          %s649 = scalar_lea.vmem %s0, %s648
        $region100: #{tpu_custom_call.1} parent=95 // pred_fallthru
          _
        // Predicated region
        $region101: #{tpu_custom_call.1} parent=95 // pred_check
          %p650 = pneg %p80
        $region102: #{tpu_custom_call.1} parent=95 // pred_check_branch
          %652 = sbr.rel (%p650) target = $region104
        $region103: #{tpu_custom_call.1} parent=95 // pred_region
          %p653 = scmp.lt.s32.totalorder %s34, 1
          %s654 = scalar_select %p653, %s34, 1
          %s655 = smul.addr %s654, 8
          %s656 = scalar_lea.vmem %s1, %s655
        $region104: #{tpu_custom_call.1} parent=95 // pred_fallthru
          _
      $region96: #{tpu_custom_call.1} parent=5 // pred_fallthru
        _
      %p657 = scmp.le.s32.totalorder 1, %s34
      %p658 = scmp.lt.s32.totalorder %s34, 3
      %p659 = pnand %p657, %p658
      %p660 = pneg %p659
      // Predicated region
      $region105: #{tpu_custom_call.1} parent=5 // pred_check
        _
      $region106: #{tpu_custom_call.1} parent=5 // pred_check_branch
        %662 = sbr.rel (%p659) target = $region108
      $region107: #{tpu_custom_call.1} parent=5 // pred_region
        %s663 = ssub.s32 %s34, 1
        // Predicated region
        $region109: #{tpu_custom_call.1} parent=107 // pred_check
          %p664 = pneg %p149
        $region110: #{tpu_custom_call.1} parent=107 // pred_check_branch
          %666 = sbr.rel (%p664) target = $region112
        $region111: #{tpu_custom_call.1} parent=107 // pred_region
          %667 = dma.done [#allocation3], 16
        $region112: #{tpu_custom_call.1} parent=107 // pred_fallthru
          _
        // Predicated region
        $region113: #{tpu_custom_call.1} parent=107 // pred_check
          %p668 = pneg %p170
        $region114: #{tpu_custom_call.1} parent=107 // pred_check_branch
          %670 = sbr.rel (%p668) target = $region116
        $region115: #{tpu_custom_call.1} parent=107 // pred_region
          %671 = dma.done [#allocation6], 16
        $region116: #{tpu_custom_call.1} parent=107 // pred_fallthru
          _
        // Predicated region
        $region117: #{tpu_custom_call.1} parent=107 // pred_check
          %p672 = pneg %p191
        $region118: #{tpu_custom_call.1} parent=107 // pred_check_branch
          %674 = sbr.rel (%p672) target = $region120
        $region119: #{tpu_custom_call.1} parent=107 // pred_region
          %675 = dma.done [#allocation6], 16
        $region120: #{tpu_custom_call.1} parent=107 // pred_fallthru
          _
        // Predicated region
        $region121: #{tpu_custom_call.1} parent=107 // pred_check
          %p676 = pneg %p212
        $region122: #{tpu_custom_call.1} parent=107 // pred_check_branch
          %678 = sbr.rel (%p676) target = $region124
        $region123: #{tpu_custom_call.1} parent=107 // pred_region
          %679 = dma.done [#allocation9], 16
        $region124: #{tpu_custom_call.1} parent=107 // pred_fallthru
          _
        %p680 = scmp.lt.s32.totalorder %s39, 1
        %s681 = scalar_select %p680, %s39, 1
        %s682 = smul.addr %s681, 8
        %s683 = scalar_lea.vmem %s0, %s682
        %p684 = pneg %p60
        %p685 = pneg %p57
        %p686 = scmp.lt.s32.totalorder %s39, 1
        %s687 = scalar_select %p686, %s39, 1
        %s688 = smul.addr %s687, 8
        %s689 = scalar_lea.vmem %s1, %s688
        %p690 = pneg %p86
        %p691 = pneg %p83
        %p692 = pneg %p107
        %p693 = pneg %p104
        %p694 = pneg %p128
        %p695 = pneg %p125
        %p696 = pneg %p149
        %p697 = pneg %p146
        %p698 = pneg %p170
        %p699 = pneg %p167
        %p700 = pneg %p191
        %p701 = pneg %p188
        %p702 = pneg %p212
        %p703 = pneg %p209
        %p704 = pneg %p233
        %p705 = pneg %p230
        %p706 = pneg %p254
        %p707 = pneg %p251
        %p708 = pneg %p275
        %p709 = pneg %p272
        %p710 = pneg %p296
        %p711 = pneg %p293
        %p712 = pneg %p317
        %p713 = pneg %p314
        %p714 = pneg %p338
        %p715 = pneg %p335
        %p716 = pneg %p359
        %p717 = pneg %p356
        %p718 = pneg %p380
        %p719 = pneg %p377
        %p720 = pneg %p401
        %p721 = pneg %p398
        %p722 = pneg %p422
        %p723 = pneg %p419
        %p724 = pneg %p443
        %p725 = pneg %p440
        %p726 = pneg %p464
        %p727 = pneg %p461
        %p728 = pneg %p485
        %p729 = pneg %p482
        %p730 = pneg %p506
        %p731 = pneg %p503
        %p732 = pneg %p532
        %p733 = pneg %p529
        %s734 = sand.u32 %s519, 1
        %s735 = scalar_lea.sflag [#allocation4], %s734
        %s736 = sand.u32 %s519, 1
        %s737 = smul.addr %s736, 8
        %s738 = scalar_lea.vmem [#allocation10], %s737
        %p739 = scmp.lt.s32.totalorder %s39, 1
        %s740 = scalar_select %p739, %s39, 1
        %s741 = smul.addr %s740, 8
        %s742 = scalar_lea.vmem %s0, %s741
        %p743 = scmp.lt.s32.totalorder %s39, 1
        %s744 = scalar_select %p743, %s39, 1
        %s745 = smul.addr %s744, 8
        %s746 = scalar_lea.vmem %s1, %s745
        %v748 = vld [vmem:[%s742] sm:$0xff]
        %v749 = vpack.c.bf16 %v748, %v748
        %v750 = vld [vmem:[%s746] sm:$0xff]
        %v751 = vld [vmem:[%s2] sm:$0x3]
        %v752 = vld [vmem:[%s3] sm:$0x1]
        %v754 = vlaneseq
        %v755 = vshrl.u32 %v754, 7
        %v756 = vsub.s32 0, %v755
        %v757 = vrot.slane %v752, %v756
        %vm759 = vcmask 31744
        %v761 = vsel %vm759, %v749, 0
        %vm763 = vcmask 1041408
        %v765 = vsel %vm763, %v751, 0
        %767 = vmatprep.subr.bf16.mxu0 0
        %768 = vmatpush1.bf16.msra.mxu0 0
        %769 = vmatprep.subr.bf16.mxu0 0
        %770 = vmatpush1.bf16.msra.mxu0 0
        %771 = vmatprep.subr.bf16.mxu0 0
        %772 = vmatpush1.bf16.msra.mxu0 0
        %773 = vmatprep.subr.bf16.mxu0 0
        %774 = vmatpush1.bf16.msra.mxu0 0
        %775 = vmatprep.subr.bf16.mxu0 0
        %776 = vmatpush1.bf16.msra.mxu0 0
        %777 = vmatprep.subr.bf16.mxu0 0
        %778 = vmatpush1.bf16.msra.mxu0 0
        %779 = vmatprep.subr.bf16.mxu0 0
        %780 = vmatpush1.bf16.msra.mxu0 0
        %781 = vmatprep.subr.bf16.mxu0 0
        %782 = vmatpush1.bf16.msra.mxu0 %v765
        %783 = vmatprep.subr.bf16.mxu0 0
        %784 = vmatpush2.bf16.msra.mxu0 0
        %785 = vmatprep.subr.bf16.mxu0 0
        %786 = vmatpush2.bf16.msra.mxu0 0
        %787 = vmatprep.subr.bf16.mxu0 0
        %788 = vmatpush2.bf16.msra.mxu0 0
        %789 = vmatprep.subr.bf16.mxu0 0
        %790 = vmatpush2.bf16.msra.mxu0 0
        %791 = vmatprep.subr.bf16.mxu0 0
        %792 = vmatpush2.bf16.msra.mxu0 0
        %793 = vmatprep.subr.bf16.mxu0 0
        %794 = vmatpush2.bf16.msra.mxu0 0
        %795 = vmatprep.subr.bf16.mxu0 0
        %796 = vmatpush2.bf16.msra.mxu0 0
        %797 = vmatprep.subr.bf16.mxu0 0
        %798 = vmatpush2.bf16.msra.mxu0 0
        %799 = vmatprep.mubr.bf16.mxu0 0
        %800 = vmatmul.mubr.bf16.gmra.mxu0 %v761
        %v801 = vpop.f32.mrf.mxu0
        %v802 = vadd.f32 %v757, %v801
        %v803 = vpop.f32.mrf.mxu0
        %v804 = vpop.f32.mrf.mxu0
        %v805 = vpop.f32.mrf.mxu0
        %806 = vdwg.mxu0
        %v807 = vld [vmem:[#allocation2] sm:$0x1]
        %809 = vset.pattern.permute.xlu0 0
        %810 = vperm.xlu0 %809, %v750
        %v811 = vpop.permute.xlu0 %810
        %v814 = vlaneseq
        %v815 = vshrl.u32 %v814, 7
        %v816 = vsub.s32 0, %v815
        %v817 = vrot.slane %v807, %v816
        %v819 = vmul.f32 %v811, %v817
        %v820 = vld [vmem:[#allocation5] sm:$0x1]
        %v822 = vlaneseq
        %v823 = vshrl.u32 %v822, 7
        %v824 = vsub.s32 0, %v823
        %v825 = vrot.slane %v820, %v824
        %v827 = vadd.f32 %v819, %v825
        %v828 = vmax.f32 %v827, 0.0
        %v829 = vld [vmem:[#allocation7] sm:$0x1]
        %v831 = vlaneseq
        %v832 = vshrl.u32 %v831, 7
        %v833 = vsub.s32 0, %v832
        %v834 = vrot.slane %v829, %v833
        %v836 = vmul.f32 %v811, %v834
        %v837 = vld [vmem:[#allocation8] sm:$0x1]
        %v839 = vlaneseq
        %v840 = vshrl.u32 %v839, 7
        %v841 = vsub.s32 0, %v840
        %v842 = vrot.slane %v837, %v841
        %v844 = vadd.f32 %v836, %v842
        %v845 = vand.u32 2147483647, %v844
        %vm846 = vcmp.le.f32.partialorder %v845, 0.7853982
        %vm847 = vcmp.lt.s32.totalorder %v844, 0
        %v848 = vand.u32 %v844, 2139095040
        %v849 = vshrl.u32 %v848, 23
        %v850 = vsub.s32 %v849, 127
        %v851 = vand.u32 2147483647, %v844
        %v852 = vand.u32 %v851, 8388607
        %v853 = vor.u32 %v852, 8388608
        %v854 = vsub.s32 0, %v853
        %v855 = vadd.s32 %v850, 1
        %vm856 = vcmp.gt.s32.totalorder %v855, 0
        %v857 = vsel %vm856, %v855, 0
        %v858 = vshrl.u32 %v857, 5
        %v859 = vand.u32 %v857, 31
        %v860 = vsub.s32 32, %v859
        %v861 = vshrl.u32 683565275, %v860
        %v862 = vshll.u32 683565275, %v859
        %v863 = vshrl.u32 2475754826, %v860
        %v864 = vor.u32 %v862, %v863
        %v865 = vshll.u32 2475754826, %v859
        %v866 = vshrl.u32 2131351028, %v860
        %v867 = vor.u32 %v865, %v866
        %v868 = vshll.u32 2131351028, %v859
        %v869 = vshrl.u32 2102212464, %v860
        %v870 = vor.u32 %v868, %v869
        %v871 = vshll.u32 2102212464, %v859
        %v872 = vshrl.u32 920167782, %v860
        %v873 = vor.u32 %v871, %v872
        %v874 = vshll.u32 920167782, %v859
        %v875 = vshrl.u32 1326507024, %v860
        %v876 = vor.u32 %v874, %v875
        %vm877 = vcmp.lt.s32.totalorder %v858, 1
        %vm878 = vcmp.lt.s32.totalorder %v858, 2
        %vm879 = vcmp.lt.s32.totalorder %v858, 3
        %vm880 = vcmp.lt.s32.totalorder %v858, 4
        %v881 = vsel %vm877, %v861, %v864
        %v882 = vsel %vm880, %v870, 2102212464
        %v883 = vsel %vm879, %v867, %v882
        %v884 = vsel %vm878, %v881, %v883
        %v885 = vsel %vm877, %v864, %v867
        %v886 = vsel %vm880, %v873, 920167782
        %v887 = vsel %vm879, %v870, %v886
        %v888 = vsel %vm878, %v885, %v887
        %v889 = vsel %vm877, %v867, %v870
        %v890 = vsel %vm880, %v876, 1326507024
        %v891 = vsel %vm879, %v873, %v890
        %v892 = vsel %vm878, %v889, %v891
        %v893 = vshll.u32 %v853, 8
        %v894 = vmul.u32.u64.compose %v893, %v892
        %v895 = vextract.low.u32 %v894
        %v896 = vextract.high.u32 %v894
        %v897 = vmul.u32.u64.compose %v893, %v888
        %v898 = vextract.low.u32 %v897
        %v899 = vextract.high.u32 %v897
        %v900 = vmul.u32 %v893, %v884
        %v901 = vadd.s32 %v896, %v898
        %vm902 = vc.u32 %v896, %v898
        %v903 = vadd.s32 %v899, 1
        %v904 = vsel %vm902, %v903, %v899
        %v905 = vadd.s32 %v900, %v904
        %v906 = vadd.s32 %v905, 536870912
        %v907 = vshrl.u32 %v906, 30
        %v908 = vshll.u32 %v907, 30
        %v909 = vsub.s32 %v905, %v908
        %vm910 = vcmp.lt.s32.totalorder %v909, 0
        %v911 = vsub.s32 0, %v909
        %v912 = vsel %vm910, %v911, %v909
        %v913 = vclz %v912
        %v914 = vsub.s32 %v913, 2
        %vm915 = vcmp.gt.s32.totalorder 0, %v914
        %v916 = vsel %vm915, 0, %v914
        %v917 = vsub.s32 32, %v916
        %v918 = vshll.u32 %v909, %v916
        %v919 = vshrl.u32 %v901, %v917
        %v920 = vor.u32 %v918, %v919
        %v921 = vsub.s32 4294967266, %v916
        %v922 = vadd.s32 %v921, 127
        %v923 = vshll.u32 %v922, 23
        %v924 = vor.u32 4788187, %v923
        %v925 = vand.u32 2147483647, %v924
        %v927 = vcvt.s32.f32 %v920
        %v928 = vmul.f32 %v927, %v925
        %v929 = vxor.u32 %v928, 2147483648
        %v930 = vsel %vm847, %v929, %v928
        %v931 = vsub.s32 4, %v907
        %v932 = vsel %vm847, %v931, %v907
        %v933 = vsel %vm846, %v844, %v930
        %v934 = vsel %vm846, 0, %v932
        %v935 = vcosq.f32.pop %v933
        %v936 = vsinq.f32.pop %v933
        %vm937 = vweird.f32 %v844
        %v938 = vadd.s32 %v934, 3
        %v939 = vand.u32 %v938, 3
        %vm940 = vcmp.lt.s32.totalorder %v939, 2
        %vm941 = vcmp.eq.s32.totalorder %v939, 0
        %v942 = vxor.u32 %v936, 2147483648
        %v943 = vsel %vm941, %v935, %v942
        %vm944 = vcmp.eq.s32.totalorder %v939, 2
        %v945 = vxor.u32 %v935, 2147483648
        %v946 = vsel %vm944, %v945, %v936
        %v947 = vsel %vm940, %v943, %v946
        %v948 = vsel %vm937, nan, %v947
        %v949 = vadd.f32 %v802, %v828
        %v950 = vadd.f32 %v949, %v948
        %v951 = vpack.c.bf16 %v950, %v950
        %v952 = vld [vmem:[%s8] sm:$0xf]
        %v953 = vld [vmem:[%s8 + $0x4] sm:$0xf]
        %v954 = vld [vmem:[%s8 + $0x8] sm:$0xf]
        %v955 = vld [vmem:[%s8 + $0xc] sm:$0xf]
        %v956 = vld [vmem:[%s9] sm:$0x1]
        %v957 = vlaneseq
        %v958 = vshrl.u32 %v957, 7
        %v959 = vsub.s32 0, %v958
        %v960 = vrot.slane %v956, %v959
        %v965 = vunpack.c.l.b16 %v952
        %v966 = vunpack.c.l.b16 %v953
        %v967 = vunpack.c.l.b16 %v954
        %v968 = vunpack.c.l.b16 %v955
        %v969 = vpack.c.b16 %v966, %v965
        %v970 = vpack.c.b16 %v968, %v967
        %vm973 = vcmask 261120
        %v975 = vsel %vm973, %v951, 0
        %977 = vmatprep.subr.bf16.mxu0 0
        %978 = vmatpush1.bf16.msra.mxu0 0
        %979 = vmatprep.subr.bf16.mxu0 0
        %980 = vmatpush1.bf16.msra.mxu0 0
        %981 = vmatprep.subr.bf16.mxu0 0
        %982 = vmatpush1.bf16.msra.mxu0 0
        %983 = vmatprep.subr.bf16.mxu0 0
        %984 = vmatpush1.bf16.msra.mxu0 0
        %985 = vmatprep.subr.bf16.mxu0 0
        %986 = vmatpush1.bf16.msra.mxu0 0
        %987 = vmatprep.subr.bf16.mxu0 0
        %988 = vmatpush1.bf16.msra.mxu0 0
        %989 = vmatprep.subr.bf16.mxu0 0
        %990 = vmatpush1.bf16.msra.mxu0 %v970
        %991 = vmatprep.subr.bf16.mxu0 0
        %992 = vmatpush1.bf16.msra.mxu0 %v969
        %993 = vmatprep.subr.bf16.mxu0 0
        %994 = vmatpush2.bf16.msra.mxu0 0
        %995 = vmatprep.subr.bf16.mxu0 0
        %996 = vmatpush2.bf16.msra.mxu0 0
        %997 = vmatprep.subr.bf16.mxu0 0
        %998 = vmatpush2.bf16.msra.mxu0 0
        %999 = vmatprep.subr.bf16.mxu0 0
        %1000 = vmatpush2.bf16.msra.mxu0 0
        %1001 = vmatprep.subr.bf16.mxu0 0
        %1002 = vmatpush2.bf16.msra.mxu0 0
        %1003 = vmatprep.subr.bf16.mxu0 0
        %1004 = vmatpush2.bf16.msra.mxu0 0
        %1005 = vmatprep.subr.bf16.mxu0 0
        %1006 = vmatpush2.bf16.msra.mxu0 0
        %1007 = vmatprep.subr.bf16.mxu0 0
        %1008 = vmatpush2.bf16.msra.mxu0 0
        %1009 = vmatprep.mubr.bf16.mxu0 0
        %1010 = vmatmul.mubr.bf16.gmra.mxu0 %v975
        %v1011 = vpop.f32.mrf.mxu0
        %v1012 = vadd.f32 %v960, %v1011
        %v1013 = vpop.f32.mrf.mxu0
        %v1014 = vpop.f32.mrf.mxu0
        %v1015 = vpop.f32.mrf.mxu0
        %1016 = vdwg.mxu0
        %v1017 = vpack.c.bf16 %v1012, %v1012
        %1019 = vrot.lane.b32.xlu0 %v1017, 96
        %v1020 = vpop.permute.xlu0 %1019
        %vm1021 = vcmask 64512
        %v1023 = vsel %vm1021, %v1017, 0
        %v1026 = vsel %vm1021, %v1020, 0
        %1028 = vmatprep.subr.bf16.mxu0 0
        %1029 = vmatpush1.bf16.xpose.msra.mxu0 0
        %1030 = vmatprep.subr.bf16.mxu0 0
        %1031 = vmatpush1.bf16.xpose.msra.mxu0 0
        %1032 = vmatprep.subr.bf16.mxu0 0
        %1033 = vmatpush1.bf16.xpose.msra.mxu0 0
        %1034 = vmatprep.subr.bf16.mxu0 0
        %1035 = vmatpush1.bf16.xpose.msra.mxu0 0
        %1036 = vmatprep.subr.bf16.mxu0 0
        %1037 = vmatpush1.bf16.xpose.msra.mxu0 0
        %1038 = vmatprep.subr.bf16.mxu0 0
        %1039 = vmatpush1.bf16.xpose.msra.mxu0 0
        %1040 = vmatprep.subr.bf16.mxu0 0
        %1041 = vmatpush1.bf16.xpose.msra.mxu0 0
        %1042 = vmatprep.subr.bf16.mxu0 0
        %1043 = vmatpush1.bf16.xpose.msra.mxu0 %v1026
        %1044 = vmatprep.subr.bf16.mxu0 0
        %1045 = vmatpush2.bf16.xpose.msra.mxu0 0
        %1046 = vmatprep.subr.bf16.mxu0 0
        %1047 = vmatpush2.bf16.xpose.msra.mxu0 0
        %1048 = vmatprep.subr.bf16.mxu0 0
        %1049 = vmatpush2.bf16.xpose.msra.mxu0 0
        %1050 = vmatprep.subr.bf16.mxu0 0
        %1051 = vmatpush2.bf16.xpose.msra.mxu0 0
        %1052 = vmatprep.subr.bf16.mxu0 0
        %1053 = vmatpush2.bf16.xpose.msra.mxu0 0
        %1054 = vmatprep.subr.bf16.mxu0 0
        %1055 = vmatpush2.bf16.xpose.msra.mxu0 0
        %1056 = vmatprep.subr.bf16.mxu0 0
        %1057 = vmatpush2.bf16.xpose.msra.mxu0 0
        %1058 = vmatprep.subr.bf16.mxu0 0
        %1059 = vmatpush2.bf16.xpose.msra.mxu0 0
        %1060 = vmatprep.mubr.bf16.mxu0 0
        %1061 = vmatmul.mubr.bf16.gmra.mxu0 %v1023
        %v1062 = vpop.f32.mrf.mxu0
        %v1063 = vadd.f32 0.0, %v1062
        %v1064 = vpop.f32.mrf.mxu0
        %v1065 = vpop.f32.mrf.mxu0
        %v1066 = vpop.f32.mrf.mxu0
        %1067 = vdwg.mxu0
        %v1068 = vsel %vm1021, %v1063, -inf
        %1069 = vmax.xlane.f32.xlu0 %v1068
        %v1070 = vpop.xlane.xlu0 %1069
        %v1071 = vsub.f32 %v1063, %v1070
        %v1072 = vmul.f32 %v1071, 1.442695
        %v1073 = vpow.pop %v1072
        %v1074 = vsel %vm1021, %v1073, 0.0
        %1075 = vadd.xlane.f32.xlu0 %v1074
        %v1076 = vpop.xlane.xlu0 %1075
        %v1077 = vrcp.pop %v1076
        %v1078 = vmul.f32 %v1073, %v1077
        %v1079 = vpack.c.bf16 %v1078, %v1078
        %1080 = vrot.lane.b32.xlu0 %v1017, 64
        %v1081 = vpop.permute.xlu0 %1080
        %v1083 = vsel %vm1021, %v1079, 0
        %vm1085 = vcmask 1043456
        %v1087 = vsel %vm1085, %v1081, 0
        %1089 = vmatprep.subr.bf16.mxu0 0
        %1090 = vmatpush1.bf16.msra.mxu0 0
        %1091 = vmatprep.subr.bf16.mxu0 0
        %1092 = vmatpush1.bf16.msra.mxu0 0
        %1093 = vmatprep.subr.bf16.mxu0 0
        %1094 = vmatpush1.bf16.msra.mxu0 0
        %1095 = vmatprep.subr.bf16.mxu0 0
        %1096 = vmatpush1.bf16.msra.mxu0 0
        %1097 = vmatprep.subr.bf16.mxu0 0
        %1098 = vmatpush1.bf16.msra.mxu0 0
        %1099 = vmatprep.subr.bf16.mxu0 0
        %1100 = vmatpush1.bf16.msra.mxu0 0
        %1101 = vmatprep.subr.bf16.mxu0 0
        %1102 = vmatpush1.bf16.msra.mxu0 0
        %1103 = vmatprep.subr.bf16.mxu0 0
        %1104 = vmatpush1.bf16.msra.mxu0 %v1087
        %1105 = vmatprep.subr.bf16.mxu0 0
        %1106 = vmatpush2.bf16.msra.mxu0 0
        %1107 = vmatprep.subr.bf16.mxu0 0
        %1108 = vmatpush2.bf16.msra.mxu0 0
        %1109 = vmatprep.subr.bf16.mxu0 0
        %1110 = vmatpush2.bf16.msra.mxu0 0
        %1111 = vmatprep.subr.bf16.mxu0 0
        %1112 = vmatpush2.bf16.msra.mxu0 0
        %1113 = vmatprep.subr.bf16.mxu0 0
        %1114 = vmatpush2.bf16.msra.mxu0 0
        %1115 = vmatprep.subr.bf16.mxu0 0
        %1116 = vmatpush2.bf16.msra.mxu0 0
        %1117 = vmatprep.subr.bf16.mxu0 0
        %1118 = vmatpush2.bf16.msra.mxu0 0
        %1119 = vmatprep.subr.bf16.mxu0 0
        %1120 = vmatpush2.bf16.msra.mxu0 0
        %1121 = vmatprep.mubr.bf16.mxu0 0
        %1122 = vmatmul.mubr.bf16.gmra.mxu0 %v1083
        %v1123 = vpop.f32.mrf.mxu0
        %v1124 = vadd.f32 0.0, %v1123
        %v1125 = vpop.f32.mrf.mxu0
        %v1126 = vpop.f32.mrf.mxu0
        %v1127 = vpop.f32.mrf.mxu0
        %1128 = vdwg.mxu0
        %1129 = vrot.lane.b32.xlu0 %v1017, 120
        %v1130 = vpop.permute.xlu0 %1129
        %1131 = vrot.lane.b32.xlu0 %v1017, 88
        %v1132 = vpop.permute.xlu0 %1131
        %v1134 = vsel %vm1021, %v1130, 0
        %v1137 = vsel %vm1021, %v1132, 0
        %1139 = vmatprep.subr.bf16.mxu0 0
        %1140 = vmatpush1.bf16.xpose.msra.mxu0 0
        %1141 = vmatprep.subr.bf16.mxu0 0
        %1142 = vmatpush1.bf16.xpose.msra.mxu0 0
        %1143 = vmatprep.subr.bf16.mxu0 0
        %1144 = vmatpush1.bf16.xpose.msra.mxu0 0
        %1145 = vmatprep.subr.bf16.mxu0 0
        %1146 = vmatpush1.bf16.xpose.msra.mxu0 0
        %1147 = vmatprep.subr.bf16.mxu0 0
        %1148 = vmatpush1.bf16.xpose.msra.mxu0 0
        %1149 = vmatprep.subr.bf16.mxu0 0
        %1150 = vmatpush1.bf16.xpose.msra.mxu0 0
        %1151 = vmatprep.subr.bf16.mxu0 0
        %1152 = vmatpush1.bf16.xpose.msra.mxu0 0
        %1153 = vmatprep.subr.bf16.mxu0 0
        %1154 = vmatpush1.bf16.xpose.msra.mxu0 %v1137
        %1155 = vmatprep.subr.bf16.mxu0 0
        %1156 = vmatpush2.bf16.xpose.msra.mxu0 0
        %1157 = vmatprep.subr.bf16.mxu0 0
        %1158 = vmatpush2.bf16.xpose.msra.mxu0 0
        %1159 = vmatprep.subr.bf16.mxu0 0
        %1160 = vmatpush2.bf16.xpose.msra.mxu0 0
        %1161 = vmatprep.subr.bf16.mxu0 0
        %1162 = vmatpush2.bf16.xpose.msra.mxu0 0
        %1163 = vmatprep.subr.bf16.mxu0 0
        %1164 = vmatpush2.bf16.xpose.msra.mxu0 0
        %1165 = vmatprep.subr.bf16.mxu0 0
        %1166 = vmatpush2.bf16.xpose.msra.mxu0 0
        %1167 = vmatprep.subr.bf16.mxu0 0
        %1168 = vmatpush2.bf16.xpose.msra.mxu0 0
        %1169 = vmatprep.subr.bf16.mxu0 0
        %1170 = vmatpush2.bf16.xpose.msra.mxu0 0
        %1171 = vmatprep.mubr.bf16.mxu0 0
        %1172 = vmatmul.mubr.bf16.gmra.mxu0 %v1134
        %v1173 = vpop.f32.mrf.mxu0
        %v1174 = vadd.f32 0.0, %v1173
        %v1175 = vpop.f32.mrf.mxu0
        %v1176 = vpop.f32.mrf.mxu0
        %v1177 = vpop.f32.mrf.mxu0
        %1178 = vdwg.mxu0
        %v1179 = vsel %vm1021, %v1174, -inf
        %1180 = vmax.xlane.f32.xlu0 %v1179
        %v1181 = vpop.xlane.xlu0 %1180
        %v1182 = vsub.f32 %v1174, %v1181
        %v1183 = vmul.f32 %v1182, 1.442695
        %v1184 = vpow.pop %v1183
        %v1185 = vsel %vm1021, %v1184, 0.0
        %1186 = vadd.xlane.f32.xlu0 %v1185
        %v1187 = vpop.xlane.xlu0 %1186
        %v1188 = vrcp.pop %v1187
        %v1189 = vmul.f32 %v1184, %v1188
        %v1190 = vpack.c.bf16 %v1189, %v1189
        %1191 = vrot.lane.b32.xlu0 %v1017, 56
        %v1192 = vpop.permute.xlu0 %1191
        %v1194 = vsel %vm1021, %v1190, 0
        %v1197 = vsel %vm1085, %v1192, 0
        %1199 = vmatprep.subr.bf16.mxu0 0
        %1200 = vmatpush1.bf16.msra.mxu0 0
        %1201 = vmatprep.subr.bf16.mxu0 0
        %1202 = vmatpush1.bf16.msra.mxu0 0
        %1203 = vmatprep.subr.bf16.mxu0 0
        %1204 = vmatpush1.bf16.msra.mxu0 0
        %1205 = vmatprep.subr.bf16.mxu0 0
        %1206 = vmatpush1.bf16.msra.mxu0 0
        %1207 = vmatprep.subr.bf16.mxu0 0
        %1208 = vmatpush1.bf16.msra.mxu0 0
        %1209 = vmatprep.subr.bf16.mxu0 0
        %1210 = vmatpush1.bf16.msra.mxu0 0
        %1211 = vmatprep.subr.bf16.mxu0 0
        %1212 = vmatpush1.bf16.msra.mxu0 0
        %1213 = vmatprep.subr.bf16.mxu0 0
        %1214 = vmatpush1.bf16.msra.mxu0 %v1197
        %1215 = vmatprep.subr.bf16.mxu0 0
        %1216 = vmatpush2.bf16.msra.mxu0 0
        %1217 = vmatprep.subr.bf16.mxu0 0
        %1218 = vmatpush2.bf16.msra.mxu0 0
        %1219 = vmatprep.subr.bf16.mxu0 0
        %1220 = vmatpush2.bf16.msra.mxu0 0
        %1221 = vmatprep.subr.bf16.mxu0 0
        %1222 = vmatpush2.bf16.msra.mxu0 0
        %1223 = vmatprep.subr.bf16.mxu0 0
        %1224 = vmatpush2.bf16.msra.mxu0 0
        %1225 = vmatprep.subr.bf16.mxu0 0
        %1226 = vmatpush2.bf16.msra.mxu0 0
        %1227 = vmatprep.subr.bf16.mxu0 0
        %1228 = vmatpush2.bf16.msra.mxu0 0
        %1229 = vmatprep.subr.bf16.mxu0 0
        %1230 = vmatpush2.bf16.msra.mxu0 0
        %1231 = vmatprep.mubr.bf16.mxu0 0
        %1232 = vmatmul.mubr.bf16.gmra.mxu0 %v1194
        %v1233 = vpop.f32.mrf.mxu0
        %v1234 = vadd.f32 0.0, %v1233
        %v1235 = vpop.f32.mrf.mxu0
        %v1236 = vpop.f32.mrf.mxu0
        %v1237 = vpop.f32.mrf.mxu0
        %1238 = vdwg.mxu0
        %1239 = vrot.lane.b32.xlu0 %v1017, 112
        %v1240 = vpop.permute.xlu0 %1239
        %1241 = vrot.lane.b32.xlu0 %v1017, 80
        %v1242 = vpop.permute.xlu0 %1241
        %v1244 = vsel %vm1021, %v1240, 0
        %v1247 = vsel %vm1021, %v1242, 0
        %1249 = vmatprep.subr.bf16.mxu0 0
        %1250 = vmatpush1.bf16.xpose.msra.mxu0 0
        %1251 = vmatprep.subr.bf16.mxu0 0
        %1252 = vmatpush1.bf16.xpose.msra.mxu0 0
        %1253 = vmatprep.subr.bf16.mxu0 0
        %1254 = vmatpush1.bf16.xpose.msra.mxu0 0
        %1255 = vmatprep.subr.bf16.mxu0 0
        %1256 = vmatpush1.bf16.xpose.msra.mxu0 0
        %1257 = vmatprep.subr.bf16.mxu0 0
        %1258 = vmatpush1.bf16.xpose.msra.mxu0 0
        %1259 = vmatprep.subr.bf16.mxu0 0
        %1260 = vmatpush1.bf16.xpose.msra.mxu0 0
        %1261 = vmatprep.subr.bf16.mxu0 0
        %1262 = vmatpush1.bf16.xpose.msra.mxu0 0
        %1263 = vmatprep.subr.bf16.mxu0 0
        %1264 = vmatpush1.bf16.xpose.msra.mxu0 %v1247
        %1265 = vmatprep.subr.bf16.mxu0 0
        %1266 = vmatpush2.bf16.xpose.msra.mxu0 0
        %1267 = vmatprep.subr.bf16.mxu0 0
        %1268 = vmatpush2.bf16.xpose.msra.mxu0 0
        %1269 = vmatprep.subr.bf16.mxu0 0
        %1270 = vmatpush2.bf16.xpose.msra.mxu0 0
        %1271 = vmatprep.subr.bf16.mxu0 0
        %1272 = vmatpush2.bf16.xpose.msra.mxu0 0
        %1273 = vmatprep.subr.bf16.mxu0 0
        %1274 = vmatpush2.bf16.xpose.msra.mxu0 0
        %1275 = vmatprep.subr.bf16.mxu0 0
        %1276 = vmatpush2.bf16.xpose.msra.mxu0 0
        %1277 = vmatprep.subr.bf16.mxu0 0
        %1278 = vmatpush2.bf16.xpose.msra.mxu0 0
        %1279 = vmatprep.subr.bf16.mxu0 0
        %1280 = vmatpush2.bf16.xpose.msra.mxu0 0
        %1281 = vmatprep.mubr.bf16.mxu0 0
        %1282 = vmatmul.mubr.bf16.gmra.mxu0 %v1244
        %v1283 = vpop.f32.mrf.mxu0
        %v1284 = vadd.f32 0.0, %v1283
        %v1285 = vpop.f32.mrf.mxu0
        %v1286 = vpop.f32.mrf.mxu0
        %v1287 = vpop.f32.mrf.mxu0
        %1288 = vdwg.mxu0
        %v1289 = vsel %vm1021, %v1284, -inf
        %1290 = vmax.xlane.f32.xlu0 %v1289
        %v1291 = vpop.xlane.xlu0 %1290
        %v1292 = vsub.f32 %v1284, %v1291
        %v1293 = vmul.f32 %v1292, 1.442695
        %v1294 = vpow.pop %v1293
        %v1295 = vsel %vm1021, %v1294, 0.0
        %1296 = vadd.xlane.f32.xlu0 %v1295
        %v1297 = vpop.xlane.xlu0 %1296
        %v1298 = vrcp.pop %v1297
        %v1299 = vmul.f32 %v1294, %v1298
        %v1300 = vpack.c.bf16 %v1299, %v1299
        %1301 = vrot.lane.b32.xlu0 %v1017, 48
        %v1302 = vpop.permute.xlu0 %1301
        %v1304 = vsel %vm1021, %v1300, 0
        %v1307 = vsel %vm1085, %v1302, 0
        %1309 = vmatprep.subr.bf16.mxu0 0
        %1310 = vmatpush1.bf16.msra.mxu0 0
        %1311 = vmatprep.subr.bf16.mxu0 0
        %1312 = vmatpush1.bf16.msra.mxu0 0
        %1313 = vmatprep.subr.bf16.mxu0 0
        %1314 = vmatpush1.bf16.msra.mxu0 0
        %1315 = vmatprep.subr.bf16.mxu0 0
        %1316 = vmatpush1.bf16.msra.mxu0 0
        %1317 = vmatprep.subr.bf16.mxu0 0
        %1318 = vmatpush1.bf16.msra.mxu0 0
        %1319 = vmatprep.subr.bf16.mxu0 0
        %1320 = vmatpush1.bf16.msra.mxu0 0
        %1321 = vmatprep.subr.bf16.mxu0 0
        %1322 = vmatpush1.bf16.msra.mxu0 0
        %1323 = vmatprep.subr.bf16.mxu0 0
        %1324 = vmatpush1.bf16.msra.mxu0 %v1307
        %1325 = vmatprep.subr.bf16.mxu0 0
        %1326 = vmatpush2.bf16.msra.mxu0 0
        %1327 = vmatprep.subr.bf16.mxu0 0
        %1328 = vmatpush2.bf16.msra.mxu0 0
        %1329 = vmatprep.subr.bf16.mxu0 0
        %1330 = vmatpush2.bf16.msra.mxu0 0
        %1331 = vmatprep.subr.bf16.mxu0 0
        %1332 = vmatpush2.bf16.msra.mxu0 0
        %1333 = vmatprep.subr.bf16.mxu0 0
        %1334 = vmatpush2.bf16.msra.mxu0 0
        %1335 = vmatprep.subr.bf16.mxu0 0
        %1336 = vmatpush2.bf16.msra.mxu0 0
        %1337 = vmatprep.subr.bf16.mxu0 0
        %1338 = vmatpush2.bf16.msra.mxu0 0
        %1339 = vmatprep.subr.bf16.mxu0 0
        %1340 = vmatpush2.bf16.msra.mxu0 0
        %1341 = vmatprep.mubr.bf16.mxu0 0
        %1342 = vmatmul.mubr.bf16.gmra.mxu0 %v1304
        %v1343 = vpop.f32.mrf.mxu0
        %v1344 = vadd.f32 0.0, %v1343
        %v1345 = vpop.f32.mrf.mxu0
        %v1346 = vpop.f32.mrf.mxu0
        %v1347 = vpop.f32.mrf.mxu0
        %1348 = vdwg.mxu0
        %1349 = vrot.lane.b32.xlu0 %v1017, 104
        %v1350 = vpop.permute.xlu0 %1349
        %1351 = vrot.lane.b32.xlu0 %v1017, 72
        %v1352 = vpop.permute.xlu0 %1351
        %v1354 = vsel %vm1021, %v1350, 0
        %v1357 = vsel %vm1021, %v1352, 0
        %1359 = vmatprep.subr.bf16.mxu0 0
        %1360 = vmatpush1.bf16.xpose.msra.mxu0 0
        %1361 = vmatprep.subr.bf16.mxu0 0
        %1362 = vmatpush1.bf16.xpose.msra.mxu0 0
        %1363 = vmatprep.subr.bf16.mxu0 0
        %1364 = vmatpush1.bf16.xpose.msra.mxu0 0
        %1365 = vmatprep.subr.bf16.mxu0 0
        %1366 = vmatpush1.bf16.xpose.msra.mxu0 0
        %1367 = vmatprep.subr.bf16.mxu0 0
        %1368 = vmatpush1.bf16.xpose.msra.mxu0 0
        %1369 = vmatprep.subr.bf16.mxu0 0
        %1370 = vmatpush1.bf16.xpose.msra.mxu0 0
        %1371 = vmatprep.subr.bf16.mxu0 0
        %1372 = vmatpush1.bf16.xpose.msra.mxu0 0
        %1373 = vmatprep.subr.bf16.mxu0 0
        %1374 = vmatpush1.bf16.xpose.msra.mxu0 %v1357
        %1375 = vmatprep.subr.bf16.mxu0 0
        %1376 = vmatpush2.bf16.xpose.msra.mxu0 0
        %1377 = vmatprep.subr.bf16.mxu0 0
        %1378 = vmatpush2.bf16.xpose.msra.mxu0 0
        %1379 = vmatprep.subr.bf16.mxu0 0
        %1380 = vmatpush2.bf16.xpose.msra.mxu0 0
        %1381 = vmatprep.subr.bf16.mxu0 0
        %1382 = vmatpush2.bf16.xpose.msra.mxu0 0
        %1383 = vmatprep.subr.bf16.mxu0 0
        %1384 = vmatpush2.bf16.xpose.msra.mxu0 0
        %1385 = vmatprep.subr.bf16.mxu0 0
        %1386 = vmatpush2.bf16.xpose.msra.mxu0 0
        %1387 = vmatprep.subr.bf16.mxu0 0
        %1388 = vmatpush2.bf16.xpose.msra.mxu0 0
        %1389 = vmatprep.subr.bf16.mxu0 0
        %1390 = vmatpush2.bf16.xpose.msra.mxu0 0
        %1391 = vmatprep.mubr.bf16.mxu0 0
        %1392 = vmatmul.mubr.bf16.gmra.mxu0 %v1354
        %v1393 = vpop.f32.mrf.mxu0
        %v1394 = vadd.f32 0.0, %v1393
        %v1395 = vpop.f32.mrf.mxu0
        %v1396 = vpop.f32.mrf.mxu0
        %v1397 = vpop.f32.mrf.mxu0
        %1398 = vdwg.mxu0
        %v1399 = vsel %vm1021, %v1394, -inf
        %1400 = vmax.xlane.f32.xlu0 %v1399
        %v1401 = vpop.xlane.xlu0 %1400
        %v1402 = vsub.f32 %v1394, %v1401
        %v1403 = vmul.f32 %v1402, 1.442695
        %v1404 = vpow.pop %v1403
        %v1405 = vsel %vm1021, %v1404, 0.0
        %1406 = vadd.xlane.f32.xlu0 %v1405
        %v1407 = vpop.xlane.xlu0 %1406
        %v1408 = vrcp.pop %v1407
        %v1409 = vmul.f32 %v1404, %v1408
        %v1410 = vpack.c.bf16 %v1409, %v1409
        %1411 = vrot.lane.b32.xlu0 %v1017, 40
        %v1412 = vpop.permute.xlu0 %1411
        %v1414 = vsel %vm1021, %v1410, 0
        %v1417 = vsel %vm1085, %v1412, 0
        %1419 = vmatprep.subr.bf16.mxu0 0
        %1420 = vmatpush1.bf16.msra.mxu0 0
        %1421 = vmatprep.subr.bf16.mxu0 0
        %1422 = vmatpush1.bf16.msra.mxu0 0
        %1423 = vmatprep.subr.bf16.mxu0 0
        %1424 = vmatpush1.bf16.msra.mxu0 0
        %1425 = vmatprep.subr.bf16.mxu0 0
        %1426 = vmatpush1.bf16.msra.mxu0 0
        %1427 = vmatprep.subr.bf16.mxu0 0
        %1428 = vmatpush1.bf16.msra.mxu0 0
        %1429 = vmatprep.subr.bf16.mxu0 0
        %1430 = vmatpush1.bf16.msra.mxu0 0
        %1431 = vmatprep.subr.bf16.mxu0 0
        %1432 = vmatpush1.bf16.msra.mxu0 0
        %1433 = vmatprep.subr.bf16.mxu0 0
        %1434 = vmatpush1.bf16.msra.mxu0 %v1417
        %1435 = vmatprep.subr.bf16.mxu0 0
        %1436 = vmatpush2.bf16.msra.mxu0 0
        %1437 = vmatprep.subr.bf16.mxu0 0
        %1438 = vmatpush2.bf16.msra.mxu0 0
        %1439 = vmatprep.subr.bf16.mxu0 0
        %1440 = vmatpush2.bf16.msra.mxu0 0
        %1441 = vmatprep.subr.bf16.mxu0 0
        %1442 = vmatpush2.bf16.msra.mxu0 0
        %1443 = vmatprep.subr.bf16.mxu0 0
        %1444 = vmatpush2.bf16.msra.mxu0 0
        %1445 = vmatprep.subr.bf16.mxu0 0
        %1446 = vmatpush2.bf16.msra.mxu0 0
        %1447 = vmatprep.subr.bf16.mxu0 0
        %1448 = vmatpush2.bf16.msra.mxu0 0
        %1449 = vmatprep.subr.bf16.mxu0 0
        %1450 = vmatpush2.bf16.msra.mxu0 0
        %1451 = vmatprep.mubr.bf16.mxu0 0
        %1452 = vmatmul.mubr.bf16.gmra.mxu0 %v1414
        %v1453 = vpop.f32.mrf.mxu0
        %v1454 = vadd.f32 0.0, %v1453
        %v1455 = vpop.f32.mrf.mxu0
        %v1456 = vpop.f32.mrf.mxu0
        %v1457 = vpop.f32.mrf.mxu0
        %1458 = vdwg.mxu0
        %1460 = vrot.lane.b32.xlu0 %v1234, 8
        %v1461 = vpop.permute.xlu0 %1460
        %1464 = vrot.lane.b32.xlu0 %v1344, 16
        %v1465 = vpop.permute.xlu0 %1464
        %1468 = vrot.lane.b32.xlu0 %v1454, 24
        %v1469 = vpop.permute.xlu0 %1468
        %v1471 = vsel %vm1021, %v1124, %v1461
        %vm1472 = vcmask 130048
        %v1473 = vsel %vm1472, %v1471, %v1465
        %vm1474 = vcmask 195584
        %v1475 = vsel %vm1474, %v1473, %v1469
        %v1476 = vpack.c.bf16 %v1475, %v1475
        %v1477 = vld [vmem:[%s10] sm:$0xf]
        %v1478 = vld [vmem:[%s10 + $0x4] sm:$0xf]
        %v1479 = vld [vmem:[%s10 + $0x8] sm:$0xf]
        %v1480 = vld [vmem:[%s10 + $0xc] sm:$0xf]
        %v1481 = vld [vmem:[%s11] sm:$0x1]
        %v1482 = vlaneseq
        %v1483 = vshrl.u32 %v1482, 7
        %v1484 = vsub.s32 0, %v1483
        %v1485 = vrot.slane %v1481, %v1484
        %v1490 = vunpack.c.l.b16 %v1477
        %v1491 = vunpack.c.l.b16 %v1478
        %v1492 = vunpack.c.l.b16 %v1479
        %v1493 = vunpack.c.l.b16 %v1480
        %v1494 = vpack.c.b16 %v1491, %v1490
        %v1495 = vpack.c.b16 %v1493, %v1492
        %v1499 = vsel %vm973, %v1476, 0
        %1501 = vmatprep.subr.bf16.mxu0 0
        %1502 = vmatpush1.bf16.msra.mxu0 0
        %1503 = vmatprep.subr.bf16.mxu0 0
        %1504 = vmatpush1.bf16.msra.mxu0 0
        %1505 = vmatprep.subr.bf16.mxu0 0
        %1506 = vmatpush1.bf16.msra.mxu0 0
        %1507 = vmatprep.subr.bf16.mxu0 0
        %1508 = vmatpush1.bf16.msra.mxu0 0
        %1509 = vmatprep.subr.bf16.mxu0 0
        %1510 = vmatpush1.bf16.msra.mxu0 0
        %1511 = vmatprep.subr.bf16.mxu0 0
        %1512 = vmatpush1.bf16.msra.mxu0 0
        %1513 = vmatprep.subr.bf16.mxu0 0
        %1514 = vmatpush1.bf16.msra.mxu0 %v1495
        %1515 = vmatprep.subr.bf16.mxu0 0
        %1516 = vmatpush1.bf16.msra.mxu0 %v1494
        %1517 = vmatprep.subr.bf16.mxu0 0
        %1518 = vmatpush2.bf16.msra.mxu0 0
        %1519 = vmatprep.subr.bf16.mxu0 0
        %1520 = vmatpush2.bf16.msra.mxu0 0
        %1521 = vmatprep.subr.bf16.mxu0 0
        %1522 = vmatpush2.bf16.msra.mxu0 0
        %1523 = vmatprep.subr.bf16.mxu0 0
        %1524 = vmatpush2.bf16.msra.mxu0 0
        %1525 = vmatprep.subr.bf16.mxu0 0
        %1526 = vmatpush2.bf16.msra.mxu0 0
        %1527 = vmatprep.subr.bf16.mxu0 0
        %1528 = vmatpush2.bf16.msra.mxu0 0
        %1529 = vmatprep.subr.bf16.mxu0 0
        %1530 = vmatpush2.bf16.msra.mxu0 0
        %1531 = vmatprep.subr.bf16.mxu0 0
        %1532 = vmatpush2.bf16.msra.mxu0 0
        %1533 = vmatprep.mubr.bf16.mxu0 0
        %1534 = vmatmul.mubr.bf16.gmra.mxu0 %v1499
        %v1535 = vpop.f32.mrf.mxu0
        %v1536 = vadd.f32 %v1485, %v1535
        %v1537 = vpop.f32.mrf.mxu0
        %v1538 = vpop.f32.mrf.mxu0
        %v1539 = vpop.f32.mrf.mxu0
        %1540 = vdwg.mxu0
        %v1541 = vld [vmem:[%s12] sm:$0x1]
        %v1542 = vld [vmem:[%s13] sm:$0x1]
        %v1543 = vsel %vm973, %v1536, 0.0
        %1544 = vadd.xlane.f32.xlu0 %v1543
        %v1545 = vpop.xlane.xlu0 %1544
        %v1546 = vrcp.pop 32.0
        %v1547 = vmul.f32 %v1545, %v1546
        %v1548 = vsub.f32 %v1536, %v1547
        %v1549 = vmul.f32 %v1548, %v1548
        %v1550 = vsel %vm973, %v1549, 0.0
        %1551 = vadd.xlane.f32.xlu0 %v1550
        %v1552 = vpop.xlane.xlu0 %1551
        %v1553 = vmul.f32 %v1552, %v1546
        %v1554 = vadd.f32 %v1553, 1e-05
        %v1555 = vrsqrt.pop %v1554
        %v1556 = vmul.f32 %v1548, %v1555
        %v1557 = vlaneseq
        %v1558 = vshrl.u32 %v1557, 7
        %v1559 = vsub.s32 0, %v1558
        %v1560 = vrot.slane %v1541, %v1559
        %v1561 = vmul.f32 %v1556, %v1560
        %v1562 = vlaneseq
        %v1563 = vshrl.u32 %v1562, 7
        %v1564 = vsub.s32 0, %v1563
        %v1565 = vrot.slane %v1542, %v1564
        %v1566 = vadd.f32 %v1561, %v1565
        %v1567 = vpack.c.bf16 %v1566, %v1566
        %v1568 = vld [vmem:[%s14] sm:$0xf]
        %v1569 = vld [vmem:[%s14 + $0x4] sm:$0xf]
        %v1570 = vld [vmem:[%s14 + $0x8] sm:$0xf]
        %v1571 = vld [vmem:[%s14 + $0xc] sm:$0xf]
        %v1572 = vld [vmem:[%s15] sm:$0x1]
        %v1573 = vlaneseq
        %v1574 = vshrl.u32 %v1573, 7
        %v1575 = vsub.s32 0, %v1574
        %v1576 = vrot.slane %v1572, %v1575
        %v1581 = vunpack.c.l.b16 %v1568
        %v1582 = vunpack.c.l.b16 %v1569
        %v1583 = vunpack.c.l.b16 %v1570
        %v1584 = vunpack.c.l.b16 %v1571
        %v1585 = vpack.c.b16 %v1582, %v1581
        %v1586 = vpack.c.b16 %v1584, %v1583
        %v1590 = vsel %vm973, %v1567, 0
        %1592 = vmatprep.subr.bf16.mxu0 0
        %1593 = vmatpush1.bf16.msra.mxu0 0
        %1594 = vmatprep.subr.bf16.mxu0 0
        %1595 = vmatpush1.bf16.msra.mxu0 0
        %1596 = vmatprep.subr.bf16.mxu0 0
        %1597 = vmatpush1.bf16.msra.mxu0 0
        %1598 = vmatprep.subr.bf16.mxu0 0
        %1599 = vmatpush1.bf16.msra.mxu0 0
        %1600 = vmatprep.subr.bf16.mxu0 0
        %1601 = vmatpush1.bf16.msra.mxu0 0
        %1602 = vmatprep.subr.bf16.mxu0 0
        %1603 = vmatpush1.bf16.msra.mxu0 0
        %1604 = vmatprep.subr.bf16.mxu0 0
        %1605 = vmatpush1.bf16.msra.mxu0 %v1586
        %1606 = vmatprep.subr.bf16.mxu0 0
        %1607 = vmatpush1.bf16.msra.mxu0 %v1585
        %1608 = vmatprep.subr.bf16.mxu0 0
        %1609 = vmatpush2.bf16.msra.mxu0 0
        %1610 = vmatprep.subr.bf16.mxu0 0
        %1611 = vmatpush2.bf16.msra.mxu0 0
        %1612 = vmatprep.subr.bf16.mxu0 0
        %1613 = vmatpush2.bf16.msra.mxu0 0
        %1614 = vmatprep.subr.bf16.mxu0 0
        %1615 = vmatpush2.bf16.msra.mxu0 0
        %1616 = vmatprep.subr.bf16.mxu0 0
        %1617 = vmatpush2.bf16.msra.mxu0 0
        %1618 = vmatprep.subr.bf16.mxu0 0
        %1619 = vmatpush2.bf16.msra.mxu0 0
        %1620 = vmatprep.subr.bf16.mxu0 0
        %1621 = vmatpush2.bf16.msra.mxu0 0
        %1622 = vmatprep.subr.bf16.mxu0 0
        %1623 = vmatpush2.bf16.msra.mxu0 0
        %1624 = vmatprep.mubr.bf16.mxu0 0
        %1625 = vmatmul.mubr.bf16.gmra.mxu0 %v1590
        %v1626 = vpop.f32.mrf.mxu0
        %v1627 = vadd.f32 %v1576, %v1626
        %v1628 = vpop.f32.mrf.mxu0
        %v1629 = vpop.f32.mrf.mxu0
        %v1630 = vpop.f32.mrf.mxu0
        %1631 = vdwg.mxu0
        %v1632 = vmax.f32 %v1627, 0.0
        %v1633 = vpack.c.bf16 %v1632, %v1632
        %v1634 = vld [vmem:[%s16] sm:$0xf]
        %v1635 = vld [vmem:[%s16 + $0x4] sm:$0xf]
        %v1636 = vld [vmem:[%s16 + $0x8] sm:$0xf]
        %v1637 = vld [vmem:[%s16 + $0xc] sm:$0xf]
        %v1638 = vld [vmem:[%s16 + $0x10] sm:$0xf]
        %v1639 = vld [vmem:[%s16 + $0x14] sm:$0xf]
        %v1640 = vld [vmem:[%s16 + $0x18] sm:$0xf]
        %v1641 = vld [vmem:[%s16 + $0x1c] sm:$0xf]
        %v1642 = vld [vmem:[%s17] sm:$0x1]
        %v1643 = vlaneseq
        %v1644 = vshrl.u32 %v1643, 7
        %v1645 = vsub.s32 0, %v1644
        %v1646 = vrot.slane %v1642, %v1645
        %v1655 = vunpack.c.l.b16 %v1634
        %v1656 = vunpack.c.l.b16 %v1635
        %v1657 = vunpack.c.l.b16 %v1636
        %v1658 = vunpack.c.l.b16 %v1637
        %v1659 = vunpack.c.l.b16 %v1638
        %v1660 = vunpack.c.l.b16 %v1639
        %v1661 = vunpack.c.l.b16 %v1640
        %v1662 = vunpack.c.l.b16 %v1641
        %v1663 = vpack.c.b16 %v1656, %v1655
        %v1664 = vpack.c.b16 %v1658, %v1657
        %v1665 = vpack.c.b16 %v1660, %v1659
        %v1666 = vpack.c.b16 %v1662, %v1661
        %vm1671 = vcmask 523264
        %v1673 = vsel %vm1671, %v1633, 0
        %1675 = vmatprep.subr.bf16.mxu0 0
        %1676 = vmatpush1.bf16.msra.mxu0 0
        %1677 = vmatprep.subr.bf16.mxu0 0
        %1678 = vmatpush1.bf16.msra.mxu0 0
        %1679 = vmatprep.subr.bf16.mxu0 0
        %1680 = vmatpush1.bf16.msra.mxu0 0
        %1681 = vmatprep.subr.bf16.mxu0 0
        %1682 = vmatpush1.bf16.msra.mxu0 0
        %1683 = vmatprep.subr.bf16.mxu0 0
        %1684 = vmatpush1.bf16.msra.mxu0 %v1666
        %1685 = vmatprep.subr.bf16.mxu0 0
        %1686 = vmatpush1.bf16.msra.mxu0 %v1665
        %1687 = vmatprep.subr.bf16.mxu0 0
        %1688 = vmatpush1.bf16.msra.mxu0 %v1664
        %1689 = vmatprep.subr.bf16.mxu0 0
        %1690 = vmatpush1.bf16.msra.mxu0 %v1663
        %1691 = vmatprep.subr.bf16.mxu0 0
        %1692 = vmatpush2.bf16.msra.mxu0 0
        %1693 = vmatprep.subr.bf16.mxu0 0
        %1694 = vmatpush2.bf16.msra.mxu0 0
        %1695 = vmatprep.subr.bf16.mxu0 0
        %1696 = vmatpush2.bf16.msra.mxu0 0
        %1697 = vmatprep.subr.bf16.mxu0 0
        %1698 = vmatpush2.bf16.msra.mxu0 0
        %1699 = vmatprep.subr.bf16.mxu0 0
        %1700 = vmatpush2.bf16.msra.mxu0 0
        %1701 = vmatprep.subr.bf16.mxu0 0
        %1702 = vmatpush2.bf16.msra.mxu0 0
        %1703 = vmatprep.subr.bf16.mxu0 0
        %1704 = vmatpush2.bf16.msra.mxu0 0
        %1705 = vmatprep.subr.bf16.mxu0 0
        %1706 = vmatpush2.bf16.msra.mxu0 0
        %1707 = vmatprep.mubr.bf16.mxu0 0
        %1708 = vmatmul.mubr.bf16.gmra.mxu0 %v1673
        %v1709 = vpop.f32.mrf.mxu0
        %v1710 = vadd.f32 %v1646, %v1709
        %v1711 = vpop.f32.mrf.mxu0
        %v1712 = vpop.f32.mrf.mxu0
        %v1713 = vpop.f32.mrf.mxu0
        %1714 = vdwg.mxu0
        %v1715 = vld [vmem:[%s18] sm:$0x1]
        %v1716 = vld [vmem:[%s19] sm:$0x1]
        %v1717 = vsel %vm973, %v1710, 0.0
        %1718 = vadd.xlane.f32.xlu0 %v1717
        %v1719 = vpop.xlane.xlu0 %1718
        %v1720 = vmul.f32 %v1719, %v1546
        %v1721 = vsub.f32 %v1710, %v1720
        %v1722 = vmul.f32 %v1721, %v1721
        %v1723 = vsel %vm973, %v1722, 0.0
        %1724 = vadd.xlane.f32.xlu0 %v1723
        %v1725 = vpop.xlane.xlu0 %1724
        %v1726 = vmul.f32 %v1725, %v1546
        %v1727 = vadd.f32 %v1726, 1e-05
        %v1728 = vrsqrt.pop %v1727
        %v1729 = vmul.f32 %v1721, %v1728
        %v1730 = vlaneseq
        %v1731 = vshrl.u32 %v1730, 7
        %v1732 = vsub.s32 0, %v1731
        %v1733 = vrot.slane %v1715, %v1732
        %v1734 = vmul.f32 %v1729, %v1733
        %v1735 = vlaneseq
        %v1736 = vshrl.u32 %v1735, 7
        %v1737 = vsub.s32 0, %v1736
        %v1738 = vrot.slane %v1716, %v1737
        %v1739 = vadd.f32 %v1734, %v1738
        %v1740 = vpack.c.bf16 %v1739, %v1739
        %s1741 = scalar_lea.vmem %s8, 16
        %v1742 = vld [vmem:[%s1741] sm:$0xf]
        %v1743 = vld [vmem:[%s1741 + $0x4] sm:$0xf]
        %v1744 = vld [vmem:[%s1741 + $0x8] sm:$0xf]
        %v1745 = vld [vmem:[%s1741 + $0xc] sm:$0xf]
        %v1746 = vld [vmem:[%s9 + $0x1] sm:$0x1]
        %v1747 = vlaneseq
        %v1748 = vshrl.u32 %v1747, 7
        %v1749 = vsub.s32 0, %v1748
        %v1750 = vrot.slane %v1746, %v1749
        %v1755 = vunpack.c.l.b16 %v1742
        %v1756 = vunpack.c.l.b16 %v1743
        %v1757 = vunpack.c.l.b16 %v1744
        %v1758 = vunpack.c.l.b16 %v1745
        %v1759 = vpack.c.b16 %v1756, %v1755
        %v1760 = vpack.c.b16 %v1758, %v1757
        %v1764 = vsel %vm973, %v1740, 0
        %1766 = vmatprep.subr.bf16.mxu0 0
        %1767 = vmatpush1.bf16.msra.mxu0 0
        %1768 = vmatprep.subr.bf16.mxu0 0
        %1769 = vmatpush1.bf16.msra.mxu0 0
        %1770 = vmatprep.subr.bf16.mxu0 0
        %1771 = vmatpush1.bf16.msra.mxu0 0
        %1772 = vmatprep.subr.bf16.mxu0 0
        %1773 = vmatpush1.bf16.msra.mxu0 0
        %1774 = vmatprep.subr.bf16.mxu0 0
        %1775 = vmatpush1.bf16.msra.mxu0 0
        %1776 = vmatprep.subr.bf16.mxu0 0
        %1777 = vmatpush1.bf16.msra.mxu0 0
        %1778 = vmatprep.subr.bf16.mxu0 0
        %1779 = vmatpush1.bf16.msra.mxu0 %v1760
        %1780 = vmatprep.subr.bf16.mxu0 0
        %1781 = vmatpush1.bf16.msra.mxu0 %v1759
        %1782 = vmatprep.subr.bf16.mxu0 0
        %1783 = vmatpush2.bf16.msra.mxu0 0
        %1784 = vmatprep.subr.bf16.mxu0 0
        %1785 = vmatpush2.bf16.msra.mxu0 0
        %1786 = vmatprep.subr.bf16.mxu0 0
        %1787 = vmatpush2.bf16.msra.mxu0 0
        %1788 = vmatprep.subr.bf16.mxu0 0
        %1789 = vmatpush2.bf16.msra.mxu0 0
        %1790 = vmatprep.subr.bf16.mxu0 0
        %1791 = vmatpush2.bf16.msra.mxu0 0
        %1792 = vmatprep.subr.bf16.mxu0 0
        %1793 = vmatpush2.bf16.msra.mxu0 0
        %1794 = vmatprep.subr.bf16.mxu0 0
        %1795 = vmatpush2.bf16.msra.mxu0 0
        %1796 = vmatprep.subr.bf16.mxu0 0
        %1797 = vmatpush2.bf16.msra.mxu0 0
        %1798 = vmatprep.mubr.bf16.mxu0 0
        %1799 = vmatmul.mubr.bf16.gmra.mxu0 %v1764
        %v1800 = vpop.f32.mrf.mxu0
        %v1801 = vadd.f32 %v1750, %v1800
        %v1802 = vpop.f32.mrf.mxu0
        %v1803 = vpop.f32.mrf.mxu0
        %v1804 = vpop.f32.mrf.mxu0
        %1805 = vdwg.mxu0
        %v1806 = vpack.c.bf16 %v1801, %v1801
        %1808 = vrot.lane.b32.xlu0 %v1806, 96
        %v1809 = vpop.permute.xlu0 %1808
        %v1811 = vsel %vm1021, %v1806, 0
        %v1814 = vsel %vm1021, %v1809, 0
        %1816 = vmatprep.subr.bf16.mxu0 0
        %1817 = vmatpush1.bf16.xpose.msra.mxu0 0
        %1818 = vmatprep.subr.bf16.mxu0 0
        %1819 = vmatpush1.bf16.xpose.msra.mxu0 0
        %1820 = vmatprep.subr.bf16.mxu0 0
        %1821 = vmatpush1.bf16.xpose.msra.mxu0 0
        %1822 = vmatprep.subr.bf16.mxu0 0
        %1823 = vmatpush1.bf16.xpose.msra.mxu0 0
        %1824 = vmatprep.subr.bf16.mxu0 0
        %1825 = vmatpush1.bf16.xpose.msra.mxu0 0
        %1826 = vmatprep.subr.bf16.mxu0 0
        %1827 = vmatpush1.bf16.xpose.msra.mxu0 0
        %1828 = vmatprep.subr.bf16.mxu0 0
        %1829 = vmatpush1.bf16.xpose.msra.mxu0 0
        %1830 = vmatprep.subr.bf16.mxu0 0
        %1831 = vmatpush1.bf16.xpose.msra.mxu0 %v1814
        %1832 = vmatprep.subr.bf16.mxu0 0
        %1833 = vmatpush2.bf16.xpose.msra.mxu0 0
        %1834 = vmatprep.subr.bf16.mxu0 0
        %1835 = vmatpush2.bf16.xpose.msra.mxu0 0
        %1836 = vmatprep.subr.bf16.mxu0 0
        %1837 = vmatpush2.bf16.xpose.msra.mxu0 0
        %1838 = vmatprep.subr.bf16.mxu0 0
        %1839 = vmatpush2.bf16.xpose.msra.mxu0 0
        %1840 = vmatprep.subr.bf16.mxu0 0
        %1841 = vmatpush2.bf16.xpose.msra.mxu0 0
        %1842 = vmatprep.subr.bf16.mxu0 0
        %1843 = vmatpush2.bf16.xpose.msra.mxu0 0
        %1844 = vmatprep.subr.bf16.mxu0 0
        %1845 = vmatpush2.bf16.xpose.msra.mxu0 0
        %1846 = vmatprep.subr.bf16.mxu0 0
        %1847 = vmatpush2.bf16.xpose.msra.mxu0 0
        %1848 = vmatprep.mubr.bf16.mxu0 0
        %1849 = vmatmul.mubr.bf16.gmra.mxu0 %v1811
        %v1850 = vpop.f32.mrf.mxu0
        %v1851 = vadd.f32 0.0, %v1850
        %v1852 = vpop.f32.mrf.mxu0
        %v1853 = vpop.f32.mrf.mxu0
        %v1854 = vpop.f32.mrf.mxu0
        %1855 = vdwg.mxu0
        %v1856 = vsel %vm1021, %v1851, -inf
        %1857 = vmax.xlane.f32.xlu0 %v1856
        %v1858 = vpop.xlane.xlu0 %1857
        %v1859 = vsub.f32 %v1851, %v1858
        %v1860 = vmul.f32 %v1859, 1.442695
        %v1861 = vpow.pop %v1860
        %v1862 = vsel %vm1021, %v1861, 0.0
        %1863 = vadd.xlane.f32.xlu0 %v1862
        %v1864 = vpop.xlane.xlu0 %1863
        %v1865 = vrcp.pop %v1864
        %v1866 = vmul.f32 %v1861, %v1865
        %v1867 = vpack.c.bf16 %v1866, %v1866
        %1868 = vrot.lane.b32.xlu0 %v1806, 64
        %v1869 = vpop.permute.xlu0 %1868
        %v1871 = vsel %vm1021, %v1867, 0
        %v1874 = vsel %vm1085, %v1869, 0
        %1876 = vmatprep.subr.bf16.mxu0 0
        %1877 = vmatpush1.bf16.msra.mxu0 0
        %1878 = vmatprep.subr.bf16.mxu0 0
        %1879 = vmatpush1.bf16.msra.mxu0 0
        %1880 = vmatprep.subr.bf16.mxu0 0
        %1881 = vmatpush1.bf16.msra.mxu0 0
        %1882 = vmatprep.subr.bf16.mxu0 0
        %1883 = vmatpush1.bf16.msra.mxu0 0
        %1884 = vmatprep.subr.bf16.mxu0 0
        %1885 = vmatpush1.bf16.msra.mxu0 0
        %1886 = vmatprep.subr.bf16.mxu0 0
        %1887 = vmatpush1.bf16.msra.mxu0 0
        %1888 = vmatprep.subr.bf16.mxu0 0
        %1889 = vmatpush1.bf16.msra.mxu0 0
        %1890 = vmatprep.subr.bf16.mxu0 0
        %1891 = vmatpush1.bf16.msra.mxu0 %v1874
        %1892 = vmatprep.subr.bf16.mxu0 0
        %1893 = vmatpush2.bf16.msra.mxu0 0
        %1894 = vmatprep.subr.bf16.mxu0 0
        %1895 = vmatpush2.bf16.msra.mxu0 0
        %1896 = vmatprep.subr.bf16.mxu0 0
        %1897 = vmatpush2.bf16.msra.mxu0 0
        %1898 = vmatprep.subr.bf16.mxu0 0
        %1899 = vmatpush2.bf16.msra.mxu0 0
        %1900 = vmatprep.subr.bf16.mxu0 0
        %1901 = vmatpush2.bf16.msra.mxu0 0
        %1902 = vmatprep.subr.bf16.mxu0 0
        %1903 = vmatpush2.bf16.msra.mxu0 0
        %1904 = vmatprep.subr.bf16.mxu0 0
        %1905 = vmatpush2.bf16.msra.mxu0 0
        %1906 = vmatprep.subr.bf16.mxu0 0
        %1907 = vmatpush2.bf16.msra.mxu0 0
        %1908 = vmatprep.mubr.bf16.mxu0 0
        %1909 = vmatmul.mubr.bf16.gmra.mxu0 %v1871
        %v1910 = vpop.f32.mrf.mxu0
        %v1911 = vadd.f32 0.0, %v1910
        %v1912 = vpop.f32.mrf.mxu0
        %v1913 = vpop.f32.mrf.mxu0
        %v1914 = vpop.f32.mrf.mxu0
        %1915 = vdwg.mxu0
        %1916 = vrot.lane.b32.xlu0 %v1806, 120
        %v1917 = vpop.permute.xlu0 %1916
        %1918 = vrot.lane.b32.xlu0 %v1806, 88
        %v1919 = vpop.permute.xlu0 %1918
        %v1921 = vsel %vm1021, %v1917, 0
        %v1924 = vsel %vm1021, %v1919, 0
        %1926 = vmatprep.subr.bf16.mxu0 0
        %1927 = vmatpush1.bf16.xpose.msra.mxu0 0
        %1928 = vmatprep.subr.bf16.mxu0 0
        %1929 = vmatpush1.bf16.xpose.msra.mxu0 0
        %1930 = vmatprep.subr.bf16.mxu0 0
        %1931 = vmatpush1.bf16.xpose.msra.mxu0 0
        %1932 = vmatprep.subr.bf16.mxu0 0
        %1933 = vmatpush1.bf16.xpose.msra.mxu0 0
        %1934 = vmatprep.subr.bf16.mxu0 0
        %1935 = vmatpush1.bf16.xpose.msra.mxu0 0
        %1936 = vmatprep.subr.bf16.mxu0 0
        %1937 = vmatpush1.bf16.xpose.msra.mxu0 0
        %1938 = vmatprep.subr.bf16.mxu0 0
        %1939 = vmatpush1.bf16.xpose.msra.mxu0 0
        %1940 = vmatprep.subr.bf16.mxu0 0
        %1941 = vmatpush1.bf16.xpose.msra.mxu0 %v1924
        %1942 = vmatprep.subr.bf16.mxu0 0
        %1943 = vmatpush2.bf16.xpose.msra.mxu0 0
        %1944 = vmatprep.subr.bf16.mxu0 0
        %1945 = vmatpush2.bf16.xpose.msra.mxu0 0
        %1946 = vmatprep.subr.bf16.mxu0 0
        %1947 = vmatpush2.bf16.xpose.msra.mxu0 0
        %1948 = vmatprep.subr.bf16.mxu0 0
        %1949 = vmatpush2.bf16.xpose.msra.mxu0 0
        %1950 = vmatprep.subr.bf16.mxu0 0
        %1951 = vmatpush2.bf16.xpose.msra.mxu0 0
        %1952 = vmatprep.subr.bf16.mxu0 0
        %1953 = vmatpush2.bf16.xpose.msra.mxu0 0
        %1954 = vmatprep.subr.bf16.mxu0 0
        %1955 = vmatpush2.bf16.xpose.msra.mxu0 0
        %1956 = vmatprep.subr.bf16.mxu0 0
        %1957 = vmatpush2.bf16.xpose.msra.mxu0 0
        %1958 = vmatprep.mubr.bf16.mxu0 0
        %1959 = vmatmul.mubr.bf16.gmra.mxu0 %v1921
        %v1960 = vpop.f32.mrf.mxu0
        %v1961 = vadd.f32 0.0, %v1960
        %v1962 = vpop.f32.mrf.mxu0
        %v1963 = vpop.f32.mrf.mxu0
        %v1964 = vpop.f32.mrf.mxu0
        %1965 = vdwg.mxu0
        %v1966 = vsel %vm1021, %v1961, -inf
        %1967 = vmax.xlane.f32.xlu0 %v1966
        %v1968 = vpop.xlane.xlu0 %1967
        %v1969 = vsub.f32 %v1961, %v1968
        %v1970 = vmul.f32 %v1969, 1.442695
        %v1971 = vpow.pop %v1970
        %v1972 = vsel %vm1021, %v1971, 0.0
        %1973 = vadd.xlane.f32.xlu0 %v1972
        %v1974 = vpop.xlane.xlu0 %1973
        %v1975 = vrcp.pop %v1974
        %v1976 = vmul.f32 %v1971, %v1975
        %v1977 = vpack.c.bf16 %v1976, %v1976
        %1978 = vrot.lane.b32.xlu0 %v1806, 56
        %v1979 = vpop.permute.xlu0 %1978
        %v1981 = vsel %vm1021, %v1977, 0
        %v1984 = vsel %vm1085, %v1979, 0
        %1986 = vmatprep.subr.bf16.mxu0 0
        %1987 = vmatpush1.bf16.msra.mxu0 0
        %1988 = vmatprep.subr.bf16.mxu0 0
        %1989 = vmatpush1.bf16.msra.mxu0 0
        %1990 = vmatprep.subr.bf16.mxu0 0
        %1991 = vmatpush1.bf16.msra.mxu0 0
        %1992 = vmatprep.subr.bf16.mxu0 0
        %1993 = vmatpush1.bf16.msra.mxu0 0
        %1994 = vmatprep.subr.bf16.mxu0 0
        %1995 = vmatpush1.bf16.msra.mxu0 0
        %1996 = vmatprep.subr.bf16.mxu0 0
        %1997 = vmatpush1.bf16.msra.mxu0 0
        %1998 = vmatprep.subr.bf16.mxu0 0
        %1999 = vmatpush1.bf16.msra.mxu0 0
        %2000 = vmatprep.subr.bf16.mxu0 0
        %2001 = vmatpush1.bf16.msra.mxu0 %v1984
        %2002 = vmatprep.subr.bf16.mxu0 0
        %2003 = vmatpush2.bf16.msra.mxu0 0
        %2004 = vmatprep.subr.bf16.mxu0 0
        %2005 = vmatpush2.bf16.msra.mxu0 0
        %2006 = vmatprep.subr.bf16.mxu0 0
        %2007 = vmatpush2.bf16.msra.mxu0 0
        %2008 = vmatprep.subr.bf16.mxu0 0
        %2009 = vmatpush2.bf16.msra.mxu0 0
        %2010 = vmatprep.subr.bf16.mxu0 0
        %2011 = vmatpush2.bf16.msra.mxu0 0
        %2012 = vmatprep.subr.bf16.mxu0 0
        %2013 = vmatpush2.bf16.msra.mxu0 0
        %2014 = vmatprep.subr.bf16.mxu0 0
        %2015 = vmatpush2.bf16.msra.mxu0 0
        %2016 = vmatprep.subr.bf16.mxu0 0
        %2017 = vmatpush2.bf16.msra.mxu0 0
        %2018 = vmatprep.mubr.bf16.mxu0 0
        %2019 = vmatmul.mubr.bf16.gmra.mxu0 %v1981
        %v2020 = vpop.f32.mrf.mxu0
        %v2021 = vadd.f32 0.0, %v2020
        %v2022 = vpop.f32.mrf.mxu0
        %v2023 = vpop.f32.mrf.mxu0
        %v2024 = vpop.f32.mrf.mxu0
        %2025 = vdwg.mxu0
        %2026 = vrot.lane.b32.xlu0 %v1806, 112
        %v2027 = vpop.permute.xlu0 %2026
        %2028 = vrot.lane.b32.xlu0 %v1806, 80
        %v2029 = vpop.permute.xlu0 %2028
        %v2031 = vsel %vm1021, %v2027, 0
        %v2034 = vsel %vm1021, %v2029, 0
        %2036 = vmatprep.subr.bf16.mxu0 0
        %2037 = vmatpush1.bf16.xpose.msra.mxu0 0
        %2038 = vmatprep.subr.bf16.mxu0 0
        %2039 = vmatpush1.bf16.xpose.msra.mxu0 0
        %2040 = vmatprep.subr.bf16.mxu0 0
        %2041 = vmatpush1.bf16.xpose.msra.mxu0 0
        %2042 = vmatprep.subr.bf16.mxu0 0
        %2043 = vmatpush1.bf16.xpose.msra.mxu0 0
        %2044 = vmatprep.subr.bf16.mxu0 0
        %2045 = vmatpush1.bf16.xpose.msra.mxu0 0
        %2046 = vmatprep.subr.bf16.mxu0 0
        %2047 = vmatpush1.bf16.xpose.msra.mxu0 0
        %2048 = vmatprep.subr.bf16.mxu0 0
        %2049 = vmatpush1.bf16.xpose.msra.mxu0 0
        %2050 = vmatprep.subr.bf16.mxu0 0
        %2051 = vmatpush1.bf16.xpose.msra.mxu0 %v2034
        %2052 = vmatprep.subr.bf16.mxu0 0
        %2053 = vmatpush2.bf16.xpose.msra.mxu0 0
        %2054 = vmatprep.subr.bf16.mxu0 0
        %2055 = vmatpush2.bf16.xpose.msra.mxu0 0
        %2056 = vmatprep.subr.bf16.mxu0 0
        %2057 = vmatpush2.bf16.xpose.msra.mxu0 0
        %2058 = vmatprep.subr.bf16.mxu0 0
        %2059 = vmatpush2.bf16.xpose.msra.mxu0 0
        %2060 = vmatprep.subr.bf16.mxu0 0
        %2061 = vmatpush2.bf16.xpose.msra.mxu0 0
        %2062 = vmatprep.subr.bf16.mxu0 0
        %2063 = vmatpush2.bf16.xpose.msra.mxu0 0
        %2064 = vmatprep.subr.bf16.mxu0 0
        %2065 = vmatpush2.bf16.xpose.msra.mxu0 0
        %2066 = vmatprep.subr.bf16.mxu0 0
        %2067 = vmatpush2.bf16.xpose.msra.mxu0 0
        %2068 = vmatprep.mubr.bf16.mxu0 0
        %2069 = vmatmul.mubr.bf16.gmra.mxu0 %v2031
        %v2070 = vpop.f32.mrf.mxu0
        %v2071 = vadd.f32 0.0, %v2070
        %v2072 = vpop.f32.mrf.mxu0
        %v2073 = vpop.f32.mrf.mxu0
        %v2074 = vpop.f32.mrf.mxu0
        %2075 = vdwg.mxu0
        %v2076 = vsel %vm1021, %v2071, -inf
        %2077 = vmax.xlane.f32.xlu0 %v2076
        %v2078 = vpop.xlane.xlu0 %2077
        %v2079 = vsub.f32 %v2071, %v2078
        %v2080 = vmul.f32 %v2079, 1.442695
        %v2081 = vpow.pop %v2080
        %v2082 = vsel %vm1021, %v2081, 0.0
        %2083 = vadd.xlane.f32.xlu0 %v2082
        %v2084 = vpop.xlane.xlu0 %2083
        %v2085 = vrcp.pop %v2084
        %v2086 = vmul.f32 %v2081, %v2085
        %v2087 = vpack.c.bf16 %v2086, %v2086
        %2088 = vrot.lane.b32.xlu0 %v1806, 48
        %v2089 = vpop.permute.xlu0 %2088
        %v2091 = vsel %vm1021, %v2087, 0
        %v2094 = vsel %vm1085, %v2089, 0
        %2096 = vmatprep.subr.bf16.mxu0 0
        %2097 = vmatpush1.bf16.msra.mxu0 0
        %2098 = vmatprep.subr.bf16.mxu0 0
        %2099 = vmatpush1.bf16.msra.mxu0 0
        %2100 = vmatprep.subr.bf16.mxu0 0
        %2101 = vmatpush1.bf16.msra.mxu0 0
        %2102 = vmatprep.subr.bf16.mxu0 0
        %2103 = vmatpush1.bf16.msra.mxu0 0
        %2104 = vmatprep.subr.bf16.mxu0 0
        %2105 = vmatpush1.bf16.msra.mxu0 0
        %2106 = vmatprep.subr.bf16.mxu0 0
        %2107 = vmatpush1.bf16.msra.mxu0 0
        %2108 = vmatprep.subr.bf16.mxu0 0
        %2109 = vmatpush1.bf16.msra.mxu0 0
        %2110 = vmatprep.subr.bf16.mxu0 0
        %2111 = vmatpush1.bf16.msra.mxu0 %v2094
        %2112 = vmatprep.subr.bf16.mxu0 0
        %2113 = vmatpush2.bf16.msra.mxu0 0
        %2114 = vmatprep.subr.bf16.mxu0 0
        %2115 = vmatpush2.bf16.msra.mxu0 0
        %2116 = vmatprep.subr.bf16.mxu0 0
        %2117 = vmatpush2.bf16.msra.mxu0 0
        %2118 = vmatprep.subr.bf16.mxu0 0
        %2119 = vmatpush2.bf16.msra.mxu0 0
        %2120 = vmatprep.subr.bf16.mxu0 0
        %2121 = vmatpush2.bf16.msra.mxu0 0
        %2122 = vmatprep.subr.bf16.mxu0 0
        %2123 = vmatpush2.bf16.msra.mxu0 0
        %2124 = vmatprep.subr.bf16.mxu0 0
        %2125 = vmatpush2.bf16.msra.mxu0 0
        %2126 = vmatprep.subr.bf16.mxu0 0
        %2127 = vmatpush2.bf16.msra.mxu0 0
        %2128 = vmatprep.mubr.bf16.mxu0 0
        %2129 = vmatmul.mubr.bf16.gmra.mxu0 %v2091
        %v2130 = vpop.f32.mrf.mxu0
        %v2131 = vadd.f32 0.0, %v2130
        %v2132 = vpop.f32.mrf.mxu0
        %v2133 = vpop.f32.mrf.mxu0
        %v2134 = vpop.f32.mrf.mxu0
        %2135 = vdwg.mxu0
        %2136 = vrot.lane.b32.xlu0 %v1806, 104
        %v2137 = vpop.permute.xlu0 %2136
        %2138 = vrot.lane.b32.xlu0 %v1806, 72
        %v2139 = vpop.permute.xlu0 %2138
        %v2141 = vsel %vm1021, %v2137, 0
        %v2144 = vsel %vm1021, %v2139, 0
        %2146 = vmatprep.subr.bf16.mxu0 0
        %2147 = vmatpush1.bf16.xpose.msra.mxu0 0
        %2148 = vmatprep.subr.bf16.mxu0 0
        %2149 = vmatpush1.bf16.xpose.msra.mxu0 0
        %2150 = vmatprep.subr.bf16.mxu0 0
        %2151 = vmatpush1.bf16.xpose.msra.mxu0 0
        %2152 = vmatprep.subr.bf16.mxu0 0
        %2153 = vmatpush1.bf16.xpose.msra.mxu0 0
        %2154 = vmatprep.subr.bf16.mxu0 0
        %2155 = vmatpush1.bf16.xpose.msra.mxu0 0
        %2156 = vmatprep.subr.bf16.mxu0 0
        %2157 = vmatpush1.bf16.xpose.msra.mxu0 0
        %2158 = vmatprep.subr.bf16.mxu0 0
        %2159 = vmatpush1.bf16.xpose.msra.mxu0 0
        %2160 = vmatprep.subr.bf16.mxu0 0
        %2161 = vmatpush1.bf16.xpose.msra.mxu0 %v2144
        %2162 = vmatprep.subr.bf16.mxu0 0
        %2163 = vmatpush2.bf16.xpose.msra.mxu0 0
        %2164 = vmatprep.subr.bf16.mxu0 0
        %2165 = vmatpush2.bf16.xpose.msra.mxu0 0
        %2166 = vmatprep.subr.bf16.mxu0 0
        %2167 = vmatpush2.bf16.xpose.msra.mxu0 0
        %2168 = vmatprep.subr.bf16.mxu0 0
        %2169 = vmatpush2.bf16.xpose.msra.mxu0 0
        %2170 = vmatprep.subr.bf16.mxu0 0
        %2171 = vmatpush2.bf16.xpose.msra.mxu0 0
        %2172 = vmatprep.subr.bf16.mxu0 0
        %2173 = vmatpush2.bf16.xpose.msra.mxu0 0
        %2174 = vmatprep.subr.bf16.mxu0 0
        %2175 = vmatpush2.bf16.xpose.msra.mxu0 0
        %2176 = vmatprep.subr.bf16.mxu0 0
        %2177 = vmatpush2.bf16.xpose.msra.mxu0 0
        %2178 = vmatprep.mubr.bf16.mxu0 0
        %2179 = vmatmul.mubr.bf16.gmra.mxu0 %v2141
        %v2180 = vpop.f32.mrf.mxu0
        %v2181 = vadd.f32 0.0, %v2180
        %v2182 = vpop.f32.mrf.mxu0
        %v2183 = vpop.f32.mrf.mxu0
        %v2184 = vpop.f32.mrf.mxu0
        %2185 = vdwg.mxu0
        %v2186 = vsel %vm1021, %v2181, -inf
        %2187 = vmax.xlane.f32.xlu0 %v2186
        %v2188 = vpop.xlane.xlu0 %2187
        %v2189 = vsub.f32 %v2181, %v2188
        %v2190 = vmul.f32 %v2189, 1.442695
        %v2191 = vpow.pop %v2190
        %v2192 = vsel %vm1021, %v2191, 0.0
        %2193 = vadd.xlane.f32.xlu0 %v2192
        %v2194 = vpop.xlane.xlu0 %2193
        %v2195 = vrcp.pop %v2194
        %v2196 = vmul.f32 %v2191, %v2195
        %v2197 = vpack.c.bf16 %v2196, %v2196
        %2198 = vrot.lane.b32.xlu0 %v1806, 40
        %v2199 = vpop.permute.xlu0 %2198
        %v2201 = vsel %vm1021, %v2197, 0
        %v2204 = vsel %vm1085, %v2199, 0
        %2206 = vmatprep.subr.bf16.mxu0 0
        %2207 = vmatpush1.bf16.msra.mxu0 0
        %2208 = vmatprep.subr.bf16.mxu0 0
        %2209 = vmatpush1.bf16.msra.mxu0 0
        %2210 = vmatprep.subr.bf16.mxu0 0
        %2211 = vmatpush1.bf16.msra.mxu0 0
        %2212 = vmatprep.subr.bf16.mxu0 0
        %2213 = vmatpush1.bf16.msra.mxu0 0
        %2214 = vmatprep.subr.bf16.mxu0 0
        %2215 = vmatpush1.bf16.msra.mxu0 0
        %2216 = vmatprep.subr.bf16.mxu0 0
        %2217 = vmatpush1.bf16.msra.mxu0 0
        %2218 = vmatprep.subr.bf16.mxu0 0
        %2219 = vmatpush1.bf16.msra.mxu0 0
        %2220 = vmatprep.subr.bf16.mxu0 0
        %2221 = vmatpush1.bf16.msra.mxu0 %v2204
        %2222 = vmatprep.subr.bf16.mxu0 0
        %2223 = vmatpush2.bf16.msra.mxu0 0
        %2224 = vmatprep.subr.bf16.mxu0 0
        %2225 = vmatpush2.bf16.msra.mxu0 0
        %2226 = vmatprep.subr.bf16.mxu0 0
        %2227 = vmatpush2.bf16.msra.mxu0 0
        %2228 = vmatprep.subr.bf16.mxu0 0
        %2229 = vmatpush2.bf16.msra.mxu0 0
        %2230 = vmatprep.subr.bf16.mxu0 0
        %2231 = vmatpush2.bf16.msra.mxu0 0
        %2232 = vmatprep.subr.bf16.mxu0 0
        %2233 = vmatpush2.bf16.msra.mxu0 0
        %2234 = vmatprep.subr.bf16.mxu0 0
        %2235 = vmatpush2.bf16.msra.mxu0 0
        %2236 = vmatprep.subr.bf16.mxu0 0
        %2237 = vmatpush2.bf16.msra.mxu0 0
        %2238 = vmatprep.mubr.bf16.mxu0 0
        %2239 = vmatmul.mubr.bf16.gmra.mxu0 %v2201
        %v2240 = vpop.f32.mrf.mxu0
        %v2241 = vadd.f32 0.0, %v2240
        %v2242 = vpop.f32.mrf.mxu0
        %v2243 = vpop.f32.mrf.mxu0
        %v2244 = vpop.f32.mrf.mxu0
        %2245 = vdwg.mxu0
        %2247 = vrot.lane.b32.xlu0 %v2021, 8
        %v2248 = vpop.permute.xlu0 %2247
        %2251 = vrot.lane.b32.xlu0 %v2131, 16
        %v2252 = vpop.permute.xlu0 %2251
        %2255 = vrot.lane.b32.xlu0 %v2241, 24
        %v2256 = vpop.permute.xlu0 %2255
        %v2258 = vsel %vm1021, %v1911, %v2248
        %v2259 = vsel %vm1472, %v2258, %v2252
        %v2260 = vsel %vm1474, %v2259, %v2256
        %v2261 = vpack.c.bf16 %v2260, %v2260
        %s2262 = scalar_lea.vmem %s10, 16
        %v2263 = vld [vmem:[%s2262] sm:$0xf]
        %v2264 = vld [vmem:[%s2262 + $0x4] sm:$0xf]
        %v2265 = vld [vmem:[%s2262 + $0x8] sm:$0xf]
        %v2266 = vld [vmem:[%s2262 + $0xc] sm:$0xf]
        %v2267 = vld [vmem:[%s11 + $0x1] sm:$0x1]
        %v2268 = vlaneseq
        %v2269 = vshrl.u32 %v2268, 7
        %v2270 = vsub.s32 0, %v2269
        %v2271 = vrot.slane %v2267, %v2270
        %v2276 = vunpack.c.l.b16 %v2263
        %v2277 = vunpack.c.l.b16 %v2264
        %v2278 = vunpack.c.l.b16 %v2265
        %v2279 = vunpack.c.l.b16 %v2266
        %v2280 = vpack.c.b16 %v2277, %v2276
        %v2281 = vpack.c.b16 %v2279, %v2278
        %v2285 = vsel %vm973, %v2261, 0
        %2287 = vmatprep.subr.bf16.mxu0 0
        %2288 = vmatpush1.bf16.msra.mxu0 0
        %2289 = vmatprep.subr.bf16.mxu0 0
        %2290 = vmatpush1.bf16.msra.mxu0 0
        %2291 = vmatprep.subr.bf16.mxu0 0
        %2292 = vmatpush1.bf16.msra.mxu0 0
        %2293 = vmatprep.subr.bf16.mxu0 0
        %2294 = vmatpush1.bf16.msra.mxu0 0
        %2295 = vmatprep.subr.bf16.mxu0 0
        %2296 = vmatpush1.bf16.msra.mxu0 0
        %2297 = vmatprep.subr.bf16.mxu0 0
        %2298 = vmatpush1.bf16.msra.mxu0 0
        %2299 = vmatprep.subr.bf16.mxu0 0
        %2300 = vmatpush1.bf16.msra.mxu0 %v2281
        %2301 = vmatprep.subr.bf16.mxu0 0
        %2302 = vmatpush1.bf16.msra.mxu0 %v2280
        %2303 = vmatprep.subr.bf16.mxu0 0
        %2304 = vmatpush2.bf16.msra.mxu0 0
        %2305 = vmatprep.subr.bf16.mxu0 0
        %2306 = vmatpush2.bf16.msra.mxu0 0
        %2307 = vmatprep.subr.bf16.mxu0 0
        %2308 = vmatpush2.bf16.msra.mxu0 0
        %2309 = vmatprep.subr.bf16.mxu0 0
        %2310 = vmatpush2.bf16.msra.mxu0 0
        %2311 = vmatprep.subr.bf16.mxu0 0
        %2312 = vmatpush2.bf16.msra.mxu0 0
        %2313 = vmatprep.subr.bf16.mxu0 0
        %2314 = vmatpush2.bf16.msra.mxu0 0
        %2315 = vmatprep.subr.bf16.mxu0 0
        %2316 = vmatpush2.bf16.msra.mxu0 0
        %2317 = vmatprep.subr.bf16.mxu0 0
        %2318 = vmatpush2.bf16.msra.mxu0 0
        %2319 = vmatprep.mubr.bf16.mxu0 0
        %2320 = vmatmul.mubr.bf16.gmra.mxu0 %v2285
        %v2321 = vpop.f32.mrf.mxu0
        %v2322 = vadd.f32 %v2271, %v2321
        %v2323 = vpop.f32.mrf.mxu0
        %v2324 = vpop.f32.mrf.mxu0
        %v2325 = vpop.f32.mrf.mxu0
        %2326 = vdwg.mxu0
        %v2327 = vld [vmem:[%s12 + $0x1] sm:$0x1]
        %v2328 = vld [vmem:[%s13 + $0x1] sm:$0x1]
        %v2329 = vsel %vm973, %v2322, 0.0
        %2330 = vadd.xlane.f32.xlu0 %v2329
        %v2331 = vpop.xlane.xlu0 %2330
        %v2332 = vmul.f32 %v2331, %v1546
        %v2333 = vsub.f32 %v2322, %v2332
        %v2334 = vmul.f32 %v2333, %v2333
        %v2335 = vsel %vm973, %v2334, 0.0
        %2336 = vadd.xlane.f32.xlu0 %v2335
        %v2337 = vpop.xlane.xlu0 %2336
        %v2338 = vmul.f32 %v2337, %v1546
        %v2339 = vadd.f32 %v2338, 1e-05
        %v2340 = vrsqrt.pop %v2339
        %v2341 = vmul.f32 %v2333, %v2340
        %v2342 = vlaneseq
        %v2343 = vshrl.u32 %v2342, 7
        %v2344 = vsub.s32 0, %v2343
        %v2345 = vrot.slane %v2327, %v2344
        %v2346 = vmul.f32 %v2341, %v2345
        %v2347 = vlaneseq
        %v2348 = vshrl.u32 %v2347, 7
        %v2349 = vsub.s32 0, %v2348
        %v2350 = vrot.slane %v2328, %v2349
        %v2351 = vadd.f32 %v2346, %v2350
        %v2352 = vpack.c.bf16 %v2351, %v2351
        %s2353 = scalar_lea.vmem %s14, 16
        %v2354 = vld [vmem:[%s2353] sm:$0xf]
        %v2355 = vld [vmem:[%s2353 + $0x4] sm:$0xf]
        %v2356 = vld [vmem:[%s2353 + $0x8] sm:$0xf]
        %v2357 = vld [vmem:[%s2353 + $0xc] sm:$0xf]
        %v2358 = vld [vmem:[%s15 + $0x1] sm:$0x1]
        %v2359 = vlaneseq
        %v2360 = vshrl.u32 %v2359, 7
        %v2361 = vsub.s32 0, %v2360
        %v2362 = vrot.slane %v2358, %v2361
        %v2367 = vunpack.c.l.b16 %v2354
        %v2368 = vunpack.c.l.b16 %v2355
        %v2369 = vunpack.c.l.b16 %v2356
        %v2370 = vunpack.c.l.b16 %v2357
        %v2371 = vpack.c.b16 %v2368, %v2367
        %v2372 = vpack.c.b16 %v2370, %v2369
        %v2376 = vsel %vm973, %v2352, 0
        %2378 = vmatprep.subr.bf16.mxu0 0
        %2379 = vmatpush1.bf16.msra.mxu0 0
        %2380 = vmatprep.subr.bf16.mxu0 0
        %2381 = vmatpush1.bf16.msra.mxu0 0
        %2382 = vmatprep.subr.bf16.mxu0 0
        %2383 = vmatpush1.bf16.msra.mxu0 0
        %2384 = vmatprep.subr.bf16.mxu0 0
        %2385 = vmatpush1.bf16.msra.mxu0 0
        %2386 = vmatprep.subr.bf16.mxu0 0
        %2387 = vmatpush1.bf16.msra.mxu0 0
        %2388 = vmatprep.subr.bf16.mxu0 0
        %2389 = vmatpush1.bf16.msra.mxu0 0
        %2390 = vmatprep.subr.bf16.mxu0 0
        %2391 = vmatpush1.bf16.msra.mxu0 %v2372
        %2392 = vmatprep.subr.bf16.mxu0 0
        %2393 = vmatpush1.bf16.msra.mxu0 %v2371
        %2394 = vmatprep.subr.bf16.mxu0 0
        %2395 = vmatpush2.bf16.msra.mxu0 0
        %2396 = vmatprep.subr.bf16.mxu0 0
        %2397 = vmatpush2.bf16.msra.mxu0 0
        %2398 = vmatprep.subr.bf16.mxu0 0
        %2399 = vmatpush2.bf16.msra.mxu0 0
        %2400 = vmatprep.subr.bf16.mxu0 0
        %2401 = vmatpush2.bf16.msra.mxu0 0
        %2402 = vmatprep.subr.bf16.mxu0 0
        %2403 = vmatpush2.bf16.msra.mxu0 0
        %2404 = vmatprep.subr.bf16.mxu0 0
        %2405 = vmatpush2.bf16.msra.mxu0 0
        %2406 = vmatprep.subr.bf16.mxu0 0
        %2407 = vmatpush2.bf16.msra.mxu0 0
        %2408 = vmatprep.subr.bf16.mxu0 0
        %2409 = vmatpush2.bf16.msra.mxu0 0
        %2410 = vmatprep.mubr.bf16.mxu0 0
        %2411 = vmatmul.mubr.bf16.gmra.mxu0 %v2376
        %v2412 = vpop.f32.mrf.mxu0
        %v2413 = vadd.f32 %v2362, %v2412
        %v2414 = vpop.f32.mrf.mxu0
        %v2415 = vpop.f32.mrf.mxu0
        %v2416 = vpop.f32.mrf.mxu0
        %2417 = vdwg.mxu0
        %v2418 = vmax.f32 %v2413, 0.0
        %v2419 = vpack.c.bf16 %v2418, %v2418
        %s2420 = scalar_lea.vmem %s16, 32
        %v2421 = vld [vmem:[%s2420] sm:$0xf]
        %v2422 = vld [vmem:[%s2420 + $0x4] sm:$0xf]
        %v2423 = vld [vmem:[%s2420 + $0x8] sm:$0xf]
        %v2424 = vld [vmem:[%s2420 + $0xc] sm:$0xf]
        %v2425 = vld [vmem:[%s2420 + $0x10] sm:$0xf]
        %v2426 = vld [vmem:[%s2420 + $0x14] sm:$0xf]
        %v2427 = vld [vmem:[%s2420 + $0x18] sm:$0xf]
        %v2428 = vld [vmem:[%s2420 + $0x1c] sm:$0xf]
        %v2429 = vld [vmem:[%s17 + $0x1] sm:$0x1]
        %v2430 = vlaneseq
        %v2431 = vshrl.u32 %v2430, 7
        %v2432 = vsub.s32 0, %v2431
        %v2433 = vrot.slane %v2429, %v2432
        %v2442 = vunpack.c.l.b16 %v2421
        %v2443 = vunpack.c.l.b16 %v2422
        %v2444 = vunpack.c.l.b16 %v2423
        %v2445 = vunpack.c.l.b16 %v2424
        %v2446 = vunpack.c.l.b16 %v2425
        %v2447 = vunpack.c.l.b16 %v2426
        %v2448 = vunpack.c.l.b16 %v2427
        %v2449 = vunpack.c.l.b16 %v2428
        %v2450 = vpack.c.b16 %v2443, %v2442
        %v2451 = vpack.c.b16 %v2445, %v2444
        %v2452 = vpack.c.b16 %v2447, %v2446
        %v2453 = vpack.c.b16 %v2449, %v2448
        %v2459 = vsel %vm1671, %v2419, 0
        %2461 = vmatprep.subr.bf16.mxu0 0
        %2462 = vmatpush1.bf16.msra.mxu0 0
        %2463 = vmatprep.subr.bf16.mxu0 0
        %2464 = vmatpush1.bf16.msra.mxu0 0
        %2465 = vmatprep.subr.bf16.mxu0 0
        %2466 = vmatpush1.bf16.msra.mxu0 0
        %2467 = vmatprep.subr.bf16.mxu0 0
        %2468 = vmatpush1.bf16.msra.mxu0 0
        %2469 = vmatprep.subr.bf16.mxu0 0
        %2470 = vmatpush1.bf16.msra.mxu0 %v2453
        %2471 = vmatprep.subr.bf16.mxu0 0
        %2472 = vmatpush1.bf16.msra.mxu0 %v2452
        %2473 = vmatprep.subr.bf16.mxu0 0
        %2474 = vmatpush1.bf16.msra.mxu0 %v2451
        %2475 = vmatprep.subr.bf16.mxu0 0
        %2476 = vmatpush1.bf16.msra.mxu0 %v2450
        %2477 = vmatprep.subr.bf16.mxu0 0
        %2478 = vmatpush2.bf16.msra.mxu0 0
        %2479 = vmatprep.subr.bf16.mxu0 0
        %2480 = vmatpush2.bf16.msra.mxu0 0
        %2481 = vmatprep.subr.bf16.mxu0 0
        %2482 = vmatpush2.bf16.msra.mxu0 0
        %2483 = vmatprep.subr.bf16.mxu0 0
        %2484 = vmatpush2.bf16.msra.mxu0 0
        %2485 = vmatprep.subr.bf16.mxu0 0
        %2486 = vmatpush2.bf16.msra.mxu0 0
        %2487 = vmatprep.subr.bf16.mxu0 0
        %2488 = vmatpush2.bf16.msra.mxu0 0
        %2489 = vmatprep.subr.bf16.mxu0 0
        %2490 = vmatpush2.bf16.msra.mxu0 0
        %2491 = vmatprep.subr.bf16.mxu0 0
        %2492 = vmatpush2.bf16.msra.mxu0 0
        %2493 = vmatprep.mubr.bf16.mxu0 0
        %2494 = vmatmul.mubr.bf16.gmra.mxu0 %v2459
        %v2495 = vpop.f32.mrf.mxu0
        %v2496 = vadd.f32 %v2433, %v2495
        %v2497 = vpop.f32.mrf.mxu0
        %v2498 = vpop.f32.mrf.mxu0
        %v2499 = vpop.f32.mrf.mxu0
        %2500 = vdwg.mxu0
        %v2501 = vld [vmem:[%s18 + $0x1] sm:$0x1]
        %v2502 = vld [vmem:[%s19 + $0x1] sm:$0x1]
        %v2503 = vsel %vm973, %v2496, 0.0
        %2504 = vadd.xlane.f32.xlu0 %v2503
        %v2505 = vpop.xlane.xlu0 %2504
        %v2506 = vmul.f32 %v2505, %v1546
        %v2507 = vsub.f32 %v2496, %v2506
        %v2508 = vmul.f32 %v2507, %v2507
        %v2509 = vsel %vm973, %v2508, 0.0
        %2510 = vadd.xlane.f32.xlu0 %v2509
        %v2511 = vpop.xlane.xlu0 %2510
        %v2512 = vmul.f32 %v2511, %v1546
        %v2513 = vadd.f32 %v2512, 1e-05
        %v2514 = vrsqrt.pop %v2513
        %v2515 = vmul.f32 %v2507, %v2514
        %v2516 = vlaneseq
        %v2517 = vshrl.u32 %v2516, 7
        %v2518 = vsub.s32 0, %v2517
        %v2519 = vrot.slane %v2501, %v2518
        %v2520 = vmul.f32 %v2515, %v2519
        %v2521 = vlaneseq
        %v2522 = vshrl.u32 %v2521, 7
        %v2523 = vsub.s32 0, %v2522
        %v2524 = vrot.slane %v2502, %v2523
        %v2525 = vadd.f32 %v2520, %v2524
        %v2526 = vpack.c.bf16 %v2525, %v2525
        %v2527 = vld [vmem:[%s20] sm:$0xf]
        %v2528 = vld [vmem:[%s20 + $0x4] sm:$0xf]
        %v2529 = vld [vmem:[%s20 + $0x8] sm:$0xf]
        %v2530 = vld [vmem:[%s20 + $0xc] sm:$0xf]
        %v2531 = vld [vmem:[%s21] sm:$0x1]
        %v2533 = vlaneseq
        %v2534 = vshrl.u32 %v2533, 7
        %v2535 = vsub.s32 0, %v2534
        %v2536 = vrot.slane %v2531, %v2535
        %v2542 = vunpack.c.l.b16 %v2527
        %v2543 = vunpack.c.l.b16 %v2528
        %v2544 = vunpack.c.l.b16 %v2529
        %v2545 = vunpack.c.l.b16 %v2530
        %v2546 = vpack.c.b16 %v2543, %v2542
        %v2547 = vpack.c.b16 %v2545, %v2544
        %v2551 = vsel %vm973, %v2526, 0
        %2553 = vmatprep.subr.bf16.mxu0 0
        %2554 = vmatpush1.bf16.msra.mxu0 0
        %2555 = vmatprep.subr.bf16.mxu0 0
        %2556 = vmatpush1.bf16.msra.mxu0 0
        %2557 = vmatprep.subr.bf16.mxu0 0
        %2558 = vmatpush1.bf16.msra.mxu0 0
        %2559 = vmatprep.subr.bf16.mxu0 0
        %2560 = vmatpush1.bf16.msra.mxu0 0
        %2561 = vmatprep.subr.bf16.mxu0 0
        %2562 = vmatpush1.bf16.msra.mxu0 0
        %2563 = vmatprep.subr.bf16.mxu0 0
        %2564 = vmatpush1.bf16.msra.mxu0 0
        %2565 = vmatprep.subr.bf16.mxu0 0
        %2566 = vmatpush1.bf16.msra.mxu0 %v2547
        %2567 = vmatprep.subr.bf16.mxu0 0
        %2568 = vmatpush1.bf16.msra.mxu0 %v2546
        %2569 = vmatprep.subr.bf16.mxu0 0
        %2570 = vmatpush2.bf16.msra.mxu0 0
        %2571 = vmatprep.subr.bf16.mxu0 0
        %2572 = vmatpush2.bf16.msra.mxu0 0
        %2573 = vmatprep.subr.bf16.mxu0 0
        %2574 = vmatpush2.bf16.msra.mxu0 0
        %2575 = vmatprep.subr.bf16.mxu0 0
        %2576 = vmatpush2.bf16.msra.mxu0 0
        %2577 = vmatprep.subr.bf16.mxu0 0
        %2578 = vmatpush2.bf16.msra.mxu0 0
        %2579 = vmatprep.subr.bf16.mxu0 0
        %2580 = vmatpush2.bf16.msra.mxu0 0
        %2581 = vmatprep.subr.bf16.mxu0 0
        %2582 = vmatpush2.bf16.msra.mxu0 0
        %2583 = vmatprep.subr.bf16.mxu0 0
        %2584 = vmatpush2.bf16.msra.mxu0 0
        %2585 = vmatprep.mubr.bf16.mxu0 0
        %2586 = vmatmul.mubr.bf16.gmra.mxu0 %v2551
        %v2587 = vpop.f32.mrf.mxu0
        %v2588 = vadd.f32 %v2536, %v2587
        %v2589 = vpop.f32.mrf.mxu0
        %v2590 = vpop.f32.mrf.mxu0
        %v2591 = vpop.f32.mrf.mxu0
        %2592 = vdwg.mxu0
        %2593 = vst [vmem:[%s738] sm:$0xff] %v2588
        %s2594 = sand.u32 %s519, 1
        %s2595 = scalar_lea.sflag [#allocation4], %s2594
        %s2596 = sand.u32 %s519, 1
        %s2597 = smul.addr %s2596, 8
        %s2598 = scalar_lea.vmem [#allocation10], %s2597
        // Predicated region
        $region125: #{tpu_custom_call.1} parent=107 // pred_check
          %p2599 = pneg %p529
        $region126: #{tpu_custom_call.1} parent=107 // pred_check_branch
          %2601 = sbr.rel (%p2599) target = $region128
        $region127: #{tpu_custom_call.1} parent=107 // pred_region
          %s2603 = ssub.s32 128, 128
          %2604 = vsyncadd %s2595, %s2603
          %s2605 = smul.addr %s39, 128
          %s2606 = scalar_lea.hbm %s22, %s2605
          %s2608 = sshll.u32 %s2598, 4
          %s2609 = int_to_ptr.vmem [resolvable:$true] %s2608
          %2611 = dma.vmem_to_hbm [thread:$0]  %s2609, 128, %s2606, %s2595
        $region128: #{tpu_custom_call.1} parent=107 // pred_fallthru
          _
      $region108: #{tpu_custom_call.1} parent=5 // pred_fallthru
        _
      %p2612 = scmp.le.s32.totalorder 2, %s34
      // Predicated region
      $region129: #{tpu_custom_call.1} parent=5 // pred_check
        %p2613 = pneg %p2612
      $region130: #{tpu_custom_call.1} parent=5 // pred_check_branch
        %2615 = sbr.rel (%p2613) target = $region132
      $region131: #{tpu_custom_call.1} parent=5 // pred_region
        %s2616 = ssub.s32 %s34, 2
        // Predicated region
        $region133: #{tpu_custom_call.1} parent=131 // pred_check
          %p2617 = pneg %p535
        $region134: #{tpu_custom_call.1} parent=131 // pred_check_branch
          %2619 = sbr.rel (%p2617) target = $region136
        $region135: #{tpu_custom_call.1} parent=131 // pred_region
          %s2620 = sand.u32 %s520, 1
          %s2621 = scalar_lea.sflag [#allocation4], %s2620
          %s2622 = sand.u32 %s520, 1
          %s2623 = smul.addr %s2622, 8
          %s2624 = scalar_lea.vmem [#allocation10], %s2623
          %2625 = dma.done %s2621, 128
        $region136: #{tpu_custom_call.1} parent=131 // pred_fallthru
          _
      $region132: #{tpu_custom_call.1} parent=5 // pred_fallthru
        _
    $region6: #{tpu_custom_call.1} parent=1 // loop_footer
      %s38 = sadd.s32 1, %s34
    $region7: #{tpu_custom_call.1} parent=1 // loop_footer_branch
      %33 = sbr.rel target = $region3
    $region8: #{tpu_custom_call.1} parent=1 // loop_exit
      _
    %2626 = vsyncpa [#allocation3], 1
    %s2627 = scalar_lea.sflag [#allocation3], 1
    %2628 = vsyncpa %s2627, 1
    %2629 = vsyncpa [#allocation6], 1
    %2630 = vsyncpa [#allocation9], 1
    %2631 = vsyncpa [#allocation4], 1
    %s2632 = scalar_lea.sflag [#allocation4], 1
    %2633 = vsyncpa %s2632, 1

</llo_original>
